<compile_context>
chip_gen: v7x
topology: tpu7x:2x2x1
jax: 0.10.0
libtpu: 0.0.40
codegen_flags: <defaults>
</compile_context>

<pallas_src>
import jax
import jax.numpy as jnp
from jax.experimental import pallas as pl
from jax.experimental.pallas import tpu as pltpu


# ----------------------------- Pallas kernel --------------------------------
def _gcn_fused_kernel(a_ref, x_ref,
                      w1_ref, b1_ref,
                      w2_ref, b2_ref,
                      w3_ref, b3_ref,
                      wl_ref, bl_ref,
                      out_ref, feat_ref):
    """Fully fused 3x GCNConv + ReLU + Linear + Sigmoid (single grid step).

    a_ref   : (N, N)        normalized adjacency A_hat (f32)
    x_ref   : (N, 3000)     node features (f32, cast to bf16 in-kernel)
    w1_ref  : (3000, 256)   conv1 weight (bf16, pre-cast at init)
    w2_ref  : (256, 128)    conv2 weight (bf16)
    w3_ref  : (128, 64)     conv3 weight (bf16)
    b*_ref  : (1, F_out)    biases (f32, VMEM)
    wl_ref  : (1, 64)       final linear weight row (f32, VPU reduction)
    bl_ref  : (1, 1)        final linear bias (f32, SMEM scalar)
    out_ref : (N, 1)        sigmoid output
    feat_ref: (N, 64)       last GCN layer features (second return value)
    """
    a = a_ref[...]                                   # (N, N) f32, tiny
    # In-kernel bf16 cast of x (VPU slot) — avoids a wrapper-side XLA convert pass.
    x_bf = x_ref[...].astype(jnp.bfloat16)

    # --- conv1: A @ (X W1) + b1, ReLU (dropout = identity, eval mode) ---------
    xw = jnp.dot(x_bf, w1_ref[...], preferred_element_type=jnp.float32)
    h = jnp.dot(a, xw, preferred_element_type=jnp.float32)
    h = jnp.maximum(h + b1_ref[...], 0.0)

    # --- conv2: 256 -> 128 (dropout = identity, eval mode) --------------------
    hw = jnp.dot(h.astype(jnp.bfloat16), w2_ref[...],
                 preferred_element_type=jnp.float32)
    h = jnp.dot(a, hw, preferred_element_type=jnp.float32) + b2_ref[...]

    # --- conv3: 128 -> 64 ------------------------------------------------------
    hw = jnp.dot(h.astype(jnp.bfloat16), w3_ref[...],
                 preferred_element_type=jnp.float32)
    h = jnp.dot(a, hw, preferred_element_type=jnp.float32) + b3_ref[...]
    feat_ref[...] = h

    # --- linear(64 -> 1) as a VPU reduction + numerically stable sigmoid ------
    logits = jnp.sum(h * wl_ref[...], axis=-1, keepdims=True) + bl_ref[0, 0]
    e = jnp.exp(-jnp.abs(logits))
    out_ref[...] = jnp.where(logits >= 0.0, 1.0 / (1.0 + e), e / (1.0 + e))


# ------------------------------ wrapper --------------------------------------
def prepare_params(params):
    """One-time (init-path) param prep: bf16 weight casts, bias/linear reshapes.

    Done here so the per-call forward path does NO XLA pad/convert work on the
    HBM-dominant operands (review items 2 & 4).
    """
    w1, b1, w2, b2, w3, b3, wl, bl = params
    return (
        w1.astype(jnp.bfloat16),                 # (3000, 256)
        b1.reshape(1, -1).astype(jnp.float32),   # (1, 256)
        w2.astype(jnp.bfloat16),                 # (256, 128)
        b2.reshape(1, -1).astype(jnp.float32),   # (1, 128)
        w3.astype(jnp.bfloat16),                 # (128, 64)
        b3.reshape(1, -1).astype(jnp.float32),   # (1, 64)
        wl.reshape(1, -1).astype(jnp.float32),   # (1, 64)   VPU-reduction row
        bl.reshape(1, 1).astype(jnp.float32),    # (1, 1)    SMEM scalar
    )


def gcn_forward(a_hat, x, prepared):
    """Run the fused GCN forward pass. Returns (out (N,1), feat (N,64))."""
    w1, b1, w2, b2, w3, b3, wl, bl = prepared
    N = x.shape[0]
    f3 = w3.shape[1]

    # Every block equals the full array -> satisfies the (8,128) rule without
    # any padding; the whole working set (~2.3 MiB) lives in VMEM for the
    # single grid step.
    in_specs = [
        pl.BlockSpec(a_hat.shape, lambda i: (0, 0)),        # A_hat
        pl.BlockSpec(x.shape, lambda i: (0, 0)),            # x (f32)
        pl.BlockSpec(w1.shape, lambda i: (0, 0)),           # W1 (bf16)
        pl.BlockSpec(b1.shape, lambda i: (0, 0)),           # b1
        pl.BlockSpec(w2.shape, lambda i: (0, 0)),           # W2 (bf16)
        pl.BlockSpec(b2.shape, lambda i: (0, 0)),           # b2
        pl.BlockSpec(w3.shape, lambda i: (0, 0)),           # W3 (bf16)
        pl.BlockSpec(b3.shape, lambda i: (0, 0)),           # b3
        pl.BlockSpec(wl.shape, lambda i: (0, 0)),           # wl (1, 64)
        pl.BlockSpec(memory_space=pltpu.MemorySpace.SMEM),  # bl scalar
    ]
    out_specs = (
        pl.BlockSpec((N, 1), lambda i: (0, 0)),
        pl.BlockSpec((N, f3), lambda i: (0, 0)),
    )
    out_shape = (
        jax.ShapeDtypeStruct((N, 1), jnp.float32),
        jax.ShapeDtypeStruct((N, f3), jnp.float32),
    )

    fn = pl.pallas_call(
        _gcn_fused_kernel,
        grid=(1,),
        in_specs=in_specs,
        out_specs=out_specs,
        out_shape=out_shape,
        compiler_params=pltpu.CompilerParams(
            dimension_semantics=("arbitrary",),
            vmem_limit_bytes=32 * 1024 * 1024,   # safe on v7x (64 MiB VMEM)
        ),
    )
    return fn(a_hat, x, w1, b1, w2, b2, w3, b3, wl, bl)


# ------------------------------ JAX glue -------------------------------------
def normalized_adjacency(edge_index, num_nodes):
    """Dense A_hat = D^{-1/2}(A + I)D^{-1/2} from an edge_index (2, E) array."""
    src, dst = edge_index[0], edge_index[1]
    a = jnp.zeros((num_nodes, num_nodes), jnp.float32)
    a = a.at[src, dst].set(1.0)
    a = a.at[dst, src].set(1.0)                       # treat graph as undirected
    a = a + jnp.eye(num_nodes, dtype=jnp.float32)     # add self-loops
    deg = a.sum(axis=1)
    d_inv_sqrt = 1.0 / jnp.sqrt(deg)
    return d_inv_sqrt[:, None] * a * d_inv_sqrt[None, :]


def init_params(key):
    """Deterministic (glorot-ish) initialization matching the module's shapes."""
    ks = jax.random.split(key, 8)

    def glorot(k, fan_in, fan_out):
        scale = jnp.sqrt(6.0 / (fan_in + fan_out))
        return jax.random.uniform(k, (fan_in, fan_out), jnp.float32, -scale, scale)

    w1 = glorot(ks[0], 3000, 256)
    b1 = jnp.zeros((1, 256), jnp.float32)
    w2 = glorot(ks[1], 256, 128)
    b2 = jnp.zeros((1, 128), jnp.float32)
    w3 = glorot(ks[2], 128, 64)
    b3 = jnp.zeros((1, 64), jnp.float32)
    wl = glorot(ks[3], 64, 1)            # nn.Linear(64, 1).weight.T
    bl = jnp.zeros((1, 1), jnp.float32)
    return (w1, b1, w2, b2, w3, b3, wl, bl)


if __name__ == "__main__":
    key = jax.random.PRNGKey(0)
    k_x, k_e, k_p = jax.random.split(key, 3)

    N = 64          # number of nodes (small synthetic graph)
    F_IN = 3000     # GCNConv(3000, 256) input feature dim from the module
    E = 256         # number of random edges

    x = jax.random.normal(k_x, (N, F_IN), jnp.float32)
    edge_index = jax.random.randint(k_e, (2, E), 0, N, jnp.int32)

    a_hat = normalized_adjacency(edge_index, N)
    params = init_params(k_p)
    prepared = prepare_params(params)     # one-time weight prep (bf16 cast etc.)
    jax.block_until_ready(prepared)

    out, feat = gcn_forward(a_hat, x, prepared)
    jax.block_until_ready((out, feat))

    assert out.shape == (N, 1) and feat.shape == (N, 64)
    assert bool(jnp.all(jnp.isfinite(out))) and bool(jnp.all(jnp.isfinite(feat)))
    assert bool(jnp.all((out >= 0.0) & (out <= 1.0)))
    print("KERNEL_OK")
</pallas_src>

<mosaic_0001>
module attributes {stable_mosaic.version = 11 : i64} {
  func.func @_gcn_fused_kernel(%arg0: i32, %arg1: memref<64x64xf32, #tpu.memory_space<vmem>>, %arg2: memref<64x3000xf32, #tpu.memory_space<vmem>>, %arg3: memref<3000x256xbf16, #tpu.memory_space<vmem>>, %arg4: memref<1x256xf32, #tpu.memory_space<vmem>>, %arg5: memref<256x128xbf16, #tpu.memory_space<vmem>>, %arg6: memref<1x128xf32, #tpu.memory_space<vmem>>, %arg7: memref<128x64xbf16, #tpu.memory_space<vmem>>, %arg8: memref<1x64xf32, #tpu.memory_space<vmem>>, %arg9: memref<1x64xf32, #tpu.memory_space<vmem>>, %arg10: memref<1x1xf32, #tpu.memory_space<smem>>, %arg11: memref<64x1xf32, #tpu.memory_space<vmem>>, %arg12: memref<64x64xf32, #tpu.memory_space<vmem>>) attributes {dimension_semantics = [#tpu.dimension_semantics<arbitrary>], iteration_bounds = array<i64: 1>, scalar_prefetch = 0 : i64, scratch_operands = 0 : i64, tpu.core_type = #tpu.core_type<tc>, window_params = [{pipeline_mode = #tpu.pipeline_mode<synchronous>, transform_indices = @transform_0, window_bounds = array<i64: 64, 64>}, {pipeline_mode = #tpu.pipeline_mode<synchronous>, transform_indices = @transform_1, window_bounds = array<i64: 64, 3000>}, {pipeline_mode = #tpu.pipeline_mode<synchronous>, transform_indices = @transform_2, window_bounds = array<i64: 3000, 256>}, {pipeline_mode = #tpu.pipeline_mode<synchronous>, transform_indices = @transform_3, window_bounds = array<i64: 1, 256>}, {pipeline_mode = #tpu.pipeline_mode<synchronous>, transform_indices = @transform_4, window_bounds = array<i64: 256, 128>}, {pipeline_mode = #tpu.pipeline_mode<synchronous>, transform_indices = @transform_5, window_bounds = array<i64: 1, 128>}, {pipeline_mode = #tpu.pipeline_mode<synchronous>, transform_indices = @transform_6, window_bounds = array<i64: 128, 64>}, {pipeline_mode = #tpu.pipeline_mode<synchronous>, transform_indices = @transform_7, window_bounds = array<i64: 1, 64>}, {pipeline_mode = #tpu.pipeline_mode<synchronous>, transform_indices = @transform_8, window_bounds = array<i64: 1, 64>}, {transform_indices = @transform_9, window_bounds = array<i64: 1, 1>}, {pipeline_mode = #tpu.pipeline_mode<synchronous>, transform_indices = @transform_10, window_bounds = array<i64: 64, 1>}, {pipeline_mode = #tpu.pipeline_mode<synchronous>, transform_indices = @transform_11, window_bounds = array<i64: 64, 64>}]} {
    %c0 = arith.constant 0 : index
    %c0_0 = arith.constant 0 : index
    %0 = vector.load %arg1[%c0, %c0_0] : memref<64x64xf32, #tpu.memory_space<vmem>>, vector<64x64xf32>
    %c0_1 = arith.constant 0 : index
    %c0_2 = arith.constant 0 : index
    %1 = vector.load %arg2[%c0_1, %c0_2] : memref<64x3000xf32, #tpu.memory_space<vmem>>, vector<64x3000xf32>
    %2 = arith.truncf %1 : vector<64x3000xf32> to vector<64x3000xbf16>
    %c0_3 = arith.constant 0 : index
    %c0_4 = arith.constant 0 : index
    %3 = vector.load %arg3[%c0_3, %c0_4] : memref<3000x256xbf16, #tpu.memory_space<vmem>>, vector<3000x256xbf16>
    %cst = arith.constant dense<0.000000e+00> : vector<64x256xf32>
    %4 = tpu.matmul %2, %3, %cst {dimension_numbers = #tpu.dot_dimension_numbers<[1], [0], [0], [1], [0, 0, 1, 1], [], []>} : vector<64x3000xbf16>, vector<3000x256xbf16>, vector<64x256xf32> -> vector<64x256xf32>
    %cst_5 = arith.constant dense<0.000000e+00> : vector<64x256xf32>
    %5 = tpu.matmul %0, %4, %cst_5 {dimension_numbers = #tpu.dot_dimension_numbers<[1], [0], [0], [1], [0, 0, 1, 1], [], []>} : vector<64x64xf32>, vector<64x256xf32>, vector<64x256xf32> -> vector<64x256xf32>
    %c0_6 = arith.constant 0 : index
    %c0_7 = arith.constant 0 : index
    %6 = vector.load %arg4[%c0_6, %c0_7] : memref<1x256xf32, #tpu.memory_space<vmem>>, vector<1x256xf32>
    %7 = vector.broadcast %6 : vector<1x256xf32> to vector<64x256xf32>
    %8 = arith.addf %5, %7 : vector<64x256xf32>
    %cst_8 = arith.constant 0.000000e+00 : f32
    %9 = vector.broadcast %cst_8 : f32 to vector<64x256xf32>
    %10 = arith.maximumf %8, %9 : vector<64x256xf32>
    %11 = arith.truncf %10 : vector<64x256xf32> to vector<64x256xbf16>
    %c0_9 = arith.constant 0 : index
    %c0_10 = arith.constant 0 : index
    %12 = vector.load %arg5[%c0_9, %c0_10] : memref<256x128xbf16, #tpu.memory_space<vmem>>, vector<256x128xbf16>
    %cst_11 = arith.constant dense<0.000000e+00> : vector<64x128xf32>
    %13 = tpu.matmul %11, %12, %cst_11 {dimension_numbers = #tpu.dot_dimension_numbers<[1], [0], [0], [1], [0, 0, 1, 1], [], []>} : vector<64x256xbf16>, vector<256x128xbf16>, vector<64x128xf32> -> vector<64x128xf32>
    %cst_12 = arith.constant dense<0.000000e+00> : vector<64x128xf32>
    %14 = tpu.matmul %0, %13, %cst_12 {dimension_numbers = #tpu.dot_dimension_numbers<[1], [0], [0], [1], [0, 0, 1, 1], [], []>} : vector<64x64xf32>, vector<64x128xf32>, vector<64x128xf32> -> vector<64x128xf32>
    %c0_13 = arith.constant 0 : index
    %c0_14 = arith.constant 0 : index
    %15 = vector.load %arg6[%c0_13, %c0_14] : memref<1x128xf32, #tpu.memory_space<vmem>>, vector<1x128xf32>
    %16 = vector.broadcast %15 : vector<1x128xf32> to vector<64x128xf32>
    %17 = arith.addf %14, %16 : vector<64x128xf32>
    %18 = arith.truncf %17 : vector<64x128xf32> to vector<64x128xbf16>
    %c0_15 = arith.constant 0 : index
    %c0_16 = arith.constant 0 : index
    %19 = vector.load %arg7[%c0_15, %c0_16] : memref<128x64xbf16, #tpu.memory_space<vmem>>, vector<128x64xbf16>
    %cst_17 = arith.constant dense<0.000000e+00> : vector<64x64xf32>
    %20 = tpu.matmul %18, %19, %cst_17 {dimension_numbers = #tpu.dot_dimension_numbers<[1], [0], [0], [1], [0, 0, 1, 1], [], []>} : vector<64x128xbf16>, vector<128x64xbf16>, vector<64x64xf32> -> vector<64x64xf32>
    %cst_18 = arith.constant dense<0.000000e+00> : vector<64x64xf32>
    %21 = tpu.matmul %0, %20, %cst_18 {dimension_numbers = #tpu.dot_dimension_numbers<[1], [0], [0], [1], [0, 0, 1, 1], [], []>} : vector<64x64xf32>, vector<64x64xf32>, vector<64x64xf32> -> vector<64x64xf32>
    %c0_19 = arith.constant 0 : index
    %c0_20 = arith.constant 0 : index
    %22 = vector.load %arg8[%c0_19, %c0_20] : memref<1x64xf32, #tpu.memory_space<vmem>>, vector<1x64xf32>
    %23 = vector.broadcast %22 : vector<1x64xf32> to vector<64x64xf32>
    %24 = arith.addf %21, %23 : vector<64x64xf32>
    %c0_21 = arith.constant 0 : index
    %c0_22 = arith.constant 0 : index
    %25 = vector.load %arg12[%c0_21, %c0_22] : memref<64x64xf32, #tpu.memory_space<vmem>>, vector<64x64xf32>
    tpu.vector_store %arg12[%c0_21, %c0_22], %24 {strides = array<i32>} : memref<64x64xf32, #tpu.memory_space<vmem>>, vector<64x64xf32>,
    %c0_23 = arith.constant 0 : index
    %c0_24 = arith.constant 0 : index
    %26 = vector.load %arg9[%c0_23, %c0_24] : memref<1x64xf32, #tpu.memory_space<vmem>>, vector<1x64xf32>
    %27 = vector.broadcast %26 : vector<1x64xf32> to vector<64x64xf32>
    %28 = arith.mulf %24, %27 : vector<64x64xf32>
    %cst_25 = arith.constant dense<0.000000e+00> : vector<64xf32>
    %29 = vector.multi_reduction <add>, %28, %cst_25 [1] : vector<64x64xf32> to vector<64xf32>
    %30 = vector.shape_cast %29 : vector<64xf32> to vector<64x1xf32>
    %c0_26 = arith.constant 0 : index
    %c0_27 = arith.constant 0 : index
    %31 = memref.load %arg10[%c0_26, %c0_27] : memref<1x1xf32, #tpu.memory_space<smem>>
    %32 = vector.broadcast %31 : f32 to vector<64x1xf32>
    %33 = arith.addf %30, %32 : vector<64x1xf32>
    %34 = math.absf %33 : vector<64x1xf32>
    %cst_28 = arith.constant 0.000000e+00 : f32
    %35 = vector.broadcast %cst_28 : f32 to vector<64x1xf32>
    %36 = arith.subf %35, %34 : vector<64x1xf32>
    %37 = math.exp %36 : vector<64x1xf32>
    %cst_29 = arith.constant 0.000000e+00 : f32
    %38 = vector.broadcast %cst_29 : f32 to vector<64x1xf32>
    %39 = arith.cmpf oge, %33, %38 : vector<64x1xf32>
    %cst_30 = arith.constant 1.000000e+00 : f32
    %40 = vector.broadcast %cst_30 : f32 to vector<64x1xf32>
    %41 = arith.addf %40, %37 : vector<64x1xf32>
    %cst_31 = arith.constant 1.000000e+00 : f32
    %42 = vector.broadcast %cst_31 : f32 to vector<64x1xf32>
    %43 = arith.divf %42, %41 : vector<64x1xf32>
    %cst_32 = arith.constant 1.000000e+00 : f32
    %44 = vector.broadcast %cst_32 : f32 to vector<64x1xf32>
    %45 = arith.addf %44, %37 : vector<64x1xf32>
    %46 = arith.divf %37, %45 : vector<64x1xf32>
    %47 = arith.select %39, %43, %46 : vector<64x1xi1>, vector<64x1xf32>
    %c0_33 = arith.constant 0 : index
    %c0_34 = arith.constant 0 : index
    %48 = vector.load %arg11[%c0_33, %c0_34] : memref<64x1xf32, #tpu.memory_space<vmem>>, vector<64x1xf32>
    tpu.vector_store %arg11[%c0_33, %c0_34], %47 {strides = array<i32>} : memref<64x1xf32, #tpu.memory_space<vmem>>, vector<64x1xf32>,
    return
  }
  func.func @transform_0(%arg0: i32) -> (i32, i32) {
    %c0_i32 = arith.constant 0 : i32
    %c0_i32_0 = arith.constant 0 : i32
    %c0_i32_1 = arith.constant 0 : i32
    return %c0_i32, %c0_i32_0 : i32, i32
  }
  func.func @transform_1(%arg0: i32) -> (i32, i32) {
    %c0_i32 = arith.constant 0 : i32
    %c0_i32_0 = arith.constant 0 : i32
    %c0_i32_1 = arith.constant 0 : i32
    return %c0_i32, %c0_i32_0 : i32, i32
  }
  func.func @transform_2(%arg0: i32) -> (i32, i32) {
    %c0_i32 = arith.constant 0 : i32
    %c0_i32_0 = arith.constant 0 : i32
    %c0_i32_1 = arith.constant 0 : i32
    return %c0_i32, %c0_i32_0 : i32, i32
  }
  func.func @transform_3(%arg0: i32) -> (i32, i32) {
    %c0_i32 = arith.constant 0 : i32
    %c0_i32_0 = arith.constant 0 : i32
    %c0_i32_1 = arith.constant 0 : i32
    return %c0_i32, %c0_i32_0 : i32, i32
  }
  func.func @transform_4(%arg0: i32) -> (i32, i32) {
    %c0_i32 = arith.constant 0 : i32
    %c0_i32_0 = arith.constant 0 : i32
    %c0_i32_1 = arith.constant 0 : i32
    return %c0_i32, %c0_i32_0 : i32, i32
  }
  func.func @transform_5(%arg0: i32) -> (i32, i32) {
    %c0_i32 = arith.constant 0 : i32
    %c0_i32_0 = arith.constant 0 : i32
    %c0_i32_1 = arith.constant 0 : i32
    return %c0_i32, %c0_i32_0 : i32, i32
  }
  func.func @transform_6(%arg0: i32) -> (i32, i32) {
    %c0_i32 = arith.constant 0 : i32
    %c0_i32_0 = arith.constant 0 : i32
    %c0_i32_1 = arith.constant 0 : i32
    return %c0_i32, %c0_i32_0 : i32, i32
  }
  func.func @transform_7(%arg0: i32) -> (i32, i32) {
    %c0_i32 = arith.constant 0 : i32
    %c0_i32_0 = arith.constant 0 : i32
    %c0_i32_1 = arith.constant 0 : i32
    return %c0_i32, %c0_i32_0 : i32, i32
  }
  func.func @transform_8(%arg0: i32) -> (i32, i32) {
    %c0_i32 = arith.constant 0 : i32
    %c0_i32_0 = arith.constant 0 : i32
    %c0_i32_1 = arith.constant 0 : i32
    return %c0_i32, %c0_i32_0 : i32, i32
  }
  func.func @transform_9(%arg0: i32) -> (i32, i32) {
    %c0_i32 = arith.constant 0 : i32
    %c0_i32_0 = arith.constant 0 : i32
    %c0_i32_1 = arith.constant 0 : i32
    return %c0_i32, %c0_i32_0 : i32, i32
  }
  func.func @transform_10(%arg0: i32) -> (i32, i32) {
    %c0_i32 = arith.constant 0 : i32
    %c0_i32_0 = arith.constant 0 : i32
    %c0_i32_1 = arith.constant 0 : i32
    return %c0_i32, %c0_i32_0 : i32, i32
  }
  func.func @transform_11(%arg0: i32) -> (i32, i32) {
    %c0_i32 = arith.constant 0 : i32
    %c0_i32_0 = arith.constant 0 : i32
    %c0_i32_1 = arith.constant 0 : i32
    return %c0_i32, %c0_i32_0 : i32, i32
  }
}

</mosaic_0001>

<llo_original>
// kernel: tpu_custom_call.1
$region0: #{tpu_custom_call.1}
  #allocation0 [shape = 'u32[]', space=smem, size = 0x4, offset = 0x4, fixed_abs, tag = 'smem constant byte address 0x4 - core index']
  #allocation1 [shape = 'u32[144,128]{1,0:T(1,128)}', space=vmem, size = 0x12000, scoped, tag = 'internal scratch']
  #allocation2 [shape = 'f32[1,1]{1,0:T(1,128)S(6)}', space=smem, size = 0x200, scoped, tag = 'scoped memory for tpu_custom_call.1']
  %s0 = inlined_call_operand.hbm [shape: f32[64,64], index: 0, kind: input, shape index: {}]
  %s1 = inlined_call_operand.hbm [shape: f32[64,3000], index: 1, kind: input, shape index: {}]
  %s2 = inlined_call_operand.hbm [shape: bf16[3000,256], index: 2, kind: input, shape index: {}]
  %s3 = inlined_call_operand.hbm [shape: f32[1,256], index: 3, kind: input, shape index: {}]
  %s4 = inlined_call_operand.hbm [shape: bf16[256,128], index: 4, kind: input, shape index: {}]
  %s5 = inlined_call_operand.hbm [shape: f32[1,128], index: 5, kind: input, shape index: {}]
  %s6 = inlined_call_operand.vmem [shape: bf16[128,64], index: 6, kind: input, shape index: {}]
  %s7 = inlined_call_operand.hbm [shape: f32[1,64], index: 7, kind: input, shape index: {}]
  %s8 = inlined_call_operand.hbm [shape: f32[1,64], index: 8, kind: input, shape index: {}]
  %s9 = inlined_call_operand.<no memory space> [shape: f32[1,1], index: 9, kind: input, shape index: {}]
  %s10 = inlined_call_operand.vmem [shape: f32[64,1], index: 10, kind: output, shape index: {0}]
  %s11 = inlined_call_operand.hbm [shape: f32[64,64], index: 11, kind: output, shape index: {1}]
  %12 = xla_tuple %s10, %s11
  %s13 = sld [smem:[#allocation0]]
  $region90: #{tpu_custom_call.1} parent=0
    _
  %s15 = ssub.s32 1, %s13
  %s16 = scalar_select 0, %s15, %s13
  %17 = sst [smem:[#allocation2]] %s9
  $region1: #{tpu_custom_call.1} parent=0
    #allocation3 [shape = 'u8[32768]{0}', space=vmem, size = 0x8000, scoped, tag = 'input window, operand 0, single buffered']
    #allocation4 [shape = 's32[1]{0}', space=sflag, size = 0x4, scoped, tag = 'scoped memory for tpu_custom_call.1']
    #allocation5 [shape = 's32[1]{0}', space=sflag, size = 0x4, scoped, tag = 'scoped memory for tpu_custom_call.1']
    #allocation6 [shape = 'u8[786432]{0}', space=vmem, size = 0xc0000, scoped, tag = 'input window, operand 1, single buffered']
    #allocation7 [shape = 's32[1]{0}', space=sflag, size = 0x4, scoped, tag = 'scoped memory for tpu_custom_call.1']
    #allocation8 [shape = 'u8[1536000]{0}', space=vmem, size = 0x177000, scoped, tag = 'input window, operand 2, single buffered']
    #allocation9 [shape = 'u8[1024]{0}', space=vmem, size = 0x400, scoped, tag = 'input window, operand 3, single buffered']
    #allocation10 [shape = 's32[1]{0}', space=sflag, size = 0x4, scoped, tag = 'scoped memory for tpu_custom_call.1']
    #allocation11 [shape = 'u8[65536]{0}', space=vmem, size = 0x10000, scoped, tag = 'input window, operand 4, single buffered']
    #allocation12 [shape = 'u8[512]{0}', space=vmem, size = 0x400, scoped, tag = 'input window, operand 5, single buffered']
    #allocation13 [shape = 's32[1]{0}', space=sflag, size = 0x4, scoped, tag = 'scoped memory for tpu_custom_call.1']
    #allocation14 [shape = 'u8[512]{0}', space=vmem, size = 0x400, scoped, tag = 'input window, operand 7, single buffered']
    #allocation15 [shape = 'u8[512]{0}', space=vmem, size = 0x400, scoped, tag = 'input window, operand 8, single buffered']
    #allocation16 [shape = 's32[1]{0}', space=sflag, size = 0x4, scoped, tag = 'scoped memory for tpu_custom_call.1']
    #allocation17 [shape = 'u8[32768]{0}', space=vmem, size = 0x8000, scoped, tag = 'output window, operand 1, single buffered']
    %18 = vsyncpa [#allocation4], 0
    %19 = vsyncpa [#allocation7], 0
    %20 = vsyncpa [#allocation10], 0
    %21 = vsyncpa [#allocation13], 0
    %22 = vsyncpa [#allocation16], 0
    %23 = vsyncpa [#allocation5], 0
    // Predicated region
    $region2: #{tpu_custom_call.1} parent=1 // pred_check
      _
    $region3: #{tpu_custom_call.1} parent=1 // pred_check_branch
      %25 = sbr.rel (0) target = $region5
    $region4: #{tpu_custom_call.1} parent=1 // pred_region
      %s27 = ssub.s32 1024, 1024
      %28 = vsyncadd [#allocation4], %s27
      %s29 = sshll.u32 [#allocation3], 4
      %s30 = int_to_ptr.vmem [resolvable:$true] %s29
      %35 = dma.hbm_to_vmem [thread:$0]  %s0, 1024, %s30, [#allocation4], 128, 128, 8
    $region5: #{tpu_custom_call.1} parent=1 // pred_fallthru
      _
    // Predicated region
    $region6: #{tpu_custom_call.1} parent=1 // pred_check
      _
    $region7: #{tpu_custom_call.1} parent=1 // pred_check_branch
      %37 = sbr.rel (0) target = $region9
    $region8: #{tpu_custom_call.1} parent=1 // pred_region
      %s39 = ssub.s32 24576, 24576
      %40 = vsyncadd [#allocation7], %s39
      %s41 = sshll.u32 [#allocation6], 4
      %s42 = int_to_ptr.vmem [resolvable:$true] %s41
      %47 = dma.hbm_to_vmem [thread:$0]  %s1, 24576, %s42, [#allocation7], 3072, 3072, 192
    $region9: #{tpu_custom_call.1} parent=1 // pred_fallthru
      _
    // Predicated region
    $region10: #{tpu_custom_call.1} parent=1 // pred_check
      _
    $region11: #{tpu_custom_call.1} parent=1 // pred_check_branch
      %49 = sbr.rel (0) target = $region13
    $region12: #{tpu_custom_call.1} parent=1 // pred_region
      %s51 = ssub.s32 48000, 48000
      %52 = vsyncadd [#allocation7], %s51
      %s53 = sshll.u32 [#allocation8], 4
      %s54 = int_to_ptr.vmem [resolvable:$true] %s53
      %59 = dma.hbm_to_vmem [thread:$0]  %s2, 48000, %s54, [#allocation7], 128, 128, 8
    $region13: #{tpu_custom_call.1} parent=1 // pred_fallthru
      _
    // Predicated region
    $region14: #{tpu_custom_call.1} parent=1 // pred_check
      _
    $region15: #{tpu_custom_call.1} parent=1 // pred_check_branch
      %61 = sbr.rel (0) target = $region17
    $region16: #{tpu_custom_call.1} parent=1 // pred_region
      %s63 = ssub.s32 32, 32
      %64 = vsyncadd [#allocation10], %s63
      %s66 = sshll.u32 [#allocation9], 4
      %s67 = int_to_ptr.vmem [resolvable:$true] %s66
      %69 = dma.hbm_to_vmem [thread:$0]  %s3, 32, %s67, [#allocation10]
    $region17: #{tpu_custom_call.1} parent=1 // pred_fallthru
      _
    // Predicated region
    $region18: #{tpu_custom_call.1} parent=1 // pred_check
      _
    $region19: #{tpu_custom_call.1} parent=1 // pred_check_branch
      %71 = sbr.rel (0) target = $region21
    $region20: #{tpu_custom_call.1} parent=1 // pred_region
      %s73 = ssub.s32 2048, 2048
      %74 = vsyncadd [#allocation10], %s73
      %s75 = sshll.u32 [#allocation11], 4
      %s76 = int_to_ptr.vmem [resolvable:$true] %s75
      %81 = dma.hbm_to_vmem [thread:$0]  %s4, 2048, %s76, [#allocation10], 64, 64, 4
    $region21: #{tpu_custom_call.1} parent=1 // pred_fallthru
      _
    // Predicated region
    $region22: #{tpu_custom_call.1} parent=1 // pred_check
      _
    $region23: #{tpu_custom_call.1} parent=1 // pred_check_branch
      %83 = sbr.rel (0) target = $region25
    $region24: #{tpu_custom_call.1} parent=1 // pred_region
      %s85 = ssub.s32 16, 16
      %86 = vsyncadd [#allocation13], %s85
      %s88 = sshll.u32 [#allocation12], 4
      %s89 = int_to_ptr.vmem [resolvable:$true] %s88
      %91 = dma.hbm_to_vmem [thread:$0]  %s5, 16, %s89, [#allocation13]
    $region25: #{tpu_custom_call.1} parent=1 // pred_fallthru
      _
    // Predicated region
    $region26: #{tpu_custom_call.1} parent=1 // pred_check
      _
    $region27: #{tpu_custom_call.1} parent=1 // pred_check_branch
      %93 = sbr.rel (0) target = $region29
    $region28: #{tpu_custom_call.1} parent=1 // pred_region
      _
    $region29: #{tpu_custom_call.1} parent=1 // pred_fallthru
      _
    // Predicated region
    $region30: #{tpu_custom_call.1} parent=1 // pred_check
      _
    $region31: #{tpu_custom_call.1} parent=1 // pred_check_branch
      %95 = sbr.rel (0) target = $region33
    $region32: #{tpu_custom_call.1} parent=1 // pred_region
      %s97 = ssub.s32 16, 16
      %98 = vsyncadd [#allocation13], %s97
      %s100 = sshll.u32 [#allocation14], 4
      %s101 = int_to_ptr.vmem [resolvable:$true] %s100
      %103 = dma.hbm_to_vmem [thread:$0]  %s7, 16, %s101, [#allocation13]
    $region33: #{tpu_custom_call.1} parent=1 // pred_fallthru
      _
    // Predicated region
    $region34: #{tpu_custom_call.1} parent=1 // pred_check
      _
    $region35: #{tpu_custom_call.1} parent=1 // pred_check_branch
      %105 = sbr.rel (0) target = $region37
    $region36: #{tpu_custom_call.1} parent=1 // pred_region
      %s107 = ssub.s32 16, 16
      %108 = vsyncadd [#allocation16], %s107
      %s110 = sshll.u32 [#allocation15], 4
      %s111 = int_to_ptr.vmem [resolvable:$true] %s110
      %113 = dma.hbm_to_vmem [thread:$0]  %s8, 16, %s111, [#allocation16]
    $region37: #{tpu_custom_call.1} parent=1 // pred_fallthru
      _
    // Predicated region
    $region38: #{tpu_custom_call.1} parent=1 // pred_check
      _
    $region39: #{tpu_custom_call.1} parent=1 // pred_check_branch
      %115 = sbr.rel (0) target = $region41
    $region40: #{tpu_custom_call.1} parent=1 // pred_region
      _
    $region41: #{tpu_custom_call.1} parent=1 // pred_fallthru
      _
    // Predicated region
    $region42: #{tpu_custom_call.1} parent=1 // pred_check
      _
    $region43: #{tpu_custom_call.1} parent=1 // pred_check_branch
      %117 = sbr.rel (0) target = $region45
    $region44: #{tpu_custom_call.1} parent=1 // pred_region
      %118 = dma.done [#allocation4], 1024
    $region45: #{tpu_custom_call.1} parent=1 // pred_fallthru
      _
    // Predicated region
    $region46: #{tpu_custom_call.1} parent=1 // pred_check
      _
    $region47: #{tpu_custom_call.1} parent=1 // pred_check_branch
      %120 = sbr.rel (0) target = $region49
    $region48: #{tpu_custom_call.1} parent=1 // pred_region
      %121 = dma.done [#allocation7], 24576
    $region49: #{tpu_custom_call.1} parent=1 // pred_fallthru
      _
    // Predicated region
    $region50: #{tpu_custom_call.1} parent=1 // pred_check
      _
    $region51: #{tpu_custom_call.1} parent=1 // pred_check_branch
      %123 = sbr.rel (0) target = $region53
    $region52: #{tpu_custom_call.1} parent=1 // pred_region
      %124 = dma.done [#allocation7], 48000
    $region53: #{tpu_custom_call.1} parent=1 // pred_fallthru
      _
    // Predicated region
    $region54: #{tpu_custom_call.1} parent=1 // pred_check
      _
    $region55: #{tpu_custom_call.1} parent=1 // pred_check_branch
      %126 = sbr.rel (0) target = $region57
    $region56: #{tpu_custom_call.1} parent=1 // pred_region
      %127 = dma.done [#allocation10], 32
    $region57: #{tpu_custom_call.1} parent=1 // pred_fallthru
      _
    // Predicated region
    $region58: #{tpu_custom_call.1} parent=1 // pred_check
      _
    $region59: #{tpu_custom_call.1} parent=1 // pred_check_branch
      %129 = sbr.rel (0) target = $region61
    $region60: #{tpu_custom_call.1} parent=1 // pred_region
      %130 = dma.done [#allocation10], 2048
    $region61: #{tpu_custom_call.1} parent=1 // pred_fallthru
      _
    // Predicated region
    $region62: #{tpu_custom_call.1} parent=1 // pred_check
      _
    $region63: #{tpu_custom_call.1} parent=1 // pred_check_branch
      %132 = sbr.rel (0) target = $region65
    $region64: #{tpu_custom_call.1} parent=1 // pred_region
      %133 = dma.done [#allocation13], 16
    $region65: #{tpu_custom_call.1} parent=1 // pred_fallthru
      _
    // Predicated region
    $region66: #{tpu_custom_call.1} parent=1 // pred_check
      _
    $region67: #{tpu_custom_call.1} parent=1 // pred_check_branch
      %135 = sbr.rel (0) target = $region69
    $region68: #{tpu_custom_call.1} parent=1 // pred_region
      %136 = dma.done [#allocation13], 16
    $region69: #{tpu_custom_call.1} parent=1 // pred_fallthru
      _
    // Predicated region
    $region70: #{tpu_custom_call.1} parent=1 // pred_check
      _
    $region71: #{tpu_custom_call.1} parent=1 // pred_check_branch
      %138 = sbr.rel (0) target = $region73
    $region72: #{tpu_custom_call.1} parent=1 // pred_region
      %139 = dma.done [#allocation16], 16
    $region73: #{tpu_custom_call.1} parent=1 // pred_fallthru
      _
    %v141 = vld [vmem:[#allocation3] sm:$0xff]
    %v142 = vld [vmem:[#allocation3 + $0x8] sm:$0xff]
    %v143 = vld [vmem:[#allocation3 + $0x10] sm:$0xff]
    %v144 = vld [vmem:[#allocation3 + $0x18] sm:$0xff]
    %v145 = vld [vmem:[#allocation3 + $0x20] sm:$0xff]
    %v146 = vld [vmem:[#allocation3 + $0x28] sm:$0xff]
    %v147 = vld [vmem:[#allocation3 + $0x30] sm:$0xff]
    %v148 = vld [vmem:[#allocation3 + $0x38] sm:$0xff]
    %v149 = vld [vmem:[#allocation6] sm:$0xff]
    %v150 = vld [vmem:[#allocation6 + $0x8] sm:$0xff]
    %v151 = vld [vmem:[#allocation6 + $0x10] sm:$0xff]
    %v152 = vld [vmem:[#allocation6 + $0x18] sm:$0xff]
    %v153 = vld [vmem:[#allocation6 + $0x20] sm:$0xff]
    %v154 = vld [vmem:[#allocation6 + $0x28] sm:$0xff]
    %v155 = vld [vmem:[#allocation6 + $0x30] sm:$0xff]
    %v156 = vld [vmem:[#allocation6 + $0x38] sm:$0xff]
    %v157 = vld [vmem:[#allocation6 + $0x40] sm:$0xff]
    %v158 = vld [vmem:[#allocation6 + $0x48] sm:$0xff]
    %v159 = vld [vmem:[#allocation6 + $0x50] sm:$0xff]
    %v160 = vld [vmem:[#allocation6 + $0x58] sm:$0xff]
    %v161 = vld [vmem:[#allocation6 + $0x60] sm:$0xff]
    %v162 = vld [vmem:[#allocation6 + $0x68] sm:$0xff]
    %v163 = vld [vmem:[#allocation6 + $0x70] sm:$0xff]
    %v164 = vld [vmem:[#allocation6 + $0x78] sm:$0xff]
    %v165 = vld [vmem:[#allocation6 + $0x80] sm:$0xff]
    %v166 = vld [vmem:[#allocation6 + $0x88] sm:$0xff]
    %v167 = vld [vmem:[#allocation6 + $0x90] sm:$0xff]
    %v168 = vld [vmem:[#allocation6 + $0x98] sm:$0xff]
    %v169 = vld [vmem:[#allocation6 + $0xa0] sm:$0xff]
    %v170 = vld [vmem:[#allocation6 + $0xa8] sm:$0xff]
    %v171 = vld [vmem:[#allocation6 + $0xb0] sm:$0xff]
    %v172 = vld [vmem:[#allocation6 + $0xb8] sm:$0xff]
    %v173 = vld [vmem:[#allocation6 + $0xc0] sm:$0xff]
    %v174 = vld [vmem:[#allocation6 + $0xc8] sm:$0xff]
    %v175 = vld [vmem:[#allocation6 + $0xd0] sm:$0xff]
    %v176 = vld [vmem:[#allocation6 + $0xd8] sm:$0xff]
    %v177 = vld [vmem:[#allocation6 + $0xe0] sm:$0xff]
    %v178 = vld [vmem:[#allocation6 + $0xe8] sm:$0xff]
    %v179 = vld [vmem:[#allocation6 + $0xf0] sm:$0xff]
    %v180 = vld [vmem:[#allocation6 + $0xf8] sm:$0xff]
    %v181 = vld [vmem:[#allocation6 + $0x100] sm:$0xff]
    %v182 = vld [vmem:[#allocation6 + $0x108] sm:$0xff]
    %v183 = vld [vmem:[#allocation6 + $0x110] sm:$0xff]
    %v184 = vld [vmem:[#allocation6 + $0x118] sm:$0xff]
    %v185 = vld [vmem:[#allocation6 + $0x120] sm:$0xff]
    %v186 = vld [vmem:[#allocation6 + $0x128] sm:$0xff]
    %v187 = vld [vmem:[#allocation6 + $0x130] sm:$0xff]
    %v188 = vld [vmem:[#allocation6 + $0x138] sm:$0xff]
    %v189 = vld [vmem:[#allocation6 + $0x140] sm:$0xff]
    %v190 = vld [vmem:[#allocation6 + $0x148] sm:$0xff]
    %v191 = vld [vmem:[#allocation6 + $0x150] sm:$0xff]
    %v192 = vld [vmem:[#allocation6 + $0x158] sm:$0xff]
    %v193 = vld [vmem:[#allocation6 + $0x160] sm:$0xff]
    %v194 = vld [vmem:[#allocation6 + $0x168] sm:$0xff]
    %v195 = vld [vmem:[#allocation6 + $0x170] sm:$0xff]
    %v196 = vld [vmem:[#allocation6 + $0x178] sm:$0xff]
    %v197 = vld [vmem:[#allocation6 + $0x180] sm:$0xff]
    %v198 = vld [vmem:[#allocation6 + $0x188] sm:$0xff]
    %v199 = vld [vmem:[#allocation6 + $0x190] sm:$0xff]
    %v200 = vld [vmem:[#allocation6 + $0x198] sm:$0xff]
    %v201 = vld [vmem:[#allocation6 + $0x1a0] sm:$0xff]
    %v202 = vld [vmem:[#allocation6 + $0x1a8] sm:$0xff]
    %v203 = vld [vmem:[#allocation6 + $0x1b0] sm:$0xff]
    %v204 = vld [vmem:[#allocation6 + $0x1b8] sm:$0xff]
    %v205 = vld [vmem:[#allocation6 + $0x1c0] sm:$0xff]
    %v206 = vld [vmem:[#allocation6 + $0x1c8] sm:$0xff]
    %v207 = vld [vmem:[#allocation6 + $0x1d0] sm:$0xff]
    %v208 = vld [vmem:[#allocation6 + $0x1d8] sm:$0xff]
    %v209 = vld [vmem:[#allocation6 + $0x1e0] sm:$0xff]
    %v210 = vld [vmem:[#allocation6 + $0x1e8] sm:$0xff]
    %v211 = vld [vmem:[#allocation6 + $0x1f0] sm:$0xff]
    %v212 = vld [vmem:[#allocation6 + $0x1f8] sm:$0xff]
    %v213 = vld [vmem:[#allocation6 + $0x200] sm:$0xff]
    %v214 = vld [vmem:[#allocation6 + $0x208] sm:$0xff]
    %v215 = vld [vmem:[#allocation6 + $0x210] sm:$0xff]
    %v216 = vld [vmem:[#allocation6 + $0x218] sm:$0xff]
    %v217 = vld [vmem:[#allocation6 + $0x220] sm:$0xff]
    %v218 = vld [vmem:[#allocation6 + $0x228] sm:$0xff]
    %v219 = vld [vmem:[#allocation6 + $0x230] sm:$0xff]
    %v220 = vld [vmem:[#allocation6 + $0x238] sm:$0xff]
    %v221 = vld [vmem:[#allocation6 + $0x240] sm:$0xff]
    %v222 = vld [vmem:[#allocation6 + $0x248] sm:$0xff]
    %v223 = vld [vmem:[#allocation6 + $0x250] sm:$0xff]
    %v224 = vld [vmem:[#allocation6 + $0x258] sm:$0xff]
    %v225 = vld [vmem:[#allocation6 + $0x260] sm:$0xff]
    %v226 = vld [vmem:[#allocation6 + $0x268] sm:$0xff]
    %v227 = vld [vmem:[#allocation6 + $0x270] sm:$0xff]
    %v228 = vld [vmem:[#allocation6 + $0x278] sm:$0xff]
    %v229 = vld [vmem:[#allocation6 + $0x280] sm:$0xff]
    %v230 = vld [vmem:[#allocation6 + $0x288] sm:$0xff]
    %v231 = vld [vmem:[#allocation6 + $0x290] sm:$0xff]
    %v232 = vld [vmem:[#allocation6 + $0x298] sm:$0xff]
    %v233 = vld [vmem:[#allocation6 + $0x2a0] sm:$0xff]
    %v234 = vld [vmem:[#allocation6 + $0x2a8] sm:$0xff]
    %v235 = vld [vmem:[#allocation6 + $0x2b0] sm:$0xff]
    %v236 = vld [vmem:[#allocation6 + $0x2b8] sm:$0xff]
    %v237 = vld [vmem:[#allocation6 + $0x2c0] sm:$0xff]
    %v238 = vld [vmem:[#allocation6 + $0x2c8] sm:$0xff]
    %v239 = vld [vmem:[#allocation6 + $0x2d0] sm:$0xff]
    %v240 = vld [vmem:[#allocation6 + $0x2d8] sm:$0xff]
    %v241 = vld [vmem:[#allocation6 + $0x2e0] sm:$0xff]
    %v242 = vld [vmem:[#allocation6 + $0x2e8] sm:$0xff]
    %v243 = vld [vmem:[#allocation6 + $0x2f0] sm:$0xff]
    %v244 = vld [vmem:[#allocation6 + $0x2f8] sm:$0xff]
    %v245 = vld [vmem:[#allocation6 + $0x300] sm:$0xff]
    %v246 = vld [vmem:[#allocation6 + $0x308] sm:$0xff]
    %v247 = vld [vmem:[#allocation6 + $0x310] sm:$0xff]
    %v248 = vld [vmem:[#allocation6 + $0x318] sm:$0xff]
    %v249 = vld [vmem:[#allocation6 + $0x320] sm:$0xff]
    %v250 = vld [vmem:[#allocation6 + $0x328] sm:$0xff]
    %v251 = vld [vmem:[#allocation6 + $0x330] sm:$0xff]
    %v252 = vld [vmem:[#allocation6 + $0x338] sm:$0xff]
    %v253 = vld [vmem:[#allocation6 + $0x340] sm:$0xff]
    %v254 = vld [vmem:[#allocation6 + $0x348] sm:$0xff]
    %v255 = vld [vmem:[#allocation6 + $0x350] sm:$0xff]
    %v256 = vld [vmem:[#allocation6 + $0x358] sm:$0xff]
    %v257 = vld [vmem:[#allocation6 + $0x360] sm:$0xff]
    %v258 = vld [vmem:[#allocation6 + $0x368] sm:$0xff]
    %v259 = vld [vmem:[#allocation6 + $0x370] sm:$0xff]
    %v260 = vld [vmem:[#allocation6 + $0x378] sm:$0xff]
    %v261 = vld [vmem:[#allocation6 + $0x380] sm:$0xff]
    %v262 = vld [vmem:[#allocation6 + $0x388] sm:$0xff]
    %v263 = vld [vmem:[#allocation6 + $0x390] sm:$0xff]
    %v264 = vld [vmem:[#allocation6 + $0x398] sm:$0xff]
    %v265 = vld [vmem:[#allocation6 + $0x3a0] sm:$0xff]
    %v266 = vld [vmem:[#allocation6 + $0x3a8] sm:$0xff]
    %v267 = vld [vmem:[#allocation6 + $0x3b0] sm:$0xff]
    %v268 = vld [vmem:[#allocation6 + $0x3b8] sm:$0xff]
    %v269 = vld [vmem:[#allocation6 + $0x3c0] sm:$0xff]
    %v270 = vld [vmem:[#allocation6 + $0x3c8] sm:$0xff]
    %v271 = vld [vmem:[#allocation6 + $0x3d0] sm:$0xff]
    %v272 = vld [vmem:[#allocation6 + $0x3d8] sm:$0xff]
    %v273 = vld [vmem:[#allocation6 + $0x3e0] sm:$0xff]
    %v274 = vld [vmem:[#allocation6 + $0x3e8] sm:$0xff]
    %v275 = vld [vmem:[#allocation6 + $0x3f0] sm:$0xff]
    %v276 = vld [vmem:[#allocation6 + $0x3f8] sm:$0xff]
    %v277 = vld [vmem:[#allocation6 + $0x400] sm:$0xff]
    %v278 = vld [vmem:[#allocation6 + $0x408] sm:$0xff]
    %v279 = vld [vmem:[#allocation6 + $0x410] sm:$0xff]
    %v280 = vld [vmem:[#allocation6 + $0x418] sm:$0xff]
    %v281 = vld [vmem:[#allocation6 + $0x420] sm:$0xff]
    %v282 = vld [vmem:[#allocation6 + $0x428] sm:$0xff]
    %v283 = vld [vmem:[#allocation6 + $0x430] sm:$0xff]
    %v284 = vld [vmem:[#allocation6 + $0x438] sm:$0xff]
    %v285 = vld [vmem:[#allocation6 + $0x440] sm:$0xff]
    %v286 = vld [vmem:[#allocation6 + $0x448] sm:$0xff]
    %v287 = vld [vmem:[#allocation6 + $0x450] sm:$0xff]
    %v288 = vld [vmem:[#allocation6 + $0x458] sm:$0xff]
    %v289 = vld [vmem:[#allocation6 + $0x460] sm:$0xff]
    %v290 = vld [vmem:[#allocation6 + $0x468] sm:$0xff]
    %v291 = vld [vmem:[#allocation6 + $0x470] sm:$0xff]
    %v292 = vld [vmem:[#allocation6 + $0x478] sm:$0xff]
    %v293 = vld [vmem:[#allocation6 + $0x480] sm:$0xff]
    %v294 = vld [vmem:[#allocation6 + $0x488] sm:$0xff]
    %v295 = vld [vmem:[#allocation6 + $0x490] sm:$0xff]
    %v296 = vld [vmem:[#allocation6 + $0x498] sm:$0xff]
    %v297 = vld [vmem:[#allocation6 + $0x4a0] sm:$0xff]
    %v298 = vld [vmem:[#allocation6 + $0x4a8] sm:$0xff]
    %v299 = vld [vmem:[#allocation6 + $0x4b0] sm:$0xff]
    %v300 = vld [vmem:[#allocation6 + $0x4b8] sm:$0xff]
    %v301 = vld [vmem:[#allocation6 + $0x4c0] sm:$0xff]
    %v302 = vld [vmem:[#allocation6 + $0x4c8] sm:$0xff]
    %v303 = vld [vmem:[#allocation6 + $0x4d0] sm:$0xff]
    %v304 = vld [vmem:[#allocation6 + $0x4d8] sm:$0xff]
    %v305 = vld [vmem:[#allocation6 + $0x4e0] sm:$0xff]
    %v306 = vld [vmem:[#allocation6 + $0x4e8] sm:$0xff]
    %v307 = vld [vmem:[#allocation6 + $0x4f0] sm:$0xff]
    %v308 = vld [vmem:[#allocation6 + $0x4f8] sm:$0xff]
    %v309 = vld [vmem:[#allocation6 + $0x500] sm:$0xff]
    %v310 = vld [vmem:[#allocation6 + $0x508] sm:$0xff]
    %v311 = vld [vmem:[#allocation6 + $0x510] sm:$0xff]
    %v312 = vld [vmem:[#allocation6 + $0x518] sm:$0xff]
    %v313 = vld [vmem:[#allocation6 + $0x520] sm:$0xff]
    %v314 = vld [vmem:[#allocation6 + $0x528] sm:$0xff]
    %v315 = vld [vmem:[#allocation6 + $0x530] sm:$0xff]
    %v316 = vld [vmem:[#allocation6 + $0x538] sm:$0xff]
    %v317 = vld [vmem:[#allocation6 + $0x540] sm:$0xff]
    %v318 = vld [vmem:[#allocation6 + $0x548] sm:$0xff]
    %v319 = vld [vmem:[#allocation6 + $0x550] sm:$0xff]
    %v320 = vld [vmem:[#allocation6 + $0x558] sm:$0xff]
    %v321 = vld [vmem:[#allocation6 + $0x560] sm:$0xff]
    %v322 = vld [vmem:[#allocation6 + $0x568] sm:$0xff]
    %v323 = vld [vmem:[#allocation6 + $0x570] sm:$0xff]
    %v324 = vld [vmem:[#allocation6 + $0x578] sm:$0xff]
    %v325 = vld [vmem:[#allocation6 + $0x580] sm:$0xff]
    %v326 = vld [vmem:[#allocation6 + $0x588] sm:$0xff]
    %v327 = vld [vmem:[#allocation6 + $0x590] sm:$0xff]
    %v328 = vld [vmem:[#allocation6 + $0x598] sm:$0xff]
    %v329 = vld [vmem:[#allocation6 + $0x5a0] sm:$0xff]
    %v330 = vld [vmem:[#allocation6 + $0x5a8] sm:$0xff]
    %v331 = vld [vmem:[#allocation6 + $0x5b0] sm:$0xff]
    %v332 = vld [vmem:[#allocation6 + $0x5b8] sm:$0xff]
    %v333 = vld [vmem:[#allocation6 + $0x5c0] sm:$0xff]
    %v334 = vld [vmem:[#allocation6 + $0x5c8] sm:$0xff]
    %v335 = vld [vmem:[#allocation6 + $0x5d0] sm:$0xff]
    %v336 = vld [vmem:[#allocation6 + $0x5d8] sm:$0xff]
    %v337 = vld [vmem:[#allocation6 + $0x5e0] sm:$0xff]
    %v338 = vld [vmem:[#allocation6 + $0x5e8] sm:$0xff]
    %v339 = vld [vmem:[#allocation6 + $0x5f0] sm:$0xff]
    %v340 = vld [vmem:[#allocation6 + $0x5f8] sm:$0xff]
    %v341 = vpack.c.bf16 %v173, %v149
    %v342 = vpack.c.bf16 %v174, %v150
    %v343 = vpack.c.bf16 %v175, %v151
    %v344 = vpack.c.bf16 %v176, %v152
    %v345 = vpack.c.bf16 %v177, %v153
    %v346 = vpack.c.bf16 %v178, %v154
    %v347 = vpack.c.bf16 %v179, %v155
    %v348 = vpack.c.bf16 %v180, %v156
    %v349 = vpack.c.bf16 %v181, %v157
    %v350 = vpack.c.bf16 %v182, %v158
    %v351 = vpack.c.bf16 %v183, %v159
    %v352 = vpack.c.bf16 %v184, %v160
    %v353 = vpack.c.bf16 %v185, %v161
    %v354 = vpack.c.bf16 %v186, %v162
    %v355 = vpack.c.bf16 %v187, %v163
    %v356 = vpack.c.bf16 %v188, %v164
    %v357 = vpack.c.bf16 %v189, %v165
    %v358 = vpack.c.bf16 %v190, %v166
    %v359 = vpack.c.bf16 %v191, %v167
    %v360 = vpack.c.bf16 %v192, %v168
    %v361 = vpack.c.bf16 %v193, %v169
    %v362 = vpack.c.bf16 %v194, %v170
    %v363 = vpack.c.bf16 %v195, %v171
    %v364 = vpack.c.bf16 %v196, %v172
    %v365 = vpack.c.bf16 %v221, %v197
    %v366 = vpack.c.bf16 %v222, %v198
    %v367 = vpack.c.bf16 %v223, %v199
    %v368 = vpack.c.bf16 %v224, %v200
    %v369 = vpack.c.bf16 %v225, %v201
    %v370 = vpack.c.bf16 %v226, %v202
    %v371 = vpack.c.bf16 %v227, %v203
    %v372 = vpack.c.bf16 %v228, %v204
    %v373 = vpack.c.bf16 %v229, %v205
    %v374 = vpack.c.bf16 %v230, %v206
    %v375 = vpack.c.bf16 %v231, %v207
    %v376 = vpack.c.bf16 %v232, %v208
    %v377 = vpack.c.bf16 %v233, %v209
    %v378 = vpack.c.bf16 %v234, %v210
    %v379 = vpack.c.bf16 %v235, %v211
    %v380 = vpack.c.bf16 %v236, %v212
    %v381 = vpack.c.bf16 %v237, %v213
    %v382 = vpack.c.bf16 %v238, %v214
    %v383 = vpack.c.bf16 %v239, %v215
    %v384 = vpack.c.bf16 %v240, %v216
    %v385 = vpack.c.bf16 %v241, %v217
    %v386 = vpack.c.bf16 %v242, %v218
    %v387 = vpack.c.bf16 %v243, %v219
    %v388 = vpack.c.bf16 %v244, %v220
    %v389 = vpack.c.bf16 %v269, %v245
    %v390 = vpack.c.bf16 %v270, %v246
    %v391 = vpack.c.bf16 %v271, %v247
    %v392 = vpack.c.bf16 %v272, %v248
    %v393 = vpack.c.bf16 %v273, %v249
    %v394 = vpack.c.bf16 %v274, %v250
    %v395 = vpack.c.bf16 %v275, %v251
    %v396 = vpack.c.bf16 %v276, %v252
    %v397 = vpack.c.bf16 %v277, %v253
    %v398 = vpack.c.bf16 %v278, %v254
    %v399 = vpack.c.bf16 %v279, %v255
    %v400 = vpack.c.bf16 %v280, %v256
    %v401 = vpack.c.bf16 %v281, %v257
    %v402 = vpack.c.bf16 %v282, %v258
    %v403 = vpack.c.bf16 %v283, %v259
    %v404 = vpack.c.bf16 %v284, %v260
    %v405 = vpack.c.bf16 %v285, %v261
    %v406 = vpack.c.bf16 %v286, %v262
    %v407 = vpack.c.bf16 %v287, %v263
    %v408 = vpack.c.bf16 %v288, %v264
    %v409 = vpack.c.bf16 %v289, %v265
    %v410 = vpack.c.bf16 %v290, %v266
    %v411 = vpack.c.bf16 %v291, %v267
    %v412 = vpack.c.bf16 %v292, %v268
    %v413 = vpack.c.bf16 %v317, %v293
    %v414 = vpack.c.bf16 %v318, %v294
    %v415 = vpack.c.bf16 %v319, %v295
    %v416 = vpack.c.bf16 %v320, %v296
    %v417 = vpack.c.bf16 %v321, %v297
    %v418 = vpack.c.bf16 %v322, %v298
    %v419 = vpack.c.bf16 %v323, %v299
    %v420 = vpack.c.bf16 %v324, %v300
    %v421 = vpack.c.bf16 %v325, %v301
    %v422 = vpack.c.bf16 %v326, %v302
    %v423 = vpack.c.bf16 %v327, %v303
    %v424 = vpack.c.bf16 %v328, %v304
    %v425 = vpack.c.bf16 %v329, %v305
    %v426 = vpack.c.bf16 %v330, %v306
    %v427 = vpack.c.bf16 %v331, %v307
    %v428 = vpack.c.bf16 %v332, %v308
    %v429 = vpack.c.bf16 %v333, %v309
    %v430 = vpack.c.bf16 %v334, %v310
    %v431 = vpack.c.bf16 %v335, %v311
    %v432 = vpack.c.bf16 %v336, %v312
    %v433 = vpack.c.bf16 %v337, %v313
    %v434 = vpack.c.bf16 %v338, %v314
    %v435 = vpack.c.bf16 %v339, %v315
    %v436 = vpack.c.bf16 %v340, %v316
    %v437 = vld [vmem:[#allocation8] sm:$0xff]
    %v438 = vld [vmem:[#allocation8 + $0x8] sm:$0xff]
    %v439 = vld [vmem:[#allocation8 + $0x10] sm:$0xff]
    %v440 = vld [vmem:[#allocation8 + $0x18] sm:$0xff]
    %v441 = vld [vmem:[#allocation8 + $0x20] sm:$0xff]
    %v442 = vld [vmem:[#allocation8 + $0x28] sm:$0xff]
    %v443 = vld [vmem:[#allocation8 + $0x30] sm:$0xff]
    %v444 = vld [vmem:[#allocation8 + $0x38] sm:$0xff]
    %v445 = vld [vmem:[#allocation8 + $0x40] sm:$0xff]
    %v446 = vld [vmem:[#allocation8 + $0x48] sm:$0xff]
    %v447 = vld [vmem:[#allocation8 + $0x50] sm:$0xff]
    %v448 = vld [vmem:[#allocation8 + $0x58] sm:$0xff]
    %v449 = vld [vmem:[#allocation8 + $0x60] sm:$0xff]
    %v450 = vld [vmem:[#allocation8 + $0x68] sm:$0xff]
    %v451 = vld [vmem:[#allocation8 + $0x70] sm:$0xff]
    %v452 = vld [vmem:[#allocation8 + $0x78] sm:$0xff]
    %v453 = vld [vmem:[#allocation8 + $0x80] sm:$0xff]
    %v454 = vld [vmem:[#allocation8 + $0x88] sm:$0xff]
    %v455 = vld [vmem:[#allocation8 + $0x90] sm:$0xff]
    %v456 = vld [vmem:[#allocation8 + $0x98] sm:$0xff]
    %v457 = vld [vmem:[#allocation8 + $0xa0] sm:$0xff]
    %v458 = vld [vmem:[#allocation8 + $0xa8] sm:$0xff]
    %v459 = vld [vmem:[#allocation8 + $0xb0] sm:$0xff]
    %v460 = vld [vmem:[#allocation8 + $0xb8] sm:$0xff]
    %v461 = vld [vmem:[#allocation8 + $0xc0] sm:$0xff]
    %v462 = vld [vmem:[#allocation8 + $0xc8] sm:$0xff]
    %v463 = vld [vmem:[#allocation8 + $0xd0] sm:$0xff]
    %v464 = vld [vmem:[#allocation8 + $0xd8] sm:$0xff]
    %v465 = vld [vmem:[#allocation8 + $0xe0] sm:$0xff]
    %v466 = vld [vmem:[#allocation8 + $0xe8] sm:$0xff]
    %v467 = vld [vmem:[#allocation8 + $0xf0] sm:$0xff]
    %v468 = vld [vmem:[#allocation8 + $0xf8] sm:$0xff]
    %v469 = vld [vmem:[#allocation8 + $0x100] sm:$0xff]
    %v470 = vld [vmem:[#allocation8 + $0x108] sm:$0xff]
    %v471 = vld [vmem:[#allocation8 + $0x110] sm:$0xff]
    %v472 = vld [vmem:[#allocation8 + $0x118] sm:$0xff]
    %v473 = vld [vmem:[#allocation8 + $0x120] sm:$0xff]
    %v474 = vld [vmem:[#allocation8 + $0x128] sm:$0xff]
    %v475 = vld [vmem:[#allocation8 + $0x130] sm:$0xff]
    %v476 = vld [vmem:[#allocation8 + $0x138] sm:$0xff]
    %v477 = vld [vmem:[#allocation8 + $0x140] sm:$0xff]
    %v478 = vld [vmem:[#allocation8 + $0x148] sm:$0xff]
    %v479 = vld [vmem:[#allocation8 + $0x150] sm:$0xff]
    %v480 = vld [vmem:[#allocation8 + $0x158] sm:$0xff]
    %v481 = vld [vmem:[#allocation8 + $0x160] sm:$0xff]
    %v482 = vld [vmem:[#allocation8 + $0x168] sm:$0xff]
    %v483 = vld [vmem:[#allocation8 + $0x170] sm:$0xff]
    %v484 = vld [vmem:[#allocation8 + $0x178] sm:$0xff]
    %v485 = vld [vmem:[#allocation8 + $0x180] sm:$0xff]
    %v486 = vld [vmem:[#allocation8 + $0x188] sm:$0xff]
    %v487 = vld [vmem:[#allocation8 + $0x190] sm:$0xff]
    %v488 = vld [vmem:[#allocation8 + $0x198] sm:$0xff]
    %v489 = vld [vmem:[#allocation8 + $0x1a0] sm:$0xff]
    %v490 = vld [vmem:[#allocation8 + $0x1a8] sm:$0xff]
    %v491 = vld [vmem:[#allocation8 + $0x1b0] sm:$0xff]
    %v492 = vld [vmem:[#allocation8 + $0x1b8] sm:$0xff]
    %v493 = vld [vmem:[#allocation8 + $0x1c0] sm:$0xff]
    %v494 = vld [vmem:[#allocation8 + $0x1c8] sm:$0xff]
    %v495 = vld [vmem:[#allocation8 + $0x1d0] sm:$0xff]
    %v496 = vld [vmem:[#allocation8 + $0x1d8] sm:$0xff]
    %v497 = vld [vmem:[#allocation8 + $0x1e0] sm:$0xff]
    %v498 = vld [vmem:[#allocation8 + $0x1e8] sm:$0xff]
    %v499 = vld [vmem:[#allocation8 + $0x1f0] sm:$0xff]
    %v500 = vld [vmem:[#allocation8 + $0x1f8] sm:$0xff]
    %v501 = vld [vmem:[#allocation8 + $0x200] sm:$0xff]
    %v502 = vld [vmem:[#allocation8 + $0x208] sm:$0xff]
    %v503 = vld [vmem:[#allocation8 + $0x210] sm:$0xff]
    %v504 = vld [vmem:[#allocation8 + $0x218] sm:$0xff]
    %v505 = vld [vmem:[#allocation8 + $0x220] sm:$0xff]
    %v506 = vld [vmem:[#allocation8 + $0x228] sm:$0xff]
    %v507 = vld [vmem:[#allocation8 + $0x230] sm:$0xff]
    %v508 = vld [vmem:[#allocation8 + $0x238] sm:$0xff]
    %v509 = vld [vmem:[#allocation8 + $0x240] sm:$0xff]
    %v510 = vld [vmem:[#allocation8 + $0x248] sm:$0xff]
    %v511 = vld [vmem:[#allocation8 + $0x250] sm:$0xff]
    %v512 = vld [vmem:[#allocation8 + $0x258] sm:$0xff]
    %v513 = vld [vmem:[#allocation8 + $0x260] sm:$0xff]
    %v514 = vld [vmem:[#allocation8 + $0x268] sm:$0xff]
    %v515 = vld [vmem:[#allocation8 + $0x270] sm:$0xff]
    %v516 = vld [vmem:[#allocation8 + $0x278] sm:$0xff]
    %v517 = vld [vmem:[#allocation8 + $0x280] sm:$0xff]
    %v518 = vld [vmem:[#allocation8 + $0x288] sm:$0xff]
    %v519 = vld [vmem:[#allocation8 + $0x290] sm:$0xff]
    %v520 = vld [vmem:[#allocation8 + $0x298] sm:$0xff]
    %v521 = vld [vmem:[#allocation8 + $0x2a0] sm:$0xff]
    %v522 = vld [vmem:[#allocation8 + $0x2a8] sm:$0xff]
    %v523 = vld [vmem:[#allocation8 + $0x2b0] sm:$0xff]
    %v524 = vld [vmem:[#allocation8 + $0x2b8] sm:$0xff]
    %v525 = vld [vmem:[#allocation8 + $0x2c0] sm:$0xff]
    %v526 = vld [vmem:[#allocation8 + $0x2c8] sm:$0xff]
    %v527 = vld [vmem:[#allocation8 + $0x2d0] sm:$0xff]
    %v528 = vld [vmem:[#allocation8 + $0x2d8] sm:$0xff]
    %v529 = vld [vmem:[#allocation8 + $0x2e0] sm:$0xff]
    %v530 = vld [vmem:[#allocation8 + $0x2e8] sm:$0xff]
    %v531 = vld [vmem:[#allocation8 + $0x2f0] sm:$0xff]
    %v532 = vld [vmem:[#allocation8 + $0x2f8] sm:$0xff]
    %v533 = vld [vmem:[#allocation8 + $0x300] sm:$0xff]
    %v534 = vld [vmem:[#allocation8 + $0x308] sm:$0xff]
    %v535 = vld [vmem:[#allocation8 + $0x310] sm:$0xff]
    %v536 = vld [vmem:[#allocation8 + $0x318] sm:$0xff]
    %v537 = vld [vmem:[#allocation8 + $0x320] sm:$0xff]
    %v538 = vld [vmem:[#allocation8 + $0x328] sm:$0xff]
    %v539 = vld [vmem:[#allocation8 + $0x330] sm:$0xff]
    %v540 = vld [vmem:[#allocation8 + $0x338] sm:$0xff]
    %v541 = vld [vmem:[#allocation8 + $0x340] sm:$0xff]
    %v542 = vld [vmem:[#allocation8 + $0x348] sm:$0xff]
    %v543 = vld [vmem:[#allocation8 + $0x350] sm:$0xff]
    %v544 = vld [vmem:[#allocation8 + $0x358] sm:$0xff]
    %v545 = vld [vmem:[#allocation8 + $0x360] sm:$0xff]
    %v546 = vld [vmem:[#allocation8 + $0x368] sm:$0xff]
    %v547 = vld [vmem:[#allocation8 + $0x370] sm:$0xff]
    %v548 = vld [vmem:[#allocation8 + $0x378] sm:$0xff]
    %v549 = vld [vmem:[#allocation8 + $0x380] sm:$0xff]
    %v550 = vld [vmem:[#allocation8 + $0x388] sm:$0xff]
    %v551 = vld [vmem:[#allocation8 + $0x390] sm:$0xff]
    %v552 = vld [vmem:[#allocation8 + $0x398] sm:$0xff]
    %v553 = vld [vmem:[#allocation8 + $0x3a0] sm:$0xff]
    %v554 = vld [vmem:[#allocation8 + $0x3a8] sm:$0xff]
    %v555 = vld [vmem:[#allocation8 + $0x3b0] sm:$0xff]
    %v556 = vld [vmem:[#allocation8 + $0x3b8] sm:$0xff]
    %v557 = vld [vmem:[#allocation8 + $0x3c0] sm:$0xff]
    %v558 = vld [vmem:[#allocation8 + $0x3c8] sm:$0xff]
    %v559 = vld [vmem:[#allocation8 + $0x3d0] sm:$0xff]
    %v560 = vld [vmem:[#allocation8 + $0x3d8] sm:$0xff]
    %v561 = vld [vmem:[#allocation8 + $0x3e0] sm:$0xff]
    %v562 = vld [vmem:[#allocation8 + $0x3e8] sm:$0xff]
    %v563 = vld [vmem:[#allocation8 + $0x3f0] sm:$0xff]
    %v564 = vld [vmem:[#allocation8 + $0x3f8] sm:$0xff]
    %v565 = vld [vmem:[#allocation8 + $0x400] sm:$0xff]
    %v566 = vld [vmem:[#allocation8 + $0x408] sm:$0xff]
    %v567 = vld [vmem:[#allocation8 + $0x410] sm:$0xff]
    %v568 = vld [vmem:[#allocation8 + $0x418] sm:$0xff]
    %v569 = vld [vmem:[#allocation8 + $0x420] sm:$0xff]
    %v570 = vld [vmem:[#allocation8 + $0x428] sm:$0xff]
    %v571 = vld [vmem:[#allocation8 + $0x430] sm:$0xff]
    %v572 = vld [vmem:[#allocation8 + $0x438] sm:$0xff]
    %v573 = vld [vmem:[#allocation8 + $0x440] sm:$0xff]
    %v574 = vld [vmem:[#allocation8 + $0x448] sm:$0xff]
    %v575 = vld [vmem:[#allocation8 + $0x450] sm:$0xff]
    %v576 = vld [vmem:[#allocation8 + $0x458] sm:$0xff]
    %v577 = vld [vmem:[#allocation8 + $0x460] sm:$0xff]
    %v578 = vld [vmem:[#allocation8 + $0x468] sm:$0xff]
    %v579 = vld [vmem:[#allocation8 + $0x470] sm:$0xff]
    %v580 = vld [vmem:[#allocation8 + $0x478] sm:$0xff]
    %v581 = vld [vmem:[#allocation8 + $0x480] sm:$0xff]
    %v582 = vld [vmem:[#allocation8 + $0x488] sm:$0xff]
    %v583 = vld [vmem:[#allocation8 + $0x490] sm:$0xff]
    %v584 = vld [vmem:[#allocation8 + $0x498] sm:$0xff]
    %v585 = vld [vmem:[#allocation8 + $0x4a0] sm:$0xff]
    %v586 = vld [vmem:[#allocation8 + $0x4a8] sm:$0xff]
    %v587 = vld [vmem:[#allocation8 + $0x4b0] sm:$0xff]
    %v588 = vld [vmem:[#allocation8 + $0x4b8] sm:$0xff]
    %v589 = vld [vmem:[#allocation8 + $0x4c0] sm:$0xff]
    %v590 = vld [vmem:[#allocation8 + $0x4c8] sm:$0xff]
    %v591 = vld [vmem:[#allocation8 + $0x4d0] sm:$0xff]
    %v592 = vld [vmem:[#allocation8 + $0x4d8] sm:$0xff]
    %v593 = vld [vmem:[#allocation8 + $0x4e0] sm:$0xff]
    %v594 = vld [vmem:[#allocation8 + $0x4e8] sm:$0xff]
    %v595 = vld [vmem:[#allocation8 + $0x4f0] sm:$0xff]
    %v596 = vld [vmem:[#allocation8 + $0x4f8] sm:$0xff]
    %v597 = vld [vmem:[#allocation8 + $0x500] sm:$0xff]
    %v598 = vld [vmem:[#allocation8 + $0x508] sm:$0xff]
    %v599 = vld [vmem:[#allocation8 + $0x510] sm:$0xff]
    %v600 = vld [vmem:[#allocation8 + $0x518] sm:$0xff]
    %v601 = vld [vmem:[#allocation8 + $0x520] sm:$0xff]
    %v602 = vld [vmem:[#allocation8 + $0x528] sm:$0xff]
    %v603 = vld [vmem:[#allocation8 + $0x530] sm:$0xff]
    %v604 = vld [vmem:[#allocation8 + $0x538] sm:$0xff]
    %v605 = vld [vmem:[#allocation8 + $0x540] sm:$0xff]
    %v606 = vld [vmem:[#allocation8 + $0x548] sm:$0xff]
    %v607 = vld [vmem:[#allocation8 + $0x550] sm:$0xff]
    %v608 = vld [vmem:[#allocation8 + $0x558] sm:$0xff]
    %v609 = vld [vmem:[#allocation8 + $0x560] sm:$0xff]
    %v610 = vld [vmem:[#allocation8 + $0x568] sm:$0xff]
    %v611 = vld [vmem:[#allocation8 + $0x570] sm:$0xff]
    %v612 = vld [vmem:[#allocation8 + $0x578] sm:$0xff]
    %v613 = vld [vmem:[#allocation8 + $0x580] sm:$0xff]
    %v614 = vld [vmem:[#allocation8 + $0x588] sm:$0xff]
    %v615 = vld [vmem:[#allocation8 + $0x590] sm:$0xff]
    %v616 = vld [vmem:[#allocation8 + $0x598] sm:$0xff]
    %v617 = vld [vmem:[#allocation8 + $0x5a0] sm:$0xff]
    %v618 = vld [vmem:[#allocation8 + $0x5a8] sm:$0xff]
    %v619 = vld [vmem:[#allocation8 + $0x5b0] sm:$0xff]
    %v620 = vld [vmem:[#allocation8 + $0x5b8] sm:$0xff]
    %v621 = vld [vmem:[#allocation8 + $0x5c0] sm:$0xff]
    %v622 = vld [vmem:[#allocation8 + $0x5c8] sm:$0xff]
    %v623 = vld [vmem:[#allocation8 + $0x5d0] sm:$0xff]
    %v624 = vld [vmem:[#allocation8 + $0x5d8] sm:$0xff]
    %v625 = vld [vmem:[#allocation8 + $0x5e0] sm:$0xff]
    %v626 = vld [vmem:[#allocation8 + $0x5e8] sm:$0xff]
    %v627 = vld [vmem:[#allocation8 + $0x5f0] sm:$0xff]
    %v628 = vld [vmem:[#allocation8 + $0x5f8] sm:$0xff]
    %v629 = vld [vmem:[#allocation8 + $0x600] sm:$0xff]
    %v630 = vld [vmem:[#allocation8 + $0x608] sm:$0xff]
    %v631 = vld [vmem:[#allocation8 + $0x610] sm:$0xff]
    %v632 = vld [vmem:[#allocation8 + $0x618] sm:$0xff]
    %v633 = vld [vmem:[#allocation8 + $0x620] sm:$0xff]
    %v634 = vld [vmem:[#allocation8 + $0x628] sm:$0xff]
    %v635 = vld [vmem:[#allocation8 + $0x630] sm:$0xff]
    %v636 = vld [vmem:[#allocation8 + $0x638] sm:$0xff]
    %v637 = vld [vmem:[#allocation8 + $0x640] sm:$0xff]
    %v638 = vld [vmem:[#allocation8 + $0x648] sm:$0xff]
    %v639 = vld [vmem:[#allocation8 + $0x650] sm:$0xff]
    %v640 = vld [vmem:[#allocation8 + $0x658] sm:$0xff]
    %v641 = vld [vmem:[#allocation8 + $0x660] sm:$0xff]
    %v642 = vld [vmem:[#allocation8 + $0x668] sm:$0xff]
    %v643 = vld [vmem:[#allocation8 + $0x670] sm:$0xff]
    %v644 = vld [vmem:[#allocation8 + $0x678] sm:$0xff]
    %v645 = vld [vmem:[#allocation8 + $0x680] sm:$0xff]
    %v646 = vld [vmem:[#allocation8 + $0x688] sm:$0xff]
    %v647 = vld [vmem:[#allocation8 + $0x690] sm:$0xff]
    %v648 = vld [vmem:[#allocation8 + $0x698] sm:$0xff]
    %v649 = vld [vmem:[#allocation8 + $0x6a0] sm:$0xff]
    %v650 = vld [vmem:[#allocation8 + $0x6a8] sm:$0xff]
    %v651 = vld [vmem:[#allocation8 + $0x6b0] sm:$0xff]
    %v652 = vld [vmem:[#allocation8 + $0x6b8] sm:$0xff]
    %v653 = vld [vmem:[#allocation8 + $0x6c0] sm:$0xff]
    %v654 = vld [vmem:[#allocation8 + $0x6c8] sm:$0xff]
    %v655 = vld [vmem:[#allocation8 + $0x6d0] sm:$0xff]
    %v656 = vld [vmem:[#allocation8 + $0x6d8] sm:$0xff]
    %v657 = vld [vmem:[#allocation8 + $0x6e0] sm:$0xff]
    %v658 = vld [vmem:[#allocation8 + $0x6e8] sm:$0xff]
    %v659 = vld [vmem:[#allocation8 + $0x6f0] sm:$0xff]
    %v660 = vld [vmem:[#allocation8 + $0x6f8] sm:$0xff]
    %v661 = vld [vmem:[#allocation8 + $0x700] sm:$0xff]
    %v662 = vld [vmem:[#allocation8 + $0x708] sm:$0xff]
    %v663 = vld [vmem:[#allocation8 + $0x710] sm:$0xff]
    %v664 = vld [vmem:[#allocation8 + $0x718] sm:$0xff]
    %v665 = vld [vmem:[#allocation8 + $0x720] sm:$0xff]
    %v666 = vld [vmem:[#allocation8 + $0x728] sm:$0xff]
    %v667 = vld [vmem:[#allocation8 + $0x730] sm:$0xff]
    %v668 = vld [vmem:[#allocation8 + $0x738] sm:$0xff]
    %v669 = vld [vmem:[#allocation8 + $0x740] sm:$0xff]
    %v670 = vld [vmem:[#allocation8 + $0x748] sm:$0xff]
    %v671 = vld [vmem:[#allocation8 + $0x750] sm:$0xff]
    %v672 = vld [vmem:[#allocation8 + $0x758] sm:$0xff]
    %v673 = vld [vmem:[#allocation8 + $0x760] sm:$0xff]
    %v674 = vld [vmem:[#allocation8 + $0x768] sm:$0xff]
    %v675 = vld [vmem:[#allocation8 + $0x770] sm:$0xff]
    %v676 = vld [vmem:[#allocation8 + $0x778] sm:$0xff]
    %v677 = vld [vmem:[#allocation8 + $0x780] sm:$0xff]
    %v678 = vld [vmem:[#allocation8 + $0x788] sm:$0xff]
    %v679 = vld [vmem:[#allocation8 + $0x790] sm:$0xff]
    %v680 = vld [vmem:[#allocation8 + $0x798] sm:$0xff]
    %v681 = vld [vmem:[#allocation8 + $0x7a0] sm:$0xff]
    %v682 = vld [vmem:[#allocation8 + $0x7a8] sm:$0xff]
    %v683 = vld [vmem:[#allocation8 + $0x7b0] sm:$0xff]
    %v684 = vld [vmem:[#allocation8 + $0x7b8] sm:$0xff]
    %v685 = vld [vmem:[#allocation8 + $0x7c0] sm:$0xff]
    %v686 = vld [vmem:[#allocation8 + $0x7c8] sm:$0xff]
    %v687 = vld [vmem:[#allocation8 + $0x7d0] sm:$0xff]
    %v688 = vld [vmem:[#allocation8 + $0x7d8] sm:$0xff]
    %v689 = vld [vmem:[#allocation8 + $0x7e0] sm:$0xff]
    %v690 = vld [vmem:[#allocation8 + $0x7e8] sm:$0xff]
    %v691 = vld [vmem:[#allocation8 + $0x7f0] sm:$0xff]
    %v692 = vld [vmem:[#allocation8 + $0x7f8] sm:$0xff]
    %v693 = vld [vmem:[#allocation8 + $0x800] sm:$0xff]
    %v694 = vld [vmem:[#allocation8 + $0x808] sm:$0xff]
    %v695 = vld [vmem:[#allocation8 + $0x810] sm:$0xff]
    %v696 = vld [vmem:[#allocation8 + $0x818] sm:$0xff]
    %v697 = vld [vmem:[#allocation8 + $0x820] sm:$0xff]
    %v698 = vld [vmem:[#allocation8 + $0x828] sm:$0xff]
    %v699 = vld [vmem:[#allocation8 + $0x830] sm:$0xff]
    %v700 = vld [vmem:[#allocation8 + $0x838] sm:$0xff]
    %v701 = vld [vmem:[#allocation8 + $0x840] sm:$0xff]
    %v702 = vld [vmem:[#allocation8 + $0x848] sm:$0xff]
    %v703 = vld [vmem:[#allocation8 + $0x850] sm:$0xff]
    %v704 = vld [vmem:[#allocation8 + $0x858] sm:$0xff]
    %v705 = vld [vmem:[#allocation8 + $0x860] sm:$0xff]
    %v706 = vld [vmem:[#allocation8 + $0x868] sm:$0xff]
    %v707 = vld [vmem:[#allocation8 + $0x870] sm:$0xff]
    %v708 = vld [vmem:[#allocation8 + $0x878] sm:$0xff]
    %v709 = vld [vmem:[#allocation8 + $0x880] sm:$0xff]
    %v710 = vld [vmem:[#allocation8 + $0x888] sm:$0xff]
    %v711 = vld [vmem:[#allocation8 + $0x890] sm:$0xff]
    %v712 = vld [vmem:[#allocation8 + $0x898] sm:$0xff]
    %v713 = vld [vmem:[#allocation8 + $0x8a0] sm:$0xff]
    %v714 = vld [vmem:[#allocation8 + $0x8a8] sm:$0xff]
    %v715 = vld [vmem:[#allocation8 + $0x8b0] sm:$0xff]
    %v716 = vld [vmem:[#allocation8 + $0x8b8] sm:$0xff]
    %v717 = vld [vmem:[#allocation8 + $0x8c0] sm:$0xff]
    %v718 = vld [vmem:[#allocation8 + $0x8c8] sm:$0xff]
    %v719 = vld [vmem:[#allocation8 + $0x8d0] sm:$0xff]
    %v720 = vld [vmem:[#allocation8 + $0x8d8] sm:$0xff]
    %v721 = vld [vmem:[#allocation8 + $0x8e0] sm:$0xff]
    %v722 = vld [vmem:[#allocation8 + $0x8e8] sm:$0xff]
    %v723 = vld [vmem:[#allocation8 + $0x8f0] sm:$0xff]
    %v724 = vld [vmem:[#allocation8 + $0x8f8] sm:$0xff]
    %v725 = vld [vmem:[#allocation8 + $0x900] sm:$0xff]
    %v726 = vld [vmem:[#allocation8 + $0x908] sm:$0xff]
    %v727 = vld [vmem:[#allocation8 + $0x910] sm:$0xff]
    %v728 = vld [vmem:[#allocation8 + $0x918] sm:$0xff]
    %v729 = vld [vmem:[#allocation8 + $0x920] sm:$0xff]
    %v730 = vld [vmem:[#allocation8 + $0x928] sm:$0xff]
    %v731 = vld [vmem:[#allocation8 + $0x930] sm:$0xff]
    %v732 = vld [vmem:[#allocation8 + $0x938] sm:$0xff]
    %v733 = vld [vmem:[#allocation8 + $0x940] sm:$0xff]
    %v734 = vld [vmem:[#allocation8 + $0x948] sm:$0xff]
    %v735 = vld [vmem:[#allocation8 + $0x950] sm:$0xff]
    %v736 = vld [vmem:[#allocation8 + $0x958] sm:$0xff]
    %v737 = vld [vmem:[#allocation8 + $0x960] sm:$0xff]
    %v738 = vld [vmem:[#allocation8 + $0x968] sm:$0xff]
    %v739 = vld [vmem:[#allocation8 + $0x970] sm:$0xff]
    %v740 = vld [vmem:[#allocation8 + $0x978] sm:$0xff]
    %v741 = vld [vmem:[#allocation8 + $0x980] sm:$0xff]
    %v742 = vld [vmem:[#allocation8 + $0x988] sm:$0xff]
    %v743 = vld [vmem:[#allocation8 + $0x990] sm:$0xff]
    %v744 = vld [vmem:[#allocation8 + $0x998] sm:$0xff]
    %v745 = vld [vmem:[#allocation8 + $0x9a0] sm:$0xff]
    %v746 = vld [vmem:[#allocation8 + $0x9a8] sm:$0xff]
    %v747 = vld [vmem:[#allocation8 + $0x9b0] sm:$0xff]
    %v748 = vld [vmem:[#allocation8 + $0x9b8] sm:$0xff]
    %v749 = vld [vmem:[#allocation8 + $0x9c0] sm:$0xff]
    %v750 = vld [vmem:[#allocation8 + $0x9c8] sm:$0xff]
    %v751 = vld [vmem:[#allocation8 + $0x9d0] sm:$0xff]
    %v752 = vld [vmem:[#allocation8 + $0x9d8] sm:$0xff]
    %v753 = vld [vmem:[#allocation8 + $0x9e0] sm:$0xff]
    %v754 = vld [vmem:[#allocation8 + $0x9e8] sm:$0xff]
    %v755 = vld [vmem:[#allocation8 + $0x9f0] sm:$0xff]
    %v756 = vld [vmem:[#allocation8 + $0x9f8] sm:$0xff]
    %v757 = vld [vmem:[#allocation8 + $0xa00] sm:$0xff]
    %v758 = vld [vmem:[#allocation8 + $0xa08] sm:$0xff]
    %v759 = vld [vmem:[#allocation8 + $0xa10] sm:$0xff]
    %v760 = vld [vmem:[#allocation8 + $0xa18] sm:$0xff]
    %v761 = vld [vmem:[#allocation8 + $0xa20] sm:$0xff]
    %v762 = vld [vmem:[#allocation8 + $0xa28] sm:$0xff]
    %v763 = vld [vmem:[#allocation8 + $0xa30] sm:$0xff]
    %v764 = vld [vmem:[#allocation8 + $0xa38] sm:$0xff]
    %v765 = vld [vmem:[#allocation8 + $0xa40] sm:$0xff]
    %v766 = vld [vmem:[#allocation8 + $0xa48] sm:$0xff]
    %v767 = vld [vmem:[#allocation8 + $0xa50] sm:$0xff]
    %v768 = vld [vmem:[#allocation8 + $0xa58] sm:$0xff]
    %v769 = vld [vmem:[#allocation8 + $0xa60] sm:$0xff]
    %v770 = vld [vmem:[#allocation8 + $0xa68] sm:$0xff]
    %v771 = vld [vmem:[#allocation8 + $0xa70] sm:$0xff]
    %v772 = vld [vmem:[#allocation8 + $0xa78] sm:$0xff]
    %v773 = vld [vmem:[#allocation8 + $0xa80] sm:$0xff]
    %v774 = vld [vmem:[#allocation8 + $0xa88] sm:$0xff]
    %v775 = vld [vmem:[#allocation8 + $0xa90] sm:$0xff]
    %v776 = vld [vmem:[#allocation8 + $0xa98] sm:$0xff]
    %v777 = vld [vmem:[#allocation8 + $0xaa0] sm:$0xff]
    %v778 = vld [vmem:[#allocation8 + $0xaa8] sm:$0xff]
    %v779 = vld [vmem:[#allocation8 + $0xab0] sm:$0xff]
    %v780 = vld [vmem:[#allocation8 + $0xab8] sm:$0xff]
    %v781 = vld [vmem:[#allocation8 + $0xac0] sm:$0xff]
    %v782 = vld [vmem:[#allocation8 + $0xac8] sm:$0xff]
    %v783 = vld [vmem:[#allocation8 + $0xad0] sm:$0xff]
    %v784 = vld [vmem:[#allocation8 + $0xad8] sm:$0xff]
    %v785 = vld [vmem:[#allocation8 + $0xae0] sm:$0xff]
    %v786 = vld [vmem:[#allocation8 + $0xae8] sm:$0xff]
    %v787 = vld [vmem:[#allocation8 + $0xaf0] sm:$0xff]
    %v788 = vld [vmem:[#allocation8 + $0xaf8] sm:$0xff]
    %v789 = vld [vmem:[#allocation8 + $0xb00] sm:$0xff]
    %v790 = vld [vmem:[#allocation8 + $0xb08] sm:$0xff]
    %v791 = vld [vmem:[#allocation8 + $0xb10] sm:$0xff]
    %v792 = vld [vmem:[#allocation8 + $0xb18] sm:$0xff]
    %v793 = vld [vmem:[#allocation8 + $0xb20] sm:$0xff]
    %v794 = vld [vmem:[#allocation8 + $0xb28] sm:$0xff]
    %v795 = vld [vmem:[#allocation8 + $0xb30] sm:$0xff]
    %v796 = vld [vmem:[#allocation8 + $0xb38] sm:$0xff]
    %v797 = vld [vmem:[#allocation8 + $0xb40] sm:$0xff]
    %v798 = vld [vmem:[#allocation8 + $0xb48] sm:$0xff]
    %v799 = vld [vmem:[#allocation8 + $0xb50] sm:$0xff]
    %v800 = vld [vmem:[#allocation8 + $0xb58] sm:$0xff]
    %v801 = vld [vmem:[#allocation8 + $0xb60] sm:$0xff]
    %v802 = vld [vmem:[#allocation8 + $0xb68] sm:$0xff]
    %v803 = vld [vmem:[#allocation8 + $0xb70] sm:$0xff]
    %v804 = vld [vmem:[#allocation8 + $0xb78] sm:$0xff]
    %v805 = vld [vmem:[#allocation8 + $0xb80] sm:$0xff]
    %v806 = vld [vmem:[#allocation8 + $0xb88] sm:$0xff]
    %v807 = vld [vmem:[#allocation8 + $0xb90] sm:$0xff]
    %v808 = vld [vmem:[#allocation8 + $0xb98] sm:$0xff]
    %v809 = vld [vmem:[#allocation8 + $0xba0] sm:$0xff]
    %v810 = vld [vmem:[#allocation8 + $0xba8] sm:$0xff]
    %v811 = vld [vmem:[#allocation8 + $0xbb0] sm:$0xff]
    %v1187 = vunpack.c.l.b16 %v437
    %v1188 = vunpack.c.h.b16 %v437
    %v1189 = vunpack.c.l.b16 %v438
    %v1190 = vunpack.c.h.b16 %v438
    %v1191 = vunpack.c.l.b16 %v439
    %v1192 = vunpack.c.h.b16 %v439
    %v1193 = vunpack.c.l.b16 %v440
    %v1194 = vunpack.c.h.b16 %v440
    %v1195 = vunpack.c.l.b16 %v441
    %v1196 = vunpack.c.h.b16 %v441
    %v1197 = vunpack.c.l.b16 %v442
    %v1198 = vunpack.c.h.b16 %v442
    %v1199 = vunpack.c.l.b16 %v443
    %v1200 = vunpack.c.h.b16 %v443
    %v1201 = vunpack.c.l.b16 %v444
    %v1202 = vunpack.c.h.b16 %v444
    %v1203 = vunpack.c.l.b16 %v445
    %v1204 = vunpack.c.h.b16 %v445
    %v1205 = vunpack.c.l.b16 %v446
    %v1206 = vunpack.c.h.b16 %v446
    %v1207 = vunpack.c.l.b16 %v447
    %v1208 = vunpack.c.h.b16 %v447
    %v1209 = vunpack.c.l.b16 %v448
    %v1210 = vunpack.c.h.b16 %v448
    %v1211 = vunpack.c.l.b16 %v449
    %v1212 = vunpack.c.h.b16 %v449
    %v1213 = vunpack.c.l.b16 %v450
    %v1214 = vunpack.c.h.b16 %v450
    %v1215 = vunpack.c.l.b16 %v451
    %v1216 = vunpack.c.h.b16 %v451
    %v1217 = vunpack.c.l.b16 %v452
    %v1218 = vunpack.c.h.b16 %v452
    %v1219 = vunpack.c.l.b16 %v453
    %v1220 = vunpack.c.h.b16 %v453
    %v1221 = vunpack.c.l.b16 %v454
    %v1222 = vunpack.c.h.b16 %v454
    %v1223 = vunpack.c.l.b16 %v455
    %v1224 = vunpack.c.h.b16 %v455
    %v1225 = vunpack.c.l.b16 %v456
    %v1226 = vunpack.c.h.b16 %v456
    %v1227 = vunpack.c.l.b16 %v457
    %v1228 = vunpack.c.h.b16 %v457
    %v1229 = vunpack.c.l.b16 %v458
    %v1230 = vunpack.c.h.b16 %v458
    %v1231 = vunpack.c.l.b16 %v459
    %v1232 = vunpack.c.h.b16 %v459
    %v1233 = vunpack.c.l.b16 %v460
    %v1234 = vunpack.c.h.b16 %v460
    %v1235 = vunpack.c.l.b16 %v461
    %v1236 = vunpack.c.h.b16 %v461
    %v1237 = vunpack.c.l.b16 %v462
    %v1238 = vunpack.c.h.b16 %v462
    %v1239 = vunpack.c.l.b16 %v463
    %v1240 = vunpack.c.h.b16 %v463
    %v1241 = vunpack.c.l.b16 %v464
    %v1242 = vunpack.c.h.b16 %v464
    %v1243 = vunpack.c.l.b16 %v465
    %v1244 = vunpack.c.h.b16 %v465
    %v1245 = vunpack.c.l.b16 %v466
    %v1246 = vunpack.c.h.b16 %v466
    %v1247 = vunpack.c.l.b16 %v467
    %v1248 = vunpack.c.h.b16 %v467
    %v1249 = vunpack.c.l.b16 %v468
    %v1250 = vunpack.c.h.b16 %v468
    %v1251 = vunpack.c.l.b16 %v469
    %v1252 = vunpack.c.h.b16 %v469
    %v1253 = vunpack.c.l.b16 %v470
    %v1254 = vunpack.c.h.b16 %v470
    %v1255 = vunpack.c.l.b16 %v471
    %v1256 = vunpack.c.h.b16 %v471
    %v1257 = vunpack.c.l.b16 %v472
    %v1258 = vunpack.c.h.b16 %v472
    %v1259 = vunpack.c.l.b16 %v473
    %v1260 = vunpack.c.h.b16 %v473
    %v1261 = vunpack.c.l.b16 %v474
    %v1262 = vunpack.c.h.b16 %v474
    %v1263 = vunpack.c.l.b16 %v475
    %v1264 = vunpack.c.h.b16 %v475
    %v1265 = vunpack.c.l.b16 %v476
    %v1266 = vunpack.c.h.b16 %v476
    %v1267 = vunpack.c.l.b16 %v477
    %v1268 = vunpack.c.h.b16 %v477
    %v1269 = vunpack.c.l.b16 %v478
    %v1270 = vunpack.c.h.b16 %v478
    %v1271 = vunpack.c.l.b16 %v479
    %v1272 = vunpack.c.h.b16 %v479
    %v1273 = vunpack.c.l.b16 %v480
    %v1274 = vunpack.c.h.b16 %v480
    %v1275 = vunpack.c.l.b16 %v481
    %v1276 = vunpack.c.h.b16 %v481
    %v1277 = vunpack.c.l.b16 %v482
    %v1278 = vunpack.c.h.b16 %v482
    %v1279 = vunpack.c.l.b16 %v483
    %v1280 = vunpack.c.h.b16 %v483
    %v1281 = vunpack.c.l.b16 %v484
    %v1282 = vunpack.c.h.b16 %v484
    %v1283 = vunpack.c.l.b16 %v485
    %v1284 = vunpack.c.h.b16 %v485
    %v1285 = vunpack.c.l.b16 %v486
    %v1286 = vunpack.c.h.b16 %v486
    %v1287 = vunpack.c.l.b16 %v487
    %v1288 = vunpack.c.h.b16 %v487
    %v1289 = vunpack.c.l.b16 %v488
    %v1290 = vunpack.c.h.b16 %v488
    %v1291 = vunpack.c.l.b16 %v489
    %v1292 = vunpack.c.h.b16 %v489
    %v1293 = vunpack.c.l.b16 %v490
    %v1294 = vunpack.c.h.b16 %v490
    %v1295 = vunpack.c.l.b16 %v491
    %v1296 = vunpack.c.h.b16 %v491
    %v1297 = vunpack.c.l.b16 %v492
    %v1298 = vunpack.c.h.b16 %v492
    %v1299 = vunpack.c.l.b16 %v493
    %v1300 = vunpack.c.h.b16 %v493
    %v1301 = vunpack.c.l.b16 %v494
    %v1302 = vunpack.c.h.b16 %v494
    %v1303 = vunpack.c.l.b16 %v495
    %v1304 = vunpack.c.h.b16 %v495
    %v1305 = vunpack.c.l.b16 %v496
    %v1306 = vunpack.c.h.b16 %v496
    %v1307 = vunpack.c.l.b16 %v497
    %v1308 = vunpack.c.h.b16 %v497
    %v1309 = vunpack.c.l.b16 %v498
    %v1310 = vunpack.c.h.b16 %v498
    %v1311 = vunpack.c.l.b16 %v499
    %v1312 = vunpack.c.h.b16 %v499
    %v1313 = vunpack.c.l.b16 %v500
    %v1314 = vunpack.c.h.b16 %v500
    %v1315 = vunpack.c.l.b16 %v501
    %v1316 = vunpack.c.h.b16 %v501
    %v1317 = vunpack.c.l.b16 %v502
    %v1318 = vunpack.c.h.b16 %v502
    %v1319 = vunpack.c.l.b16 %v503
    %v1320 = vunpack.c.h.b16 %v503
    %v1321 = vunpack.c.l.b16 %v504
    %v1322 = vunpack.c.h.b16 %v504
    %v1323 = vunpack.c.l.b16 %v505
    %v1324 = vunpack.c.h.b16 %v505
    %v1325 = vunpack.c.l.b16 %v506
    %v1326 = vunpack.c.h.b16 %v506
    %v1327 = vunpack.c.l.b16 %v507
    %v1328 = vunpack.c.h.b16 %v507
    %v1329 = vunpack.c.l.b16 %v508
    %v1330 = vunpack.c.h.b16 %v508
    %v1331 = vunpack.c.l.b16 %v509
    %v1332 = vunpack.c.h.b16 %v509
    %v1333 = vunpack.c.l.b16 %v510
    %v1334 = vunpack.c.h.b16 %v510
    %v1335 = vunpack.c.l.b16 %v511
    %v1336 = vunpack.c.h.b16 %v511
    %v1337 = vunpack.c.l.b16 %v512
    %v1338 = vunpack.c.h.b16 %v512
    %v1339 = vunpack.c.l.b16 %v513
    %v1340 = vunpack.c.h.b16 %v513
    %v1341 = vunpack.c.l.b16 %v514
    %v1342 = vunpack.c.h.b16 %v514
    %v1343 = vunpack.c.l.b16 %v515
    %v1344 = vunpack.c.h.b16 %v515
    %v1345 = vunpack.c.l.b16 %v516
    %v1346 = vunpack.c.h.b16 %v516
    %v1347 = vunpack.c.l.b16 %v517
    %v1348 = vunpack.c.h.b16 %v517
    %v1349 = vunpack.c.l.b16 %v518
    %v1350 = vunpack.c.h.b16 %v518
    %v1351 = vunpack.c.l.b16 %v519
    %v1352 = vunpack.c.h.b16 %v519
    %v1353 = vunpack.c.l.b16 %v520
    %v1354 = vunpack.c.h.b16 %v520
    %v1355 = vunpack.c.l.b16 %v521
    %v1356 = vunpack.c.h.b16 %v521
    %v1357 = vunpack.c.l.b16 %v522
    %v1358 = vunpack.c.h.b16 %v522
    %v1359 = vunpack.c.l.b16 %v523
    %v1360 = vunpack.c.h.b16 %v523
    %v1361 = vunpack.c.l.b16 %v524
    %v1362 = vunpack.c.h.b16 %v524
    %v1363 = vunpack.c.l.b16 %v525
    %v1364 = vunpack.c.h.b16 %v525
    %v1365 = vunpack.c.l.b16 %v526
    %v1366 = vunpack.c.h.b16 %v526
    %v1367 = vunpack.c.l.b16 %v527
    %v1368 = vunpack.c.h.b16 %v527
    %v1369 = vunpack.c.l.b16 %v528
    %v1370 = vunpack.c.h.b16 %v528
    %v1371 = vunpack.c.l.b16 %v529
    %v1372 = vunpack.c.h.b16 %v529
    %v1373 = vunpack.c.l.b16 %v530
    %v1374 = vunpack.c.h.b16 %v530
    %v1375 = vunpack.c.l.b16 %v531
    %v1376 = vunpack.c.h.b16 %v531
    %v1377 = vunpack.c.l.b16 %v532
    %v1378 = vunpack.c.h.b16 %v532
    %v1379 = vunpack.c.l.b16 %v533
    %v1380 = vunpack.c.h.b16 %v533
    %v1381 = vunpack.c.l.b16 %v534
    %v1382 = vunpack.c.h.b16 %v534
    %v1383 = vunpack.c.l.b16 %v535
    %v1384 = vunpack.c.h.b16 %v535
    %v1385 = vunpack.c.l.b16 %v536
    %v1386 = vunpack.c.h.b16 %v536
    %v1387 = vunpack.c.l.b16 %v537
    %v1388 = vunpack.c.h.b16 %v537
    %v1389 = vunpack.c.l.b16 %v538
    %v1390 = vunpack.c.h.b16 %v538
    %v1391 = vunpack.c.l.b16 %v539
    %v1392 = vunpack.c.h.b16 %v539
    %v1393 = vunpack.c.l.b16 %v540
    %v1394 = vunpack.c.h.b16 %v540
    %v1395 = vunpack.c.l.b16 %v541
    %v1396 = vunpack.c.h.b16 %v541
    %v1397 = vunpack.c.l.b16 %v542
    %v1398 = vunpack.c.h.b16 %v542
    %v1399 = vunpack.c.l.b16 %v543
    %v1400 = vunpack.c.h.b16 %v543
    %v1401 = vunpack.c.l.b16 %v544
    %v1402 = vunpack.c.h.b16 %v544
    %v1403 = vunpack.c.l.b16 %v545
    %v1404 = vunpack.c.h.b16 %v545
    %v1405 = vunpack.c.l.b16 %v546
    %v1406 = vunpack.c.h.b16 %v546
    %v1407 = vunpack.c.l.b16 %v547
    %v1408 = vunpack.c.h.b16 %v547
    %v1409 = vunpack.c.l.b16 %v548
    %v1410 = vunpack.c.h.b16 %v548
    %v1411 = vunpack.c.l.b16 %v549
    %v1412 = vunpack.c.h.b16 %v549
    %v1413 = vunpack.c.l.b16 %v550
    %v1414 = vunpack.c.h.b16 %v550
    %v1415 = vunpack.c.l.b16 %v551
    %v1416 = vunpack.c.h.b16 %v551
    %v1417 = vunpack.c.l.b16 %v552
    %v1418 = vunpack.c.h.b16 %v552
    %v1419 = vunpack.c.l.b16 %v553
    %v1420 = vunpack.c.h.b16 %v553
    %v1421 = vunpack.c.l.b16 %v554
    %v1422 = vunpack.c.h.b16 %v554
    %v1423 = vunpack.c.l.b16 %v555
    %v1424 = vunpack.c.h.b16 %v555
    %v1425 = vunpack.c.l.b16 %v556
    %v1426 = vunpack.c.h.b16 %v556
    %v1427 = vunpack.c.l.b16 %v557
    %v1428 = vunpack.c.h.b16 %v557
    %v1429 = vunpack.c.l.b16 %v558
    %v1430 = vunpack.c.h.b16 %v558
    %v1431 = vunpack.c.l.b16 %v559
    %v1432 = vunpack.c.h.b16 %v559
    %v1433 = vunpack.c.l.b16 %v560
    %v1434 = vunpack.c.h.b16 %v560
    %v1435 = vunpack.c.l.b16 %v561
    %v1436 = vunpack.c.h.b16 %v561
    %v1437 = vunpack.c.l.b16 %v562
    %v1438 = vunpack.c.h.b16 %v562
    %v1439 = vunpack.c.l.b16 %v563
    %v1440 = vunpack.c.h.b16 %v563
    %v1441 = vunpack.c.l.b16 %v564
    %v1442 = vunpack.c.h.b16 %v564
    %v1443 = vunpack.c.l.b16 %v565
    %v1444 = vunpack.c.h.b16 %v565
    %v1445 = vunpack.c.l.b16 %v566
    %v1446 = vunpack.c.h.b16 %v566
    %v1447 = vunpack.c.l.b16 %v567
    %v1448 = vunpack.c.h.b16 %v567
    %v1449 = vunpack.c.l.b16 %v568
    %v1450 = vunpack.c.h.b16 %v568
    %v1451 = vunpack.c.l.b16 %v569
    %v1452 = vunpack.c.h.b16 %v569
    %v1453 = vunpack.c.l.b16 %v570
    %v1454 = vunpack.c.h.b16 %v570
    %v1455 = vunpack.c.l.b16 %v571
    %v1456 = vunpack.c.h.b16 %v571
    %v1457 = vunpack.c.l.b16 %v572
    %v1458 = vunpack.c.h.b16 %v572
    %v1459 = vunpack.c.l.b16 %v573
    %v1460 = vunpack.c.h.b16 %v573
    %v1461 = vunpack.c.l.b16 %v574
    %v1462 = vunpack.c.h.b16 %v574
    %v1463 = vunpack.c.l.b16 %v575
    %v1464 = vunpack.c.h.b16 %v575
    %v1465 = vunpack.c.l.b16 %v576
    %v1466 = vunpack.c.h.b16 %v576
    %v1467 = vunpack.c.l.b16 %v577
    %v1468 = vunpack.c.h.b16 %v577
    %v1469 = vunpack.c.l.b16 %v578
    %v1470 = vunpack.c.h.b16 %v578
    %v1471 = vunpack.c.l.b16 %v579
    %v1472 = vunpack.c.h.b16 %v579
    %v1473 = vunpack.c.l.b16 %v580
    %v1474 = vunpack.c.h.b16 %v580
    %v1475 = vunpack.c.l.b16 %v581
    %v1476 = vunpack.c.h.b16 %v581
    %v1477 = vunpack.c.l.b16 %v582
    %v1478 = vunpack.c.h.b16 %v582
    %v1479 = vunpack.c.l.b16 %v583
    %v1480 = vunpack.c.h.b16 %v583
    %v1481 = vunpack.c.l.b16 %v584
    %v1482 = vunpack.c.h.b16 %v584
    %v1483 = vunpack.c.l.b16 %v585
    %v1484 = vunpack.c.h.b16 %v585
    %v1485 = vunpack.c.l.b16 %v586
    %v1486 = vunpack.c.h.b16 %v586
    %v1487 = vunpack.c.l.b16 %v587
    %v1488 = vunpack.c.h.b16 %v587
    %v1489 = vunpack.c.l.b16 %v588
    %v1490 = vunpack.c.h.b16 %v588
    %v1491 = vunpack.c.l.b16 %v589
    %v1492 = vunpack.c.h.b16 %v589
    %v1493 = vunpack.c.l.b16 %v590
    %v1494 = vunpack.c.h.b16 %v590
    %v1495 = vunpack.c.l.b16 %v591
    %v1496 = vunpack.c.h.b16 %v591
    %v1497 = vunpack.c.l.b16 %v592
    %v1498 = vunpack.c.h.b16 %v592
    %v1499 = vunpack.c.l.b16 %v593
    %v1500 = vunpack.c.h.b16 %v593
    %v1501 = vunpack.c.l.b16 %v594
    %v1502 = vunpack.c.h.b16 %v594
    %v1503 = vunpack.c.l.b16 %v595
    %v1504 = vunpack.c.h.b16 %v595
    %v1505 = vunpack.c.l.b16 %v596
    %v1506 = vunpack.c.h.b16 %v596
    %v1507 = vunpack.c.l.b16 %v597
    %v1508 = vunpack.c.h.b16 %v597
    %v1509 = vunpack.c.l.b16 %v598
    %v1510 = vunpack.c.h.b16 %v598
    %v1511 = vunpack.c.l.b16 %v599
    %v1512 = vunpack.c.h.b16 %v599
    %v1513 = vunpack.c.l.b16 %v600
    %v1514 = vunpack.c.h.b16 %v600
    %v1515 = vunpack.c.l.b16 %v601
    %v1516 = vunpack.c.h.b16 %v601
    %v1517 = vunpack.c.l.b16 %v602
    %v1518 = vunpack.c.h.b16 %v602
    %v1519 = vunpack.c.l.b16 %v603
    %v1520 = vunpack.c.h.b16 %v603
    %v1521 = vunpack.c.l.b16 %v604
    %v1522 = vunpack.c.h.b16 %v604
    %v1523 = vunpack.c.l.b16 %v605
    %v1524 = vunpack.c.h.b16 %v605
    %v1525 = vunpack.c.l.b16 %v606
    %v1526 = vunpack.c.h.b16 %v606
    %v1527 = vunpack.c.l.b16 %v607
    %v1528 = vunpack.c.h.b16 %v607
    %v1529 = vunpack.c.l.b16 %v608
    %v1530 = vunpack.c.h.b16 %v608
    %v1531 = vunpack.c.l.b16 %v609
    %v1532 = vunpack.c.h.b16 %v609
    %v1533 = vunpack.c.l.b16 %v610
    %v1534 = vunpack.c.h.b16 %v610
    %v1535 = vunpack.c.l.b16 %v611
    %v1536 = vunpack.c.h.b16 %v611
    %v1537 = vunpack.c.l.b16 %v612
    %v1538 = vunpack.c.h.b16 %v612
    %v1539 = vunpack.c.l.b16 %v613
    %v1540 = vunpack.c.h.b16 %v613
    %v1541 = vunpack.c.l.b16 %v614
    %v1542 = vunpack.c.h.b16 %v614
    %v1543 = vunpack.c.l.b16 %v615
    %v1544 = vunpack.c.h.b16 %v615
    %v1545 = vunpack.c.l.b16 %v616
    %v1546 = vunpack.c.h.b16 %v616
    %v1547 = vunpack.c.l.b16 %v617
    %v1548 = vunpack.c.h.b16 %v617
    %v1549 = vunpack.c.l.b16 %v618
    %v1550 = vunpack.c.h.b16 %v618
    %v1551 = vunpack.c.l.b16 %v619
    %v1552 = vunpack.c.h.b16 %v619
    %v1553 = vunpack.c.l.b16 %v620
    %v1554 = vunpack.c.h.b16 %v620
    %v1555 = vunpack.c.l.b16 %v621
    %v1556 = vunpack.c.h.b16 %v621
    %v1557 = vunpack.c.l.b16 %v622
    %v1558 = vunpack.c.h.b16 %v622
    %v1559 = vunpack.c.l.b16 %v623
    %v1560 = vunpack.c.h.b16 %v623
    %v1561 = vunpack.c.l.b16 %v624
    %v1562 = vunpack.c.h.b16 %v624
    %v1563 = vunpack.c.l.b16 %v625
    %v1564 = vunpack.c.h.b16 %v625
    %v1565 = vunpack.c.l.b16 %v626
    %v1566 = vunpack.c.h.b16 %v626
    %v1567 = vunpack.c.l.b16 %v627
    %v1568 = vunpack.c.h.b16 %v627
    %v1569 = vunpack.c.l.b16 %v628
    %v1570 = vunpack.c.h.b16 %v628
    %v1571 = vunpack.c.l.b16 %v629
    %v1572 = vunpack.c.h.b16 %v629
    %v1573 = vunpack.c.l.b16 %v630
    %v1574 = vunpack.c.h.b16 %v630
    %v1575 = vunpack.c.l.b16 %v631
    %v1576 = vunpack.c.h.b16 %v631
    %v1577 = vunpack.c.l.b16 %v632
    %v1578 = vunpack.c.h.b16 %v632
    %v1579 = vunpack.c.l.b16 %v633
    %v1580 = vunpack.c.h.b16 %v633
    %v1581 = vunpack.c.l.b16 %v634
    %v1582 = vunpack.c.h.b16 %v634
    %v1583 = vunpack.c.l.b16 %v635
    %v1584 = vunpack.c.h.b16 %v635
    %v1585 = vunpack.c.l.b16 %v636
    %v1586 = vunpack.c.h.b16 %v636
    %v1587 = vunpack.c.l.b16 %v637
    %v1588 = vunpack.c.h.b16 %v637
    %v1589 = vunpack.c.l.b16 %v638
    %v1590 = vunpack.c.h.b16 %v638
    %v1591 = vunpack.c.l.b16 %v639
    %v1592 = vunpack.c.h.b16 %v639
    %v1593 = vunpack.c.l.b16 %v640
    %v1594 = vunpack.c.h.b16 %v640
    %v1595 = vunpack.c.l.b16 %v641
    %v1596 = vunpack.c.h.b16 %v641
    %v1597 = vunpack.c.l.b16 %v642
    %v1598 = vunpack.c.h.b16 %v642
    %v1599 = vunpack.c.l.b16 %v643
    %v1600 = vunpack.c.h.b16 %v643
    %v1601 = vunpack.c.l.b16 %v644
    %v1602 = vunpack.c.h.b16 %v644
    %v1603 = vunpack.c.l.b16 %v645
    %v1604 = vunpack.c.h.b16 %v645
    %v1605 = vunpack.c.l.b16 %v646
    %v1606 = vunpack.c.h.b16 %v646
    %v1607 = vunpack.c.l.b16 %v647
    %v1608 = vunpack.c.h.b16 %v647
    %v1609 = vunpack.c.l.b16 %v648
    %v1610 = vunpack.c.h.b16 %v648
    %v1611 = vunpack.c.l.b16 %v649
    %v1612 = vunpack.c.h.b16 %v649
    %v1613 = vunpack.c.l.b16 %v650
    %v1614 = vunpack.c.h.b16 %v650
    %v1615 = vunpack.c.l.b16 %v651
    %v1616 = vunpack.c.h.b16 %v651
    %v1617 = vunpack.c.l.b16 %v652
    %v1618 = vunpack.c.h.b16 %v652
    %v1619 = vunpack.c.l.b16 %v653
    %v1620 = vunpack.c.h.b16 %v653
    %v1621 = vunpack.c.l.b16 %v654
    %v1622 = vunpack.c.h.b16 %v654
    %v1623 = vunpack.c.l.b16 %v655
    %v1624 = vunpack.c.h.b16 %v655
    %v1625 = vunpack.c.l.b16 %v656
    %v1626 = vunpack.c.h.b16 %v656
    %v1627 = vunpack.c.l.b16 %v657
    %v1628 = vunpack.c.h.b16 %v657
    %v1629 = vunpack.c.l.b16 %v658
    %v1630 = vunpack.c.h.b16 %v658
    %v1631 = vunpack.c.l.b16 %v659
    %v1632 = vunpack.c.h.b16 %v659
    %v1633 = vunpack.c.l.b16 %v660
    %v1634 = vunpack.c.h.b16 %v660
    %v1635 = vunpack.c.l.b16 %v661
    %v1636 = vunpack.c.h.b16 %v661
    %v1637 = vunpack.c.l.b16 %v662
    %v1638 = vunpack.c.h.b16 %v662
    %v1639 = vunpack.c.l.b16 %v663
    %v1640 = vunpack.c.h.b16 %v663
    %v1641 = vunpack.c.l.b16 %v664
    %v1642 = vunpack.c.h.b16 %v664
    %v1643 = vunpack.c.l.b16 %v665
    %v1644 = vunpack.c.h.b16 %v665
    %v1645 = vunpack.c.l.b16 %v666
    %v1646 = vunpack.c.h.b16 %v666
    %v1647 = vunpack.c.l.b16 %v667
    %v1648 = vunpack.c.h.b16 %v667
    %v1649 = vunpack.c.l.b16 %v668
    %v1650 = vunpack.c.h.b16 %v668
    %v1651 = vunpack.c.l.b16 %v669
    %v1652 = vunpack.c.h.b16 %v669
    %v1653 = vunpack.c.l.b16 %v670
    %v1654 = vunpack.c.h.b16 %v670
    %v1655 = vunpack.c.l.b16 %v671
    %v1656 = vunpack.c.h.b16 %v671
    %v1657 = vunpack.c.l.b16 %v672
    %v1658 = vunpack.c.h.b16 %v672
    %v1659 = vunpack.c.l.b16 %v673
    %v1660 = vunpack.c.h.b16 %v673
    %v1661 = vunpack.c.l.b16 %v674
    %v1662 = vunpack.c.h.b16 %v674
    %v1663 = vunpack.c.l.b16 %v675
    %v1664 = vunpack.c.h.b16 %v675
    %v1665 = vunpack.c.l.b16 %v676
    %v1666 = vunpack.c.h.b16 %v676
    %v1667 = vunpack.c.l.b16 %v677
    %v1668 = vunpack.c.h.b16 %v677
    %v1669 = vunpack.c.l.b16 %v678
    %v1670 = vunpack.c.h.b16 %v678
    %v1671 = vunpack.c.l.b16 %v679
    %v1672 = vunpack.c.h.b16 %v679
    %v1673 = vunpack.c.l.b16 %v680
    %v1674 = vunpack.c.h.b16 %v680
    %v1675 = vunpack.c.l.b16 %v681
    %v1676 = vunpack.c.h.b16 %v681
    %v1677 = vunpack.c.l.b16 %v682
    %v1678 = vunpack.c.h.b16 %v682
    %v1679 = vunpack.c.l.b16 %v683
    %v1680 = vunpack.c.h.b16 %v683
    %v1681 = vunpack.c.l.b16 %v684
    %v1682 = vunpack.c.h.b16 %v684
    %v1683 = vunpack.c.l.b16 %v685
    %v1684 = vunpack.c.h.b16 %v685
    %v1685 = vunpack.c.l.b16 %v686
    %v1686 = vunpack.c.h.b16 %v686
    %v1687 = vunpack.c.l.b16 %v687
    %v1688 = vunpack.c.h.b16 %v687
    %v1689 = vunpack.c.l.b16 %v688
    %v1690 = vunpack.c.h.b16 %v688
    %v1691 = vunpack.c.l.b16 %v689
    %v1692 = vunpack.c.h.b16 %v689
    %v1693 = vunpack.c.l.b16 %v690
    %v1694 = vunpack.c.h.b16 %v690
    %v1695 = vunpack.c.l.b16 %v691
    %v1696 = vunpack.c.h.b16 %v691
    %v1697 = vunpack.c.l.b16 %v692
    %v1698 = vunpack.c.h.b16 %v692
    %v1699 = vunpack.c.l.b16 %v693
    %v1700 = vunpack.c.h.b16 %v693
    %v1701 = vunpack.c.l.b16 %v694
    %v1702 = vunpack.c.h.b16 %v694
    %v1703 = vunpack.c.l.b16 %v695
    %v1704 = vunpack.c.h.b16 %v695
    %v1705 = vunpack.c.l.b16 %v696
    %v1706 = vunpack.c.h.b16 %v696
    %v1707 = vunpack.c.l.b16 %v697
    %v1708 = vunpack.c.h.b16 %v697
    %v1709 = vunpack.c.l.b16 %v698
    %v1710 = vunpack.c.h.b16 %v698
    %v1711 = vunpack.c.l.b16 %v699
    %v1712 = vunpack.c.h.b16 %v699
    %v1713 = vunpack.c.l.b16 %v700
    %v1714 = vunpack.c.h.b16 %v700
    %v1715 = vunpack.c.l.b16 %v701
    %v1716 = vunpack.c.h.b16 %v701
    %v1717 = vunpack.c.l.b16 %v702
    %v1718 = vunpack.c.h.b16 %v702
    %v1719 = vunpack.c.l.b16 %v703
    %v1720 = vunpack.c.h.b16 %v703
    %v1721 = vunpack.c.l.b16 %v704
    %v1722 = vunpack.c.h.b16 %v704
    %v1723 = vunpack.c.l.b16 %v705
    %v1724 = vunpack.c.h.b16 %v705
    %v1725 = vunpack.c.l.b16 %v706
    %v1726 = vunpack.c.h.b16 %v706
    %v1727 = vunpack.c.l.b16 %v707
    %v1728 = vunpack.c.h.b16 %v707
    %v1729 = vunpack.c.l.b16 %v708
    %v1730 = vunpack.c.h.b16 %v708
    %v1731 = vunpack.c.l.b16 %v709
    %v1732 = vunpack.c.h.b16 %v709
    %v1733 = vunpack.c.l.b16 %v710
    %v1734 = vunpack.c.h.b16 %v710
    %v1735 = vunpack.c.l.b16 %v711
    %v1736 = vunpack.c.h.b16 %v711
    %v1737 = vunpack.c.l.b16 %v712
    %v1738 = vunpack.c.h.b16 %v712
    %v1739 = vunpack.c.l.b16 %v713
    %v1740 = vunpack.c.h.b16 %v713
    %v1741 = vunpack.c.l.b16 %v714
    %v1742 = vunpack.c.h.b16 %v714
    %v1743 = vunpack.c.l.b16 %v715
    %v1744 = vunpack.c.h.b16 %v715
    %v1745 = vunpack.c.l.b16 %v716
    %v1746 = vunpack.c.h.b16 %v716
    %v1747 = vunpack.c.l.b16 %v717
    %v1748 = vunpack.c.h.b16 %v717
    %v1749 = vunpack.c.l.b16 %v718
    %v1750 = vunpack.c.h.b16 %v718
    %v1751 = vunpack.c.l.b16 %v719
    %v1752 = vunpack.c.h.b16 %v719
    %v1753 = vunpack.c.l.b16 %v720
    %v1754 = vunpack.c.h.b16 %v720
    %v1755 = vunpack.c.l.b16 %v721
    %v1756 = vunpack.c.h.b16 %v721
    %v1757 = vunpack.c.l.b16 %v722
    %v1758 = vunpack.c.h.b16 %v722
    %v1759 = vunpack.c.l.b16 %v723
    %v1760 = vunpack.c.h.b16 %v723
    %v1761 = vunpack.c.l.b16 %v724
    %v1762 = vunpack.c.h.b16 %v724
    %v1763 = vunpack.c.l.b16 %v725
    %v1764 = vunpack.c.h.b16 %v725
    %v1765 = vunpack.c.l.b16 %v726
    %v1766 = vunpack.c.h.b16 %v726
    %v1767 = vunpack.c.l.b16 %v727
    %v1768 = vunpack.c.h.b16 %v727
    %v1769 = vunpack.c.l.b16 %v728
    %v1770 = vunpack.c.h.b16 %v728
    %v1771 = vunpack.c.l.b16 %v729
    %v1772 = vunpack.c.h.b16 %v729
    %v1773 = vunpack.c.l.b16 %v730
    %v1774 = vunpack.c.h.b16 %v730
    %v1775 = vunpack.c.l.b16 %v731
    %v1776 = vunpack.c.h.b16 %v731
    %v1777 = vunpack.c.l.b16 %v732
    %v1778 = vunpack.c.h.b16 %v732
    %v1779 = vunpack.c.l.b16 %v733
    %v1780 = vunpack.c.h.b16 %v733
    %v1781 = vunpack.c.l.b16 %v734
    %v1782 = vunpack.c.h.b16 %v734
    %v1783 = vunpack.c.l.b16 %v735
    %v1784 = vunpack.c.h.b16 %v735
    %v1785 = vunpack.c.l.b16 %v736
    %v1786 = vunpack.c.h.b16 %v736
    %v1787 = vunpack.c.l.b16 %v737
    %v1788 = vunpack.c.h.b16 %v737
    %v1789 = vunpack.c.l.b16 %v738
    %v1790 = vunpack.c.h.b16 %v738
    %v1791 = vunpack.c.l.b16 %v739
    %v1792 = vunpack.c.h.b16 %v739
    %v1793 = vunpack.c.l.b16 %v740
    %v1794 = vunpack.c.h.b16 %v740
    %v1795 = vunpack.c.l.b16 %v741
    %v1796 = vunpack.c.h.b16 %v741
    %v1797 = vunpack.c.l.b16 %v742
    %v1798 = vunpack.c.h.b16 %v742
    %v1799 = vunpack.c.l.b16 %v743
    %v1800 = vunpack.c.h.b16 %v743
    %v1801 = vunpack.c.l.b16 %v744
    %v1802 = vunpack.c.h.b16 %v744
    %v1803 = vunpack.c.l.b16 %v745
    %v1804 = vunpack.c.h.b16 %v745
    %v1805 = vunpack.c.l.b16 %v746
    %v1806 = vunpack.c.h.b16 %v746
    %v1807 = vunpack.c.l.b16 %v747
    %v1808 = vunpack.c.h.b16 %v747
    %v1809 = vunpack.c.l.b16 %v748
    %v1810 = vunpack.c.h.b16 %v748
    %v1811 = vunpack.c.l.b16 %v749
    %v1812 = vunpack.c.h.b16 %v749
    %v1813 = vunpack.c.l.b16 %v750
    %v1814 = vunpack.c.h.b16 %v750
    %v1815 = vunpack.c.l.b16 %v751
    %v1816 = vunpack.c.h.b16 %v751
    %v1817 = vunpack.c.l.b16 %v752
    %v1818 = vunpack.c.h.b16 %v752
    %v1819 = vunpack.c.l.b16 %v753
    %v1820 = vunpack.c.h.b16 %v753
    %v1821 = vunpack.c.l.b16 %v754
    %v1822 = vunpack.c.h.b16 %v754
    %v1823 = vunpack.c.l.b16 %v755
    %v1824 = vunpack.c.h.b16 %v755
    %v1825 = vunpack.c.l.b16 %v756
    %v1826 = vunpack.c.h.b16 %v756
    %v1827 = vunpack.c.l.b16 %v757
    %v1828 = vunpack.c.h.b16 %v757
    %v1829 = vunpack.c.l.b16 %v758
    %v1830 = vunpack.c.h.b16 %v758
    %v1831 = vunpack.c.l.b16 %v759
    %v1832 = vunpack.c.h.b16 %v759
    %v1833 = vunpack.c.l.b16 %v760
    %v1834 = vunpack.c.h.b16 %v760
    %v1835 = vunpack.c.l.b16 %v761
    %v1836 = vunpack.c.h.b16 %v761
    %v1837 = vunpack.c.l.b16 %v762
    %v1838 = vunpack.c.h.b16 %v762
    %v1839 = vunpack.c.l.b16 %v763
    %v1840 = vunpack.c.h.b16 %v763
    %v1841 = vunpack.c.l.b16 %v764
    %v1842 = vunpack.c.h.b16 %v764
    %v1843 = vunpack.c.l.b16 %v765
    %v1844 = vunpack.c.h.b16 %v765
    %v1845 = vunpack.c.l.b16 %v766
    %v1846 = vunpack.c.h.b16 %v766
    %v1847 = vunpack.c.l.b16 %v767
    %v1848 = vunpack.c.h.b16 %v767
    %v1849 = vunpack.c.l.b16 %v768
    %v1850 = vunpack.c.h.b16 %v768
    %v1851 = vunpack.c.l.b16 %v769
    %v1852 = vunpack.c.h.b16 %v769
    %v1853 = vunpack.c.l.b16 %v770
    %v1854 = vunpack.c.h.b16 %v770
    %v1855 = vunpack.c.l.b16 %v771
    %v1856 = vunpack.c.h.b16 %v771
    %v1857 = vunpack.c.l.b16 %v772
    %v1858 = vunpack.c.h.b16 %v772
    %v1859 = vunpack.c.l.b16 %v773
    %v1860 = vunpack.c.h.b16 %v773
    %v1861 = vunpack.c.l.b16 %v774
    %v1862 = vunpack.c.h.b16 %v774
    %v1863 = vunpack.c.l.b16 %v775
    %v1864 = vunpack.c.h.b16 %v775
    %v1865 = vunpack.c.l.b16 %v776
    %v1866 = vunpack.c.h.b16 %v776
    %v1867 = vunpack.c.l.b16 %v777
    %v1868 = vunpack.c.h.b16 %v777
    %v1869 = vunpack.c.l.b16 %v778
    %v1870 = vunpack.c.h.b16 %v778
    %v1871 = vunpack.c.l.b16 %v779
    %v1872 = vunpack.c.h.b16 %v779
    %v1873 = vunpack.c.l.b16 %v780
    %v1874 = vunpack.c.h.b16 %v780
    %v1875 = vunpack.c.l.b16 %v781
    %v1876 = vunpack.c.h.b16 %v781
    %v1877 = vunpack.c.l.b16 %v782
    %v1878 = vunpack.c.h.b16 %v782
    %v1879 = vunpack.c.l.b16 %v783
    %v1880 = vunpack.c.h.b16 %v783
    %v1881 = vunpack.c.l.b16 %v784
    %v1882 = vunpack.c.h.b16 %v784
    %v1883 = vunpack.c.l.b16 %v785
    %v1884 = vunpack.c.h.b16 %v785
    %v1885 = vunpack.c.l.b16 %v786
    %v1886 = vunpack.c.h.b16 %v786
    %v1887 = vunpack.c.l.b16 %v787
    %v1888 = vunpack.c.h.b16 %v787
    %v1889 = vunpack.c.l.b16 %v788
    %v1890 = vunpack.c.h.b16 %v788
    %v1891 = vunpack.c.l.b16 %v789
    %v1892 = vunpack.c.h.b16 %v789
    %v1893 = vunpack.c.l.b16 %v790
    %v1894 = vunpack.c.h.b16 %v790
    %v1895 = vunpack.c.l.b16 %v791
    %v1896 = vunpack.c.h.b16 %v791
    %v1897 = vunpack.c.l.b16 %v792
    %v1898 = vunpack.c.h.b16 %v792
    %v1899 = vunpack.c.l.b16 %v793
    %v1900 = vunpack.c.h.b16 %v793
    %v1901 = vunpack.c.l.b16 %v794
    %v1902 = vunpack.c.h.b16 %v794
    %v1903 = vunpack.c.l.b16 %v795
    %v1904 = vunpack.c.h.b16 %v795
    %v1905 = vunpack.c.l.b16 %v796
    %v1906 = vunpack.c.h.b16 %v796
    %v1907 = vunpack.c.l.b16 %v797
    %v1908 = vunpack.c.h.b16 %v797
    %v1909 = vunpack.c.l.b16 %v798
    %v1910 = vunpack.c.h.b16 %v798
    %v1911 = vunpack.c.l.b16 %v799
    %v1912 = vunpack.c.h.b16 %v799
    %v1913 = vunpack.c.l.b16 %v800
    %v1914 = vunpack.c.h.b16 %v800
    %v1915 = vunpack.c.l.b16 %v801
    %v1916 = vunpack.c.h.b16 %v801
    %v1917 = vunpack.c.l.b16 %v802
    %v1918 = vunpack.c.h.b16 %v802
    %v1919 = vunpack.c.l.b16 %v803
    %v1920 = vunpack.c.h.b16 %v803
    %v1921 = vunpack.c.l.b16 %v804
    %v1922 = vunpack.c.h.b16 %v804
    %v1923 = vunpack.c.l.b16 %v805
    %v1924 = vunpack.c.h.b16 %v805
    %v1925 = vunpack.c.l.b16 %v806
    %v1926 = vunpack.c.h.b16 %v806
    %v1927 = vunpack.c.l.b16 %v807
    %v1928 = vunpack.c.h.b16 %v807
    %v1929 = vunpack.c.l.b16 %v808
    %v1930 = vunpack.c.h.b16 %v808
    %v1931 = vunpack.c.l.b16 %v809
    %v1932 = vunpack.c.h.b16 %v809
    %v1933 = vunpack.c.l.b16 %v810
    %v1934 = vunpack.c.h.b16 %v810
    %v1935 = vunpack.c.l.b16 %v811
    %v1936 = vunpack.c.h.b16 %v811
    %v1937 = vpack.c.b16 %v1189, %v1187
    %v1938 = vpack.c.b16 %v1190, %v1188
    %v1939 = vpack.c.b16 %v1193, %v1191
    %v1940 = vpack.c.b16 %v1194, %v1192
    %v1941 = vpack.c.b16 %v1197, %v1195
    %v1942 = vpack.c.b16 %v1198, %v1196
    %v1943 = vpack.c.b16 %v1201, %v1199
    %v1944 = vpack.c.b16 %v1202, %v1200
    %v1945 = vpack.c.b16 %v1205, %v1203
    %v1946 = vpack.c.b16 %v1206, %v1204
    %v1947 = vpack.c.b16 %v1209, %v1207
    %v1948 = vpack.c.b16 %v1210, %v1208
    %v1949 = vpack.c.b16 %v1213, %v1211
    %v1950 = vpack.c.b16 %v1214, %v1212
    %v1951 = vpack.c.b16 %v1217, %v1215
    %v1952 = vpack.c.b16 %v1218, %v1216
    %v1953 = vpack.c.b16 %v1221, %v1219
    %v1954 = vpack.c.b16 %v1222, %v1220
    %v1955 = vpack.c.b16 %v1225, %v1223
    %v1956 = vpack.c.b16 %v1226, %v1224
    %v1957 = vpack.c.b16 %v1229, %v1227
    %v1958 = vpack.c.b16 %v1230, %v1228
    %v1959 = vpack.c.b16 %v1233, %v1231
    %v1960 = vpack.c.b16 %v1234, %v1232
    %v1961 = vpack.c.b16 %v1237, %v1235
    %v1962 = vpack.c.b16 %v1238, %v1236
    %v1963 = vpack.c.b16 %v1241, %v1239
    %v1964 = vpack.c.b16 %v1242, %v1240
    %v1965 = vpack.c.b16 %v1245, %v1243
    %v1966 = vpack.c.b16 %v1246, %v1244
    %v1967 = vpack.c.b16 %v1249, %v1247
    %v1968 = vpack.c.b16 %v1250, %v1248
    %v1969 = vpack.c.b16 %v1253, %v1251
    %v1970 = vpack.c.b16 %v1254, %v1252
    %v1971 = vpack.c.b16 %v1257, %v1255
    %v1972 = vpack.c.b16 %v1258, %v1256
    %v1973 = vpack.c.b16 %v1261, %v1259
    %v1974 = vpack.c.b16 %v1262, %v1260
    %v1975 = vpack.c.b16 %v1265, %v1263
    %v1976 = vpack.c.b16 %v1266, %v1264
    %v1977 = vpack.c.b16 %v1269, %v1267
    %v1978 = vpack.c.b16 %v1270, %v1268
    %v1979 = vpack.c.b16 %v1273, %v1271
    %v1980 = vpack.c.b16 %v1274, %v1272
    %v1981 = vpack.c.b16 %v1277, %v1275
    %v1982 = vpack.c.b16 %v1278, %v1276
    %v1983 = vpack.c.b16 %v1281, %v1279
    %v1984 = vpack.c.b16 %v1282, %v1280
    %v1985 = vpack.c.b16 %v1285, %v1283
    %v1986 = vpack.c.b16 %v1286, %v1284
    %v1987 = vpack.c.b16 %v1289, %v1287
    %v1988 = vpack.c.b16 %v1290, %v1288
    %v1989 = vpack.c.b16 %v1293, %v1291
    %v1990 = vpack.c.b16 %v1294, %v1292
    %v1991 = vpack.c.b16 %v1297, %v1295
    %v1992 = vpack.c.b16 %v1298, %v1296
    %v1993 = vpack.c.b16 %v1301, %v1299
    %v1994 = vpack.c.b16 %v1302, %v1300
    %v1995 = vpack.c.b16 %v1305, %v1303
    %v1996 = vpack.c.b16 %v1306, %v1304
    %v1997 = vpack.c.b16 %v1309, %v1307
    %v1998 = vpack.c.b16 %v1310, %v1308
    %v1999 = vpack.c.b16 %v1313, %v1311
    %v2000 = vpack.c.b16 %v1314, %v1312
    %v2001 = vpack.c.b16 %v1317, %v1315
    %v2002 = vpack.c.b16 %v1318, %v1316
    %v2003 = vpack.c.b16 %v1321, %v1319
    %v2004 = vpack.c.b16 %v1322, %v1320
    %v2005 = vpack.c.b16 %v1325, %v1323
    %v2006 = vpack.c.b16 %v1326, %v1324
    %v2007 = vpack.c.b16 %v1329, %v1327
    %v2008 = vpack.c.b16 %v1330, %v1328
    %v2009 = vpack.c.b16 %v1333, %v1331
    %v2010 = vpack.c.b16 %v1334, %v1332
    %v2011 = vpack.c.b16 %v1337, %v1335
    %v2012 = vpack.c.b16 %v1338, %v1336
    %v2013 = vpack.c.b16 %v1341, %v1339
    %v2014 = vpack.c.b16 %v1342, %v1340
    %v2015 = vpack.c.b16 %v1345, %v1343
    %v2016 = vpack.c.b16 %v1346, %v1344
    %v2017 = vpack.c.b16 %v1349, %v1347
    %v2018 = vpack.c.b16 %v1350, %v1348
    %v2019 = vpack.c.b16 %v1353, %v1351
    %v2020 = vpack.c.b16 %v1354, %v1352
    %v2021 = vpack.c.b16 %v1357, %v1355
    %v2022 = vpack.c.b16 %v1358, %v1356
    %v2023 = vpack.c.b16 %v1361, %v1359
    %v2024 = vpack.c.b16 %v1362, %v1360
    %v2025 = vpack.c.b16 %v1365, %v1363
    %v2026 = vpack.c.b16 %v1366, %v1364
    %v2027 = vpack.c.b16 %v1369, %v1367
    %v2028 = vpack.c.b16 %v1370, %v1368
    %v2029 = vpack.c.b16 %v1373, %v1371
    %v2030 = vpack.c.b16 %v1374, %v1372
    %v2031 = vpack.c.b16 %v1377, %v1375
    %v2032 = vpack.c.b16 %v1378, %v1376
    %v2033 = vpack.c.b16 %v1381, %v1379
    %v2034 = vpack.c.b16 %v1382, %v1380
    %v2035 = vpack.c.b16 %v1385, %v1383
    %v2036 = vpack.c.b16 %v1386, %v1384
    %v2037 = vpack.c.b16 %v1389, %v1387
    %v2038 = vpack.c.b16 %v1390, %v1388
    %v2039 = vpack.c.b16 %v1393, %v1391
    %v2040 = vpack.c.b16 %v1394, %v1392
    %v2041 = vpack.c.b16 %v1397, %v1395
    %v2042 = vpack.c.b16 %v1398, %v1396
    %v2043 = vpack.c.b16 %v1401, %v1399
    %v2044 = vpack.c.b16 %v1402, %v1400
    %v2045 = vpack.c.b16 %v1405, %v1403
    %v2046 = vpack.c.b16 %v1406, %v1404
    %v2047 = vpack.c.b16 %v1409, %v1407
    %v2048 = vpack.c.b16 %v1410, %v1408
    %v2049 = vpack.c.b16 %v1413, %v1411
    %v2050 = vpack.c.b16 %v1414, %v1412
    %v2051 = vpack.c.b16 %v1417, %v1415
    %v2052 = vpack.c.b16 %v1418, %v1416
    %v2053 = vpack.c.b16 %v1421, %v1419
    %v2054 = vpack.c.b16 %v1422, %v1420
    %v2055 = vpack.c.b16 %v1425, %v1423
    %v2056 = vpack.c.b16 %v1426, %v1424
    %v2057 = vpack.c.b16 %v1429, %v1427
    %v2058 = vpack.c.b16 %v1430, %v1428
    %v2059 = vpack.c.b16 %v1433, %v1431
    %v2060 = vpack.c.b16 %v1434, %v1432
    %v2061 = vpack.c.b16 %v1437, %v1435
    %v2062 = vpack.c.b16 %v1438, %v1436
    %v2063 = vpack.c.b16 %v1441, %v1439
    %v2064 = vpack.c.b16 %v1442, %v1440
    %v2065 = vpack.c.b16 %v1445, %v1443
    %v2066 = vpack.c.b16 %v1446, %v1444
    %v2067 = vpack.c.b16 %v1449, %v1447
    %v2068 = vpack.c.b16 %v1450, %v1448
    %v2069 = vpack.c.b16 %v1453, %v1451
    %v2070 = vpack.c.b16 %v1454, %v1452
    %v2071 = vpack.c.b16 %v1457, %v1455
    %v2072 = vpack.c.b16 %v1458, %v1456
    %v2073 = vpack.c.b16 %v1461, %v1459
    %v2074 = vpack.c.b16 %v1462, %v1460
    %v2075 = vpack.c.b16 %v1465, %v1463
    %v2076 = vpack.c.b16 %v1466, %v1464
    %v2077 = vpack.c.b16 %v1469, %v1467
    %v2078 = vpack.c.b16 %v1470, %v1468
    %v2079 = vpack.c.b16 %v1473, %v1471
    %v2080 = vpack.c.b16 %v1474, %v1472
    %v2081 = vpack.c.b16 %v1477, %v1475
    %v2082 = vpack.c.b16 %v1478, %v1476
    %v2083 = vpack.c.b16 %v1481, %v1479
    %v2084 = vpack.c.b16 %v1482, %v1480
    %v2085 = vpack.c.b16 %v1485, %v1483
    %v2086 = vpack.c.b16 %v1486, %v1484
    %v2087 = vpack.c.b16 %v1489, %v1487
    %v2088 = vpack.c.b16 %v1490, %v1488
    %v2089 = vpack.c.b16 %v1493, %v1491
    %v2090 = vpack.c.b16 %v1494, %v1492
    %v2091 = vpack.c.b16 %v1497, %v1495
    %v2092 = vpack.c.b16 %v1498, %v1496
    %v2093 = vpack.c.b16 %v1501, %v1499
    %v2094 = vpack.c.b16 %v1502, %v1500
    %v2095 = vpack.c.b16 %v1505, %v1503
    %v2096 = vpack.c.b16 %v1506, %v1504
    %v2097 = vpack.c.b16 %v1509, %v1507
    %v2098 = vpack.c.b16 %v1510, %v1508
    %v2099 = vpack.c.b16 %v1513, %v1511
    %v2100 = vpack.c.b16 %v1514, %v1512
    %v2101 = vpack.c.b16 %v1517, %v1515
    %v2102 = vpack.c.b16 %v1518, %v1516
    %v2103 = vpack.c.b16 %v1521, %v1519
    %v2104 = vpack.c.b16 %v1522, %v1520
    %v2105 = vpack.c.b16 %v1525, %v1523
    %v2106 = vpack.c.b16 %v1526, %v1524
    %v2107 = vpack.c.b16 %v1529, %v1527
    %v2108 = vpack.c.b16 %v1530, %v1528
    %v2109 = vpack.c.b16 %v1533, %v1531
    %v2110 = vpack.c.b16 %v1534, %v1532
    %v2111 = vpack.c.b16 %v1537, %v1535
    %v2112 = vpack.c.b16 %v1538, %v1536
    %v2113 = vpack.c.b16 %v1541, %v1539
    %v2114 = vpack.c.b16 %v1542, %v1540
    %v2115 = vpack.c.b16 %v1545, %v1543
    %v2116 = vpack.c.b16 %v1546, %v1544
    %v2117 = vpack.c.b16 %v1549, %v1547
    %v2118 = vpack.c.b16 %v1550, %v1548
    %v2119 = vpack.c.b16 %v1553, %v1551
    %v2120 = vpack.c.b16 %v1554, %v1552
    %v2121 = vpack.c.b16 %v1557, %v1555
    %v2122 = vpack.c.b16 %v1558, %v1556
    %v2123 = vpack.c.b16 %v1561, %v1559
    %v2124 = vpack.c.b16 %v1562, %v1560
    %v2125 = vpack.c.b16 %v1565, %v1563
    %v2126 = vpack.c.b16 %v1566, %v1564
    %v2127 = vpack.c.b16 %v1569, %v1567
    %v2128 = vpack.c.b16 %v1570, %v1568
    %v2129 = vpack.c.b16 %v1573, %v1571
    %v2130 = vpack.c.b16 %v1574, %v1572
    %v2131 = vpack.c.b16 %v1577, %v1575
    %v2132 = vpack.c.b16 %v1578, %v1576
    %v2133 = vpack.c.b16 %v1581, %v1579
    %v2134 = vpack.c.b16 %v1582, %v1580
    %v2135 = vpack.c.b16 %v1585, %v1583
    %v2136 = vpack.c.b16 %v1586, %v1584
    %v2137 = vpack.c.b16 %v1589, %v1587
    %v2138 = vpack.c.b16 %v1590, %v1588
    %v2139 = vpack.c.b16 %v1593, %v1591
    %v2140 = vpack.c.b16 %v1594, %v1592
    %v2141 = vpack.c.b16 %v1597, %v1595
    %v2142 = vpack.c.b16 %v1598, %v1596
    %v2143 = vpack.c.b16 %v1601, %v1599
    %v2144 = vpack.c.b16 %v1602, %v1600
    %v2145 = vpack.c.b16 %v1605, %v1603
    %v2146 = vpack.c.b16 %v1606, %v1604
    %v2147 = vpack.c.b16 %v1609, %v1607
    %v2148 = vpack.c.b16 %v1610, %v1608
    %v2149 = vpack.c.b16 %v1613, %v1611
    %v2150 = vpack.c.b16 %v1614, %v1612
    %v2151 = vpack.c.b16 %v1617, %v1615
    %v2152 = vpack.c.b16 %v1618, %v1616
    %v2153 = vpack.c.b16 %v1621, %v1619
    %v2154 = vpack.c.b16 %v1622, %v1620
    %v2155 = vpack.c.b16 %v1625, %v1623
    %v2156 = vpack.c.b16 %v1626, %v1624
    %v2157 = vpack.c.b16 %v1629, %v1627
    %v2158 = vpack.c.b16 %v1630, %v1628
    %v2159 = vpack.c.b16 %v1633, %v1631
    %v2160 = vpack.c.b16 %v1634, %v1632
    %v2161 = vpack.c.b16 %v1637, %v1635
    %v2162 = vpack.c.b16 %v1638, %v1636
    %v2163 = vpack.c.b16 %v1641, %v1639
    %v2164 = vpack.c.b16 %v1642, %v1640
    %v2165 = vpack.c.b16 %v1645, %v1643
    %v2166 = vpack.c.b16 %v1646, %v1644
    %v2167 = vpack.c.b16 %v1649, %v1647
    %v2168 = vpack.c.b16 %v1650, %v1648
    %v2169 = vpack.c.b16 %v1653, %v1651
    %v2170 = vpack.c.b16 %v1654, %v1652
    %v2171 = vpack.c.b16 %v1657, %v1655
    %v2172 = vpack.c.b16 %v1658, %v1656
    %v2173 = vpack.c.b16 %v1661, %v1659
    %v2174 = vpack.c.b16 %v1662, %v1660
    %v2175 = vpack.c.b16 %v1665, %v1663
    %v2176 = vpack.c.b16 %v1666, %v1664
    %v2177 = vpack.c.b16 %v1669, %v1667
    %v2178 = vpack.c.b16 %v1670, %v1668
    %v2179 = vpack.c.b16 %v1673, %v1671
    %v2180 = vpack.c.b16 %v1674, %v1672
    %v2181 = vpack.c.b16 %v1677, %v1675
    %v2182 = vpack.c.b16 %v1678, %v1676
    %v2183 = vpack.c.b16 %v1681, %v1679
    %v2184 = vpack.c.b16 %v1682, %v1680
    %v2185 = vpack.c.b16 %v1685, %v1683
    %v2186 = vpack.c.b16 %v1686, %v1684
    %v2187 = vpack.c.b16 %v1689, %v1687
    %v2188 = vpack.c.b16 %v1690, %v1688
    %v2189 = vpack.c.b16 %v1693, %v1691
    %v2190 = vpack.c.b16 %v1694, %v1692
    %v2191 = vpack.c.b16 %v1697, %v1695
    %v2192 = vpack.c.b16 %v1698, %v1696
    %v2193 = vpack.c.b16 %v1701, %v1699
    %v2194 = vpack.c.b16 %v1702, %v1700
    %v2195 = vpack.c.b16 %v1705, %v1703
    %v2196 = vpack.c.b16 %v1706, %v1704
    %v2197 = vpack.c.b16 %v1709, %v1707
    %v2198 = vpack.c.b16 %v1710, %v1708
    %v2199 = vpack.c.b16 %v1713, %v1711
    %v2200 = vpack.c.b16 %v1714, %v1712
    %v2201 = vpack.c.b16 %v1717, %v1715
    %v2202 = vpack.c.b16 %v1718, %v1716
    %v2203 = vpack.c.b16 %v1721, %v1719
    %v2204 = vpack.c.b16 %v1722, %v1720
    %v2205 = vpack.c.b16 %v1725, %v1723
    %v2206 = vpack.c.b16 %v1726, %v1724
    %v2207 = vpack.c.b16 %v1729, %v1727
    %v2208 = vpack.c.b16 %v1730, %v1728
    %v2209 = vpack.c.b16 %v1733, %v1731
    %v2210 = vpack.c.b16 %v1734, %v1732
    %v2211 = vpack.c.b16 %v1737, %v1735
    %v2212 = vpack.c.b16 %v1738, %v1736
    %v2213 = vpack.c.b16 %v1741, %v1739
    %v2214 = vpack.c.b16 %v1742, %v1740
    %v2215 = vpack.c.b16 %v1745, %v1743
    %v2216 = vpack.c.b16 %v1746, %v1744
    %v2217 = vpack.c.b16 %v1749, %v1747
    %v2218 = vpack.c.b16 %v1750, %v1748
    %v2219 = vpack.c.b16 %v1753, %v1751
    %v2220 = vpack.c.b16 %v1754, %v1752
    %v2221 = vpack.c.b16 %v1757, %v1755
    %v2222 = vpack.c.b16 %v1758, %v1756
    %v2223 = vpack.c.b16 %v1761, %v1759
    %v2224 = vpack.c.b16 %v1762, %v1760
    %v2225 = vpack.c.b16 %v1765, %v1763
    %v2226 = vpack.c.b16 %v1766, %v1764
    %v2227 = vpack.c.b16 %v1769, %v1767
    %v2228 = vpack.c.b16 %v1770, %v1768
    %v2229 = vpack.c.b16 %v1773, %v1771
    %v2230 = vpack.c.b16 %v1774, %v1772
    %v2231 = vpack.c.b16 %v1777, %v1775
    %v2232 = vpack.c.b16 %v1778, %v1776
    %v2233 = vpack.c.b16 %v1781, %v1779
    %v2234 = vpack.c.b16 %v1782, %v1780
    %v2235 = vpack.c.b16 %v1785, %v1783
    %v2236 = vpack.c.b16 %v1786, %v1784
    %v2237 = vpack.c.b16 %v1789, %v1787
    %v2238 = vpack.c.b16 %v1790, %v1788
    %v2239 = vpack.c.b16 %v1793, %v1791
    %v2240 = vpack.c.b16 %v1794, %v1792
    %v2241 = vpack.c.b16 %v1797, %v1795
    %v2242 = vpack.c.b16 %v1798, %v1796
    %v2243 = vpack.c.b16 %v1801, %v1799
    %v2244 = vpack.c.b16 %v1802, %v1800
    %v2245 = vpack.c.b16 %v1805, %v1803
    %v2246 = vpack.c.b16 %v1806, %v1804
    %v2247 = vpack.c.b16 %v1809, %v1807
    %v2248 = vpack.c.b16 %v1810, %v1808
    %v2249 = vpack.c.b16 %v1813, %v1811
    %v2250 = vpack.c.b16 %v1814, %v1812
    %v2251 = vpack.c.b16 %v1817, %v1815
    %v2252 = vpack.c.b16 %v1818, %v1816
    %v2253 = vpack.c.b16 %v1821, %v1819
    %v2254 = vpack.c.b16 %v1822, %v1820
    %v2255 = vpack.c.b16 %v1825, %v1823
    %v2256 = vpack.c.b16 %v1826, %v1824
    %v2257 = vpack.c.b16 %v1829, %v1827
    %v2258 = vpack.c.b16 %v1830, %v1828
    %v2259 = vpack.c.b16 %v1833, %v1831
    %v2260 = vpack.c.b16 %v1834, %v1832
    %v2261 = vpack.c.b16 %v1837, %v1835
    %v2262 = vpack.c.b16 %v1838, %v1836
    %v2263 = vpack.c.b16 %v1841, %v1839
    %v2264 = vpack.c.b16 %v1842, %v1840
    %v2265 = vpack.c.b16 %v1845, %v1843
    %v2266 = vpack.c.b16 %v1846, %v1844
    %v2267 = vpack.c.b16 %v1849, %v1847
    %v2268 = vpack.c.b16 %v1850, %v1848
    %v2269 = vpack.c.b16 %v1853, %v1851
    %v2270 = vpack.c.b16 %v1854, %v1852
    %v2271 = vpack.c.b16 %v1857, %v1855
    %v2272 = vpack.c.b16 %v1858, %v1856
    %v2273 = vpack.c.b16 %v1861, %v1859
    %v2274 = vpack.c.b16 %v1862, %v1860
    %v2275 = vpack.c.b16 %v1865, %v1863
    %v2276 = vpack.c.b16 %v1866, %v1864
    %v2277 = vpack.c.b16 %v1869, %v1867
    %v2278 = vpack.c.b16 %v1870, %v1868
    %v2279 = vpack.c.b16 %v1873, %v1871
    %v2280 = vpack.c.b16 %v1874, %v1872
    %v2281 = vpack.c.b16 %v1877, %v1875
    %v2282 = vpack.c.b16 %v1878, %v1876
    %v2283 = vpack.c.b16 %v1881, %v1879
    %v2284 = vpack.c.b16 %v1882, %v1880
    %v2285 = vpack.c.b16 %v1885, %v1883
    %v2286 = vpack.c.b16 %v1886, %v1884
    %v2287 = vpack.c.b16 %v1889, %v1887
    %v2288 = vpack.c.b16 %v1890, %v1888
    %v2289 = vpack.c.b16 %v1893, %v1891
    %v2290 = vpack.c.b16 %v1894, %v1892
    %v2291 = vpack.c.b16 %v1897, %v1895
    %v2292 = vpack.c.b16 %v1898, %v1896
    %v2293 = vpack.c.b16 %v1901, %v1899
    %v2294 = vpack.c.b16 %v1902, %v1900
    %v2295 = vpack.c.b16 %v1905, %v1903
    %v2296 = vpack.c.b16 %v1906, %v1904
    %v2297 = vpack.c.b16 %v1909, %v1907
    %v2298 = vpack.c.b16 %v1910, %v1908
    %v2299 = vpack.c.b16 %v1913, %v1911
    %v2300 = vpack.c.b16 %v1914, %v1912
    %v2301 = vpack.c.b16 %v1917, %v1915
    %v2302 = vpack.c.b16 %v1918, %v1916
    %v2303 = vpack.c.b16 %v1921, %v1919
    %v2304 = vpack.c.b16 %v1922, %v1920
    %v2305 = vpack.c.b16 %v1925, %v1923
    %v2306 = vpack.c.b16 %v1926, %v1924
    %v2307 = vpack.c.b16 %v1929, %v1927
    %v2308 = vpack.c.b16 %v1930, %v1928
    %v2309 = vpack.c.b16 %v1933, %v1931
    %v2310 = vpack.c.b16 %v1934, %v1932
    %v2311 = vpack.c.b16 %v1935, %v1935
    %v2312 = vpack.c.b16 %v1936, %v1936
    %vm2687 = vcmask 457728
    %v2689 = vsel %vm2687, %v364, 0
    %v2692 = vsel %vm2687, %v388, 0
    %v2695 = vsel %vm2687, %v412, 0
    %v2698 = vsel %vm2687, %v436, 0
    %vm2700 = vcmask 1043456
    %v2702 = vsel %vm2700, %v2311, 0
    %v2705 = vsel %vm2700, %v2312, 0
    %2707 = vmatprep.subr.bf16.mxu0 %v1938
    %2708 = vmatpush1.bf16.msra.mxu0 %v1937
    %2709 = vmatprep.subr.bf16.mxu0 %v1940
    %2710 = vmatpush1.bf16.msra.mxu0 %v1939
    %2711 = vmatprep.subr.bf16.mxu0 %v1942
    %2712 = vmatpush1.bf16.msra.mxu0 %v1941
    %2713 = vmatprep.subr.bf16.mxu0 %v1944
    %2714 = vmatpush1.bf16.msra.mxu0 %v1943
    %2715 = vmatprep.subr.bf16.mxu0 %v1946
    %2716 = vmatpush1.bf16.msra.mxu0 %v1945
    %2717 = vmatprep.subr.bf16.mxu0 %v1948
    %2718 = vmatpush1.bf16.msra.mxu0 %v1947
    %2719 = vmatprep.subr.bf16.mxu0 %v1950
    %2720 = vmatpush1.bf16.msra.mxu0 %v1949
    %2721 = vmatprep.subr.bf16.mxu0 %v1952
    %2722 = vmatpush1.bf16.msra.mxu0 %v1951
    %2723 = vmatprep.subr.bf16.mxu0 %v1954
    %2724 = vmatpush1.bf16.msra.mxu0 %v1953
    %2725 = vmatprep.subr.bf16.mxu0 %v1956
    %2726 = vmatpush1.bf16.msra.mxu0 %v1955
    %2727 = vmatprep.subr.bf16.mxu0 %v1958
    %2728 = vmatpush1.bf16.msra.mxu0 %v1957
    %2729 = vmatprep.subr.bf16.mxu0 %v1960
    %2730 = vmatpush1.bf16.msra.mxu0 %v1959
    %2731 = vmatprep.subr.bf16.mxu0 %v1962
    %2732 = vmatpush1.bf16.msra.mxu0 %v1961
    %2733 = vmatprep.subr.bf16.mxu0 %v1964
    %2734 = vmatpush1.bf16.msra.mxu0 %v1963
    %2735 = vmatprep.subr.bf16.mxu0 %v1966
    %2736 = vmatpush1.bf16.msra.mxu0 %v1965
    %2737 = vmatprep.subr.bf16.mxu0 %v1968
    %2738 = vmatpush1.bf16.msra.mxu0 %v1967
    %2739 = vmatprep.mubr.bf16.mxu0 %v342
    %2740 = vmatmul.mubr.bf16.gmra.mrb[0].mxu0 %v341
    %v2741 = vpop.f32.mrb[0].mxu0
    %v2742 = vadd.f32 0.0, %v2741
    %v2743 = vpop.f32.mrb[0].mxu0
    %v2744 = vadd.f32 0.0, %v2743
    %v2745 = vpop.f32.mrb[0].mxu0
    %v2746 = vadd.f32 0.0, %v2745
    %v2747 = vpop.f32.mrb[0].mxu0
    %v2748 = vadd.f32 0.0, %v2747
    %2749 = vmatprep.mubr.bf16.mxu0 %v366
    %2750 = vmatmul.mubr.bf16.gmra.mrb[0].mxu0 %v365
    %v2751 = vpop.f32.mrb[0].mxu0
    %v2752 = vadd.f32 0.0, %v2751
    %v2753 = vpop.f32.mrb[0].mxu0
    %v2754 = vadd.f32 0.0, %v2753
    %v2755 = vpop.f32.mrb[0].mxu0
    %v2756 = vadd.f32 0.0, %v2755
    %v2757 = vpop.f32.mrb[0].mxu0
    %v2758 = vadd.f32 0.0, %v2757
    %2759 = vmatprep.mubr.bf16.mxu0 %v390
    %2760 = vmatmul.mubr.bf16.gmra.mrb[0].mxu0 %v389
    %v2761 = vpop.f32.mrb[0].mxu0
    %v2762 = vadd.f32 0.0, %v2761
    %v2763 = vpop.f32.mrb[0].mxu0
    %v2764 = vadd.f32 0.0, %v2763
    %v2765 = vpop.f32.mrb[0].mxu0
    %v2766 = vadd.f32 0.0, %v2765
    %v2767 = vpop.f32.mrb[0].mxu0
    %v2768 = vadd.f32 0.0, %v2767
    %2769 = vmatprep.mubr.bf16.mxu0 %v414
    %2770 = vmatmul.mubr.bf16.gmra.mrb[0].mxu0 %v413
    %v2771 = vpop.f32.mrb[0].mxu0
    %v2772 = vadd.f32 0.0, %v2771
    %v2773 = vpop.f32.mrb[0].mxu0
    %v2774 = vadd.f32 0.0, %v2773
    %v2775 = vpop.f32.mrb[0].mxu0
    %v2776 = vadd.f32 0.0, %v2775
    %v2777 = vpop.f32.mrb[0].mxu0
    %v2778 = vadd.f32 0.0, %v2777
    %2779 = vdwg.mxu0
    %2780 = vmatprep.subr.bf16.mxu0 %v1970
    %2781 = vmatpush1.bf16.msra.mxu0 %v1969
    %2782 = vmatprep.subr.bf16.mxu0 %v1972
    %2783 = vmatpush1.bf16.msra.mxu0 %v1971
    %2784 = vmatprep.subr.bf16.mxu0 %v1974
    %2785 = vmatpush1.bf16.msra.mxu0 %v1973
    %2786 = vmatprep.subr.bf16.mxu0 %v1976
    %2787 = vmatpush1.bf16.msra.mxu0 %v1975
    %2788 = vmatprep.subr.bf16.mxu0 %v1978
    %2789 = vmatpush1.bf16.msra.mxu0 %v1977
    %2790 = vmatprep.subr.bf16.mxu0 %v1980
    %2791 = vmatpush1.bf16.msra.mxu0 %v1979
    %2792 = vmatprep.subr.bf16.mxu0 %v1982
    %2793 = vmatpush1.bf16.msra.mxu0 %v1981
    %2794 = vmatprep.subr.bf16.mxu0 %v1984
    %2795 = vmatpush1.bf16.msra.mxu0 %v1983
    %2796 = vmatprep.subr.bf16.mxu0 %v1986
    %2797 = vmatpush1.bf16.msra.mxu0 %v1985
    %2798 = vmatprep.subr.bf16.mxu0 %v1988
    %2799 = vmatpush1.bf16.msra.mxu0 %v1987
    %2800 = vmatprep.subr.bf16.mxu0 %v1990
    %2801 = vmatpush1.bf16.msra.mxu0 %v1989
    %2802 = vmatprep.subr.bf16.mxu0 %v1992
    %2803 = vmatpush1.bf16.msra.mxu0 %v1991
    %2804 = vmatprep.subr.bf16.mxu0 %v1994
    %2805 = vmatpush1.bf16.msra.mxu0 %v1993
    %2806 = vmatprep.subr.bf16.mxu0 %v1996
    %2807 = vmatpush1.bf16.msra.mxu0 %v1995
    %2808 = vmatprep.subr.bf16.mxu0 %v1998
    %2809 = vmatpush1.bf16.msra.mxu0 %v1997
    %2810 = vmatprep.subr.bf16.mxu0 %v2000
    %2811 = vmatpush1.bf16.msra.mxu0 %v1999
    %2812 = vmatprep.mubr.bf16.mxu0 %v344
    %2813 = vmatmul.mubr.bf16.gmra.mrb[0].mxu0 %v343
    %v2814 = vpop.f32.mrb[0].mxu0
    %v2815 = vadd.f32 %v2742, %v2814
    %v2816 = vpop.f32.mrb[0].mxu0
    %v2817 = vadd.f32 %v2744, %v2816
    %v2818 = vpop.f32.mrb[0].mxu0
    %v2819 = vadd.f32 %v2746, %v2818
    %v2820 = vpop.f32.mrb[0].mxu0
    %v2821 = vadd.f32 %v2748, %v2820
    %2822 = vmatprep.mubr.bf16.mxu0 %v368
    %2823 = vmatmul.mubr.bf16.gmra.mrb[0].mxu0 %v367
    %v2824 = vpop.f32.mrb[0].mxu0
    %v2825 = vadd.f32 %v2752, %v2824
    %v2826 = vpop.f32.mrb[0].mxu0
    %v2827 = vadd.f32 %v2754, %v2826
    %v2828 = vpop.f32.mrb[0].mxu0
    %v2829 = vadd.f32 %v2756, %v2828
    %v2830 = vpop.f32.mrb[0].mxu0
    %v2831 = vadd.f32 %v2758, %v2830
    %2832 = vmatprep.mubr.bf16.mxu0 %v392
    %2833 = vmatmul.mubr.bf16.gmra.mrb[0].mxu0 %v391
    %v2834 = vpop.f32.mrb[0].mxu0
    %v2835 = vadd.f32 %v2762, %v2834
    %v2836 = vpop.f32.mrb[0].mxu0
    %v2837 = vadd.f32 %v2764, %v2836
    %v2838 = vpop.f32.mrb[0].mxu0
    %v2839 = vadd.f32 %v2766, %v2838
    %v2840 = vpop.f32.mrb[0].mxu0
    %v2841 = vadd.f32 %v2768, %v2840
    %2842 = vmatprep.mubr.bf16.mxu0 %v416
    %2843 = vmatmul.mubr.bf16.gmra.mrb[0].mxu0 %v415
    %v2844 = vpop.f32.mrb[0].mxu0
    %v2845 = vadd.f32 %v2772, %v2844
    %v2846 = vpop.f32.mrb[0].mxu0
    %v2847 = vadd.f32 %v2774, %v2846
    %v2848 = vpop.f32.mrb[0].mxu0
    %v2849 = vadd.f32 %v2776, %v2848
    %v2850 = vpop.f32.mrb[0].mxu0
    %v2851 = vadd.f32 %v2778, %v2850
    %2852 = vdwg.mxu0
    %2853 = vmatprep.subr.bf16.mxu0 %v2002
    %2854 = vmatpush1.bf16.msra.mxu0 %v2001
    %2855 = vmatprep.subr.bf16.mxu0 %v2004
    %2856 = vmatpush1.bf16.msra.mxu0 %v2003
    %2857 = vmatprep.subr.bf16.mxu0 %v2006
    %2858 = vmatpush1.bf16.msra.mxu0 %v2005
    %2859 = vmatprep.subr.bf16.mxu0 %v2008
    %2860 = vmatpush1.bf16.msra.mxu0 %v2007
    %2861 = vmatprep.subr.bf16.mxu0 %v2010
    %2862 = vmatpush1.bf16.msra.mxu0 %v2009
    %2863 = vmatprep.subr.bf16.mxu0 %v2012
    %2864 = vmatpush1.bf16.msra.mxu0 %v2011
    %2865 = vmatprep.subr.bf16.mxu0 %v2014
    %2866 = vmatpush1.bf16.msra.mxu0 %v2013
    %2867 = vmatprep.subr.bf16.mxu0 %v2016
    %2868 = vmatpush1.bf16.msra.mxu0 %v2015
    %2869 = vmatprep.subr.bf16.mxu0 %v2018
    %2870 = vmatpush1.bf16.msra.mxu0 %v2017
    %2871 = vmatprep.subr.bf16.mxu0 %v2020
    %2872 = vmatpush1.bf16.msra.mxu0 %v2019
    %2873 = vmatprep.subr.bf16.mxu0 %v2022
    %2874 = vmatpush1.bf16.msra.mxu0 %v2021
    %2875 = vmatprep.subr.bf16.mxu0 %v2024
    %2876 = vmatpush1.bf16.msra.mxu0 %v2023
    %2877 = vmatprep.subr.bf16.mxu0 %v2026
    %2878 = vmatpush1.bf16.msra.mxu0 %v2025
    %2879 = vmatprep.subr.bf16.mxu0 %v2028
    %2880 = vmatpush1.bf16.msra.mxu0 %v2027
    %2881 = vmatprep.subr.bf16.mxu0 %v2030
    %2882 = vmatpush1.bf16.msra.mxu0 %v2029
    %2883 = vmatprep.subr.bf16.mxu0 %v2032
    %2884 = vmatpush1.bf16.msra.mxu0 %v2031
    %2885 = vmatprep.mubr.bf16.mxu0 %v346
    %2886 = vmatmul.mubr.bf16.gmra.mrb[0].mxu0 %v345
    %v2887 = vpop.f32.mrb[0].mxu0
    %v2888 = vadd.f32 %v2815, %v2887
    %v2889 = vpop.f32.mrb[0].mxu0
    %v2890 = vadd.f32 %v2817, %v2889
    %v2891 = vpop.f32.mrb[0].mxu0
    %v2892 = vadd.f32 %v2819, %v2891
    %v2893 = vpop.f32.mrb[0].mxu0
    %v2894 = vadd.f32 %v2821, %v2893
    %2895 = vmatprep.mubr.bf16.mxu0 %v370
    %2896 = vmatmul.mubr.bf16.gmra.mrb[0].mxu0 %v369
    %v2897 = vpop.f32.mrb[0].mxu0
    %v2898 = vadd.f32 %v2825, %v2897
    %v2899 = vpop.f32.mrb[0].mxu0
    %v2900 = vadd.f32 %v2827, %v2899
    %v2901 = vpop.f32.mrb[0].mxu0
    %v2902 = vadd.f32 %v2829, %v2901
    %v2903 = vpop.f32.mrb[0].mxu0
    %v2904 = vadd.f32 %v2831, %v2903
    %2905 = vmatprep.mubr.bf16.mxu0 %v394
    %2906 = vmatmul.mubr.bf16.gmra.mrb[0].mxu0 %v393
    %v2907 = vpop.f32.mrb[0].mxu0
    %v2908 = vadd.f32 %v2835, %v2907
    %v2909 = vpop.f32.mrb[0].mxu0
    %v2910 = vadd.f32 %v2837, %v2909
    %v2911 = vpop.f32.mrb[0].mxu0
    %v2912 = vadd.f32 %v2839, %v2911
    %v2913 = vpop.f32.mrb[0].mxu0
    %v2914 = vadd.f32 %v2841, %v2913
    %2915 = vmatprep.mubr.bf16.mxu0 %v418
    %2916 = vmatmul.mubr.bf16.gmra.mrb[0].mxu0 %v417
    %v2917 = vpop.f32.mrb[0].mxu0
    %v2918 = vadd.f32 %v2845, %v2917
    %v2919 = vpop.f32.mrb[0].mxu0
    %v2920 = vadd.f32 %v2847, %v2919
    %v2921 = vpop.f32.mrb[0].mxu0
    %v2922 = vadd.f32 %v2849, %v2921
    %v2923 = vpop.f32.mrb[0].mxu0
    %v2924 = vadd.f32 %v2851, %v2923
    %2925 = vdwg.mxu0
    %2926 = vmatprep.subr.bf16.mxu0 %v2034
    %2927 = vmatpush1.bf16.msra.mxu0 %v2033
    %2928 = vmatprep.subr.bf16.mxu0 %v2036
    %2929 = vmatpush1.bf16.msra.mxu0 %v2035
    %2930 = vmatprep.subr.bf16.mxu0 %v2038
    %2931 = vmatpush1.bf16.msra.mxu0 %v2037
    %2932 = vmatprep.subr.bf16.mxu0 %v2040
    %2933 = vmatpush1.bf16.msra.mxu0 %v2039
    %2934 = vmatprep.subr.bf16.mxu0 %v2042
    %2935 = vmatpush1.bf16.msra.mxu0 %v2041
    %2936 = vmatprep.subr.bf16.mxu0 %v2044
    %2937 = vmatpush1.bf16.msra.mxu0 %v2043
    %2938 = vmatprep.subr.bf16.mxu0 %v2046
    %2939 = vmatpush1.bf16.msra.mxu0 %v2045
    %2940 = vmatprep.subr.bf16.mxu0 %v2048
    %2941 = vmatpush1.bf16.msra.mxu0 %v2047
    %2942 = vmatprep.subr.bf16.mxu0 %v2050
    %2943 = vmatpush1.bf16.msra.mxu0 %v2049
    %2944 = vmatprep.subr.bf16.mxu0 %v2052
    %2945 = vmatpush1.bf16.msra.mxu0 %v2051
    %2946 = vmatprep.subr.bf16.mxu0 %v2054
    %2947 = vmatpush1.bf16.msra.mxu0 %v2053
    %2948 = vmatprep.subr.bf16.mxu0 %v2056
    %2949 = vmatpush1.bf16.msra.mxu0 %v2055
    %2950 = vmatprep.subr.bf16.mxu0 %v2058
    %2951 = vmatpush1.bf16.msra.mxu0 %v2057
    %2952 = vmatprep.subr.bf16.mxu0 %v2060
    %2953 = vmatpush1.bf16.msra.mxu0 %v2059
    %2954 = vmatprep.subr.bf16.mxu0 %v2062
    %2955 = vmatpush1.bf16.msra.mxu0 %v2061
    %2956 = vmatprep.subr.bf16.mxu0 %v2064
    %2957 = vmatpush1.bf16.msra.mxu0 %v2063
    %2958 = vmatprep.mubr.bf16.mxu0 %v348
    %2959 = vmatmul.mubr.bf16.gmra.mrb[0].mxu0 %v347
    %v2960 = vpop.f32.mrb[0].mxu0
    %v2961 = vadd.f32 %v2888, %v2960
    %v2962 = vpop.f32.mrb[0].mxu0
    %v2963 = vadd.f32 %v2890, %v2962
    %v2964 = vpop.f32.mrb[0].mxu0
    %v2965 = vadd.f32 %v2892, %v2964
    %v2966 = vpop.f32.mrb[0].mxu0
    %v2967 = vadd.f32 %v2894, %v2966
    %2968 = vmatprep.mubr.bf16.mxu0 %v372
    %2969 = vmatmul.mubr.bf16.gmra.mrb[0].mxu0 %v371
    %v2970 = vpop.f32.mrb[0].mxu0
    %v2971 = vadd.f32 %v2898, %v2970
    %v2972 = vpop.f32.mrb[0].mxu0
    %v2973 = vadd.f32 %v2900, %v2972
    %v2974 = vpop.f32.mrb[0].mxu0
    %v2975 = vadd.f32 %v2902, %v2974
    %v2976 = vpop.f32.mrb[0].mxu0
    %v2977 = vadd.f32 %v2904, %v2976
    %2978 = vmatprep.mubr.bf16.mxu0 %v396
    %2979 = vmatmul.mubr.bf16.gmra.mrb[0].mxu0 %v395
    %v2980 = vpop.f32.mrb[0].mxu0
    %v2981 = vadd.f32 %v2908, %v2980
    %v2982 = vpop.f32.mrb[0].mxu0
    %v2983 = vadd.f32 %v2910, %v2982
    %v2984 = vpop.f32.mrb[0].mxu0
    %v2985 = vadd.f32 %v2912, %v2984
    %v2986 = vpop.f32.mrb[0].mxu0
    %v2987 = vadd.f32 %v2914, %v2986
    %2988 = vmatprep.mubr.bf16.mxu0 %v420
    %2989 = vmatmul.mubr.bf16.gmra.mrb[0].mxu0 %v419
    %v2990 = vpop.f32.mrb[0].mxu0
    %v2991 = vadd.f32 %v2918, %v2990
    %v2992 = vpop.f32.mrb[0].mxu0
    %v2993 = vadd.f32 %v2920, %v2992
    %v2994 = vpop.f32.mrb[0].mxu0
    %v2995 = vadd.f32 %v2922, %v2994
    %v2996 = vpop.f32.mrb[0].mxu0
    %v2997 = vadd.f32 %v2924, %v2996
    %2998 = vdwg.mxu0
    %2999 = vmatprep.subr.bf16.mxu0 %v2066
    %3000 = vmatpush1.bf16.msra.mxu0 %v2065
    %3001 = vmatprep.subr.bf16.mxu0 %v2068
    %3002 = vmatpush1.bf16.msra.mxu0 %v2067
    %3003 = vmatprep.subr.bf16.mxu0 %v2070
    %3004 = vmatpush1.bf16.msra.mxu0 %v2069
    %3005 = vmatprep.subr.bf16.mxu0 %v2072
    %3006 = vmatpush1.bf16.msra.mxu0 %v2071
    %3007 = vmatprep.subr.bf16.mxu0 %v2074
    %3008 = vmatpush1.bf16.msra.mxu0 %v2073
    %3009 = vmatprep.subr.bf16.mxu0 %v2076
    %3010 = vmatpush1.bf16.msra.mxu0 %v2075
    %3011 = vmatprep.subr.bf16.mxu0 %v2078
    %3012 = vmatpush1.bf16.msra.mxu0 %v2077
    %3013 = vmatprep.subr.bf16.mxu0 %v2080
    %3014 = vmatpush1.bf16.msra.mxu0 %v2079
    %3015 = vmatprep.subr.bf16.mxu0 %v2082
    %3016 = vmatpush1.bf16.msra.mxu0 %v2081
    %3017 = vmatprep.subr.bf16.mxu0 %v2084
    %3018 = vmatpush1.bf16.msra.mxu0 %v2083
    %3019 = vmatprep.subr.bf16.mxu0 %v2086
    %3020 = vmatpush1.bf16.msra.mxu0 %v2085
    %3021 = vmatprep.subr.bf16.mxu0 %v2088
    %3022 = vmatpush1.bf16.msra.mxu0 %v2087
    %3023 = vmatprep.subr.bf16.mxu0 %v2090
    %3024 = vmatpush1.bf16.msra.mxu0 %v2089
    %3025 = vmatprep.subr.bf16.mxu0 %v2092
    %3026 = vmatpush1.bf16.msra.mxu0 %v2091
    %3027 = vmatprep.subr.bf16.mxu0 %v2094
    %3028 = vmatpush1.bf16.msra.mxu0 %v2093
    %3029 = vmatprep.subr.bf16.mxu0 %v2096
    %3030 = vmatpush1.bf16.msra.mxu0 %v2095
    %3031 = vmatprep.mubr.bf16.mxu0 %v350
    %3032 = vmatmul.mubr.bf16.gmra.mrb[0].mxu0 %v349
    %v3033 = vpop.f32.mrb[0].mxu0
    %v3034 = vadd.f32 %v2961, %v3033
    %v3035 = vpop.f32.mrb[0].mxu0
    %v3036 = vadd.f32 %v2963, %v3035
    %v3037 = vpop.f32.mrb[0].mxu0
    %v3038 = vadd.f32 %v2965, %v3037
    %v3039 = vpop.f32.mrb[0].mxu0
    %v3040 = vadd.f32 %v2967, %v3039
    %3041 = vmatprep.mubr.bf16.mxu0 %v374
    %3042 = vmatmul.mubr.bf16.gmra.mrb[0].mxu0 %v373
    %v3043 = vpop.f32.mrb[0].mxu0
    %v3044 = vadd.f32 %v2971, %v3043
    %v3045 = vpop.f32.mrb[0].mxu0
    %v3046 = vadd.f32 %v2973, %v3045
    %v3047 = vpop.f32.mrb[0].mxu0
    %v3048 = vadd.f32 %v2975, %v3047
    %v3049 = vpop.f32.mrb[0].mxu0
    %v3050 = vadd.f32 %v2977, %v3049
    %3051 = vmatprep.mubr.bf16.mxu0 %v398
    %3052 = vmatmul.mubr.bf16.gmra.mrb[0].mxu0 %v397
    %v3053 = vpop.f32.mrb[0].mxu0
    %v3054 = vadd.f32 %v2981, %v3053
    %v3055 = vpop.f32.mrb[0].mxu0
    %v3056 = vadd.f32 %v2983, %v3055
    %v3057 = vpop.f32.mrb[0].mxu0
    %v3058 = vadd.f32 %v2985, %v3057
    %v3059 = vpop.f32.mrb[0].mxu0
    %v3060 = vadd.f32 %v2987, %v3059
    %3061 = vmatprep.mubr.bf16.mxu0 %v422
    %3062 = vmatmul.mubr.bf16.gmra.mrb[0].mxu0 %v421
    %v3063 = vpop.f32.mrb[0].mxu0
    %v3064 = vadd.f32 %v2991, %v3063
    %v3065 = vpop.f32.mrb[0].mxu0
    %v3066 = vadd.f32 %v2993, %v3065
    %v3067 = vpop.f32.mrb[0].mxu0
    %v3068 = vadd.f32 %v2995, %v3067
    %v3069 = vpop.f32.mrb[0].mxu0
    %v3070 = vadd.f32 %v2997, %v3069
    %3071 = vdwg.mxu0
    %3072 = vmatprep.subr.bf16.mxu0 %v2098
    %3073 = vmatpush1.bf16.msra.mxu0 %v2097
    %3074 = vmatprep.subr.bf16.mxu0 %v2100
    %3075 = vmatpush1.bf16.msra.mxu0 %v2099
    %3076 = vmatprep.subr.bf16.mxu0 %v2102
    %3077 = vmatpush1.bf16.msra.mxu0 %v2101
    %3078 = vmatprep.subr.bf16.mxu0 %v2104
    %3079 = vmatpush1.bf16.msra.mxu0 %v2103
    %3080 = vmatprep.subr.bf16.mxu0 %v2106
    %3081 = vmatpush1.bf16.msra.mxu0 %v2105
    %3082 = vmatprep.subr.bf16.mxu0 %v2108
    %3083 = vmatpush1.bf16.msra.mxu0 %v2107
    %3084 = vmatprep.subr.bf16.mxu0 %v2110
    %3085 = vmatpush1.bf16.msra.mxu0 %v2109
    %3086 = vmatprep.subr.bf16.mxu0 %v2112
    %3087 = vmatpush1.bf16.msra.mxu0 %v2111
    %3088 = vmatprep.subr.bf16.mxu0 %v2114
    %3089 = vmatpush1.bf16.msra.mxu0 %v2113
    %3090 = vmatprep.subr.bf16.mxu0 %v2116
    %3091 = vmatpush1.bf16.msra.mxu0 %v2115
    %3092 = vmatprep.subr.bf16.mxu0 %v2118
    %3093 = vmatpush1.bf16.msra.mxu0 %v2117
    %3094 = vmatprep.subr.bf16.mxu0 %v2120
    %3095 = vmatpush1.bf16.msra.mxu0 %v2119
    %3096 = vmatprep.subr.bf16.mxu0 %v2122
    %3097 = vmatpush1.bf16.msra.mxu0 %v2121
    %3098 = vmatprep.subr.bf16.mxu0 %v2124
    %3099 = vmatpush1.bf16.msra.mxu0 %v2123
    %3100 = vmatprep.subr.bf16.mxu0 %v2126
    %3101 = vmatpush1.bf16.msra.mxu0 %v2125
    %3102 = vmatprep.subr.bf16.mxu0 %v2128
    %3103 = vmatpush1.bf16.msra.mxu0 %v2127
    %3104 = vmatprep.mubr.bf16.mxu0 %v352
    %3105 = vmatmul.mubr.bf16.gmra.mrb[0].mxu0 %v351
    %v3106 = vpop.f32.mrb[0].mxu0
    %v3107 = vadd.f32 %v3034, %v3106
    %v3108 = vpop.f32.mrb[0].mxu0
    %v3109 = vadd.f32 %v3036, %v3108
    %v3110 = vpop.f32.mrb[0].mxu0
    %v3111 = vadd.f32 %v3038, %v3110
    %v3112 = vpop.f32.mrb[0].mxu0
    %v3113 = vadd.f32 %v3040, %v3112
    %3114 = vmatprep.mubr.bf16.mxu0 %v376
    %3115 = vmatmul.mubr.bf16.gmra.mrb[0].mxu0 %v375
    %v3116 = vpop.f32.mrb[0].mxu0
    %v3117 = vadd.f32 %v3044, %v3116
    %v3118 = vpop.f32.mrb[0].mxu0
    %v3119 = vadd.f32 %v3046, %v3118
    %v3120 = vpop.f32.mrb[0].mxu0
    %v3121 = vadd.f32 %v3048, %v3120
    %v3122 = vpop.f32.mrb[0].mxu0
    %v3123 = vadd.f32 %v3050, %v3122
    %3124 = vmatprep.mubr.bf16.mxu0 %v400
    %3125 = vmatmul.mubr.bf16.gmra.mrb[0].mxu0 %v399
    %v3126 = vpop.f32.mrb[0].mxu0
    %v3127 = vadd.f32 %v3054, %v3126
    %v3128 = vpop.f32.mrb[0].mxu0
    %v3129 = vadd.f32 %v3056, %v3128
    %v3130 = vpop.f32.mrb[0].mxu0
    %v3131 = vadd.f32 %v3058, %v3130
    %v3132 = vpop.f32.mrb[0].mxu0
    %v3133 = vadd.f32 %v3060, %v3132
    %3134 = vmatprep.mubr.bf16.mxu0 %v424
    %3135 = vmatmul.mubr.bf16.gmra.mrb[0].mxu0 %v423
    %v3136 = vpop.f32.mrb[0].mxu0
    %v3137 = vadd.f32 %v3064, %v3136
    %v3138 = vpop.f32.mrb[0].mxu0
    %v3139 = vadd.f32 %v3066, %v3138
    %v3140 = vpop.f32.mrb[0].mxu0
    %v3141 = vadd.f32 %v3068, %v3140
    %v3142 = vpop.f32.mrb[0].mxu0
    %v3143 = vadd.f32 %v3070, %v3142
    %3144 = vdwg.mxu0
    %3145 = vmatprep.subr.bf16.mxu0 %v2130
    %3146 = vmatpush1.bf16.msra.mxu0 %v2129
    %3147 = vmatprep.subr.bf16.mxu0 %v2132
    %3148 = vmatpush1.bf16.msra.mxu0 %v2131
    %3149 = vmatprep.subr.bf16.mxu0 %v2134
    %3150 = vmatpush1.bf16.msra.mxu0 %v2133
    %3151 = vmatprep.subr.bf16.mxu0 %v2136
    %3152 = vmatpush1.bf16.msra.mxu0 %v2135
    %3153 = vmatprep.subr.bf16.mxu0 %v2138
    %3154 = vmatpush1.bf16.msra.mxu0 %v2137
    %3155 = vmatprep.subr.bf16.mxu0 %v2140
    %3156 = vmatpush1.bf16.msra.mxu0 %v2139
    %3157 = vmatprep.subr.bf16.mxu0 %v2142
    %3158 = vmatpush1.bf16.msra.mxu0 %v2141
    %3159 = vmatprep.subr.bf16.mxu0 %v2144
    %3160 = vmatpush1.bf16.msra.mxu0 %v2143
    %3161 = vmatprep.subr.bf16.mxu0 %v2146
    %3162 = vmatpush1.bf16.msra.mxu0 %v2145
    %3163 = vmatprep.subr.bf16.mxu0 %v2148
    %3164 = vmatpush1.bf16.msra.mxu0 %v2147
    %3165 = vmatprep.subr.bf16.mxu0 %v2150
    %3166 = vmatpush1.bf16.msra.mxu0 %v2149
    %3167 = vmatprep.subr.bf16.mxu0 %v2152
    %3168 = vmatpush1.bf16.msra.mxu0 %v2151
    %3169 = vmatprep.subr.bf16.mxu0 %v2154
    %3170 = vmatpush1.bf16.msra.mxu0 %v2153
    %3171 = vmatprep.subr.bf16.mxu0 %v2156
    %3172 = vmatpush1.bf16.msra.mxu0 %v2155
    %3173 = vmatprep.subr.bf16.mxu0 %v2158
    %3174 = vmatpush1.bf16.msra.mxu0 %v2157
    %3175 = vmatprep.subr.bf16.mxu0 %v2160
    %3176 = vmatpush1.bf16.msra.mxu0 %v2159
    %3177 = vmatprep.mubr.bf16.mxu0 %v354
    %3178 = vmatmul.mubr.bf16.gmra.mrb[0].mxu0 %v353
    %v3179 = vpop.f32.mrb[0].mxu0
    %v3180 = vadd.f32 %v3107, %v3179
    %v3181 = vpop.f32.mrb[0].mxu0
    %v3182 = vadd.f32 %v3109, %v3181
    %v3183 = vpop.f32.mrb[0].mxu0
    %v3184 = vadd.f32 %v3111, %v3183
    %v3185 = vpop.f32.mrb[0].mxu0
    %v3186 = vadd.f32 %v3113, %v3185
    %3187 = vmatprep.mubr.bf16.mxu0 %v378
    %3188 = vmatmul.mubr.bf16.gmra.mrb[0].mxu0 %v377
    %v3189 = vpop.f32.mrb[0].mxu0
    %v3190 = vadd.f32 %v3117, %v3189
    %v3191 = vpop.f32.mrb[0].mxu0
    %v3192 = vadd.f32 %v3119, %v3191
    %v3193 = vpop.f32.mrb[0].mxu0
    %v3194 = vadd.f32 %v3121, %v3193
    %v3195 = vpop.f32.mrb[0].mxu0
    %v3196 = vadd.f32 %v3123, %v3195
    %3197 = vmatprep.mubr.bf16.mxu0 %v402
    %3198 = vmatmul.mubr.bf16.gmra.mrb[0].mxu0 %v401
    %v3199 = vpop.f32.mrb[0].mxu0
    %v3200 = vadd.f32 %v3127, %v3199
    %v3201 = vpop.f32.mrb[0].mxu0
    %v3202 = vadd.f32 %v3129, %v3201
    %v3203 = vpop.f32.mrb[0].mxu0
    %v3204 = vadd.f32 %v3131, %v3203
    %v3205 = vpop.f32.mrb[0].mxu0
    %v3206 = vadd.f32 %v3133, %v3205
    %3207 = vmatprep.mubr.bf16.mxu0 %v426
    %3208 = vmatmul.mubr.bf16.gmra.mrb[0].mxu0 %v425
    %v3209 = vpop.f32.mrb[0].mxu0
    %v3210 = vadd.f32 %v3137, %v3209
    %v3211 = vpop.f32.mrb[0].mxu0
    %v3212 = vadd.f32 %v3139, %v3211
    %v3213 = vpop.f32.mrb[0].mxu0
    %v3214 = vadd.f32 %v3141, %v3213
    %v3215 = vpop.f32.mrb[0].mxu0
    %v3216 = vadd.f32 %v3143, %v3215
    %3217 = vdwg.mxu0
    %3218 = vmatprep.subr.bf16.mxu0 %v2162
    %3219 = vmatpush1.bf16.msra.mxu0 %v2161
    %3220 = vmatprep.subr.bf16.mxu0 %v2164
    %3221 = vmatpush1.bf16.msra.mxu0 %v2163
    %3222 = vmatprep.subr.bf16.mxu0 %v2166
    %3223 = vmatpush1.bf16.msra.mxu0 %v2165
    %3224 = vmatprep.subr.bf16.mxu0 %v2168
    %3225 = vmatpush1.bf16.msra.mxu0 %v2167
    %3226 = vmatprep.subr.bf16.mxu0 %v2170
    %3227 = vmatpush1.bf16.msra.mxu0 %v2169
    %3228 = vmatprep.subr.bf16.mxu0 %v2172
    %3229 = vmatpush1.bf16.msra.mxu0 %v2171
    %3230 = vmatprep.subr.bf16.mxu0 %v2174
    %3231 = vmatpush1.bf16.msra.mxu0 %v2173
    %3232 = vmatprep.subr.bf16.mxu0 %v2176
    %3233 = vmatpush1.bf16.msra.mxu0 %v2175
    %3234 = vmatprep.subr.bf16.mxu0 %v2178
    %3235 = vmatpush1.bf16.msra.mxu0 %v2177
    %3236 = vmatprep.subr.bf16.mxu0 %v2180
    %3237 = vmatpush1.bf16.msra.mxu0 %v2179
    %3238 = vmatprep.subr.bf16.mxu0 %v2182
    %3239 = vmatpush1.bf16.msra.mxu0 %v2181
    %3240 = vmatprep.subr.bf16.mxu0 %v2184
    %3241 = vmatpush1.bf16.msra.mxu0 %v2183
    %3242 = vmatprep.subr.bf16.mxu0 %v2186
    %3243 = vmatpush1.bf16.msra.mxu0 %v2185
    %3244 = vmatprep.subr.bf16.mxu0 %v2188
    %3245 = vmatpush1.bf16.msra.mxu0 %v2187
    %3246 = vmatprep.subr.bf16.mxu0 %v2190
    %3247 = vmatpush1.bf16.msra.mxu0 %v2189
    %3248 = vmatprep.subr.bf16.mxu0 %v2192
    %3249 = vmatpush1.bf16.msra.mxu0 %v2191
    %3250 = vmatprep.mubr.bf16.mxu0 %v356
    %3251 = vmatmul.mubr.bf16.gmra.mrb[0].mxu0 %v355
    %v3252 = vpop.f32.mrb[0].mxu0
    %v3253 = vadd.f32 %v3180, %v3252
    %v3254 = vpop.f32.mrb[0].mxu0
    %v3255 = vadd.f32 %v3182, %v3254
    %v3256 = vpop.f32.mrb[0].mxu0
    %v3257 = vadd.f32 %v3184, %v3256
    %v3258 = vpop.f32.mrb[0].mxu0
    %v3259 = vadd.f32 %v3186, %v3258
    %3260 = vmatprep.mubr.bf16.mxu0 %v380
    %3261 = vmatmul.mubr.bf16.gmra.mrb[0].mxu0 %v379
    %v3262 = vpop.f32.mrb[0].mxu0
    %v3263 = vadd.f32 %v3190, %v3262
    %v3264 = vpop.f32.mrb[0].mxu0
    %v3265 = vadd.f32 %v3192, %v3264
    %v3266 = vpop.f32.mrb[0].mxu0
    %v3267 = vadd.f32 %v3194, %v3266
    %v3268 = vpop.f32.mrb[0].mxu0
    %v3269 = vadd.f32 %v3196, %v3268
    %3270 = vmatprep.mubr.bf16.mxu0 %v404
    %3271 = vmatmul.mubr.bf16.gmra.mrb[0].mxu0 %v403
    %v3272 = vpop.f32.mrb[0].mxu0
    %v3273 = vadd.f32 %v3200, %v3272
    %v3274 = vpop.f32.mrb[0].mxu0
    %v3275 = vadd.f32 %v3202, %v3274
    %v3276 = vpop.f32.mrb[0].mxu0
    %v3277 = vadd.f32 %v3204, %v3276
    %v3278 = vpop.f32.mrb[0].mxu0
    %v3279 = vadd.f32 %v3206, %v3278
    %3280 = vmatprep.mubr.bf16.mxu0 %v428
    %3281 = vmatmul.mubr.bf16.gmra.mrb[0].mxu0 %v427
    %v3282 = vpop.f32.mrb[0].mxu0
    %v3283 = vadd.f32 %v3210, %v3282
    %v3284 = vpop.f32.mrb[0].mxu0
    %v3285 = vadd.f32 %v3212, %v3284
    %v3286 = vpop.f32.mrb[0].mxu0
    %v3287 = vadd.f32 %v3214, %v3286
    %v3288 = vpop.f32.mrb[0].mxu0
    %v3289 = vadd.f32 %v3216, %v3288
    %3290 = vdwg.mxu0
    %3291 = vmatprep.subr.bf16.mxu0 %v2194
    %3292 = vmatpush1.bf16.msra.mxu0 %v2193
    %3293 = vmatprep.subr.bf16.mxu0 %v2196
    %3294 = vmatpush1.bf16.msra.mxu0 %v2195
    %3295 = vmatprep.subr.bf16.mxu0 %v2198
    %3296 = vmatpush1.bf16.msra.mxu0 %v2197
    %3297 = vmatprep.subr.bf16.mxu0 %v2200
    %3298 = vmatpush1.bf16.msra.mxu0 %v2199
    %3299 = vmatprep.subr.bf16.mxu0 %v2202
    %3300 = vmatpush1.bf16.msra.mxu0 %v2201
    %3301 = vmatprep.subr.bf16.mxu0 %v2204
    %3302 = vmatpush1.bf16.msra.mxu0 %v2203
    %3303 = vmatprep.subr.bf16.mxu0 %v2206
    %3304 = vmatpush1.bf16.msra.mxu0 %v2205
    %3305 = vmatprep.subr.bf16.mxu0 %v2208
    %3306 = vmatpush1.bf16.msra.mxu0 %v2207
    %3307 = vmatprep.subr.bf16.mxu0 %v2210
    %3308 = vmatpush1.bf16.msra.mxu0 %v2209
    %3309 = vmatprep.subr.bf16.mxu0 %v2212
    %3310 = vmatpush1.bf16.msra.mxu0 %v2211
    %3311 = vmatprep.subr.bf16.mxu0 %v2214
    %3312 = vmatpush1.bf16.msra.mxu0 %v2213
    %3313 = vmatprep.subr.bf16.mxu0 %v2216
    %3314 = vmatpush1.bf16.msra.mxu0 %v2215
    %3315 = vmatprep.subr.bf16.mxu0 %v2218
    %3316 = vmatpush1.bf16.msra.mxu0 %v2217
    %3317 = vmatprep.subr.bf16.mxu0 %v2220
    %3318 = vmatpush1.bf16.msra.mxu0 %v2219
    %3319 = vmatprep.subr.bf16.mxu0 %v2222
    %3320 = vmatpush1.bf16.msra.mxu0 %v2221
    %3321 = vmatprep.subr.bf16.mxu0 %v2224
    %3322 = vmatpush1.bf16.msra.mxu0 %v2223
    %3323 = vmatprep.mubr.bf16.mxu0 %v358
    %3324 = vmatmul.mubr.bf16.gmra.mrb[0].mxu0 %v357
    %v3325 = vpop.f32.mrb[0].mxu0
    %v3326 = vadd.f32 %v3253, %v3325
    %v3327 = vpop.f32.mrb[0].mxu0
    %v3328 = vadd.f32 %v3255, %v3327
    %v3329 = vpop.f32.mrb[0].mxu0
    %v3330 = vadd.f32 %v3257, %v3329
    %v3331 = vpop.f32.mrb[0].mxu0
    %v3332 = vadd.f32 %v3259, %v3331
    %3333 = vmatprep.mubr.bf16.mxu0 %v382
    %3334 = vmatmul.mubr.bf16.gmra.mrb[0].mxu0 %v381
    %v3335 = vpop.f32.mrb[0].mxu0
    %v3336 = vadd.f32 %v3263, %v3335
    %v3337 = vpop.f32.mrb[0].mxu0
    %v3338 = vadd.f32 %v3265, %v3337
    %v3339 = vpop.f32.mrb[0].mxu0
    %v3340 = vadd.f32 %v3267, %v3339
    %v3341 = vpop.f32.mrb[0].mxu0
    %v3342 = vadd.f32 %v3269, %v3341
    %3343 = vmatprep.mubr.bf16.mxu0 %v406
    %3344 = vmatmul.mubr.bf16.gmra.mrb[0].mxu0 %v405
    %v3345 = vpop.f32.mrb[0].mxu0
    %v3346 = vadd.f32 %v3273, %v3345
    %v3347 = vpop.f32.mrb[0].mxu0
    %v3348 = vadd.f32 %v3275, %v3347
    %v3349 = vpop.f32.mrb[0].mxu0
    %v3350 = vadd.f32 %v3277, %v3349
    %v3351 = vpop.f32.mrb[0].mxu0
    %v3352 = vadd.f32 %v3279, %v3351
    %3353 = vmatprep.mubr.bf16.mxu0 %v430
    %3354 = vmatmul.mubr.bf16.gmra.mrb[0].mxu0 %v429
    %v3355 = vpop.f32.mrb[0].mxu0
    %v3356 = vadd.f32 %v3283, %v3355
    %v3357 = vpop.f32.mrb[0].mxu0
    %v3358 = vadd.f32 %v3285, %v3357
    %v3359 = vpop.f32.mrb[0].mxu0
    %v3360 = vadd.f32 %v3287, %v3359
    %v3361 = vpop.f32.mrb[0].mxu0
    %v3362 = vadd.f32 %v3289, %v3361
    %3363 = vdwg.mxu0
    %3364 = vmatprep.subr.bf16.mxu0 %v2226
    %3365 = vmatpush1.bf16.msra.mxu0 %v2225
    %3366 = vmatprep.subr.bf16.mxu0 %v2228
    %3367 = vmatpush1.bf16.msra.mxu0 %v2227
    %3368 = vmatprep.subr.bf16.mxu0 %v2230
    %3369 = vmatpush1.bf16.msra.mxu0 %v2229
    %3370 = vmatprep.subr.bf16.mxu0 %v2232
    %3371 = vmatpush1.bf16.msra.mxu0 %v2231
    %3372 = vmatprep.subr.bf16.mxu0 %v2234
    %3373 = vmatpush1.bf16.msra.mxu0 %v2233
    %3374 = vmatprep.subr.bf16.mxu0 %v2236
    %3375 = vmatpush1.bf16.msra.mxu0 %v2235
    %3376 = vmatprep.subr.bf16.mxu0 %v2238
    %3377 = vmatpush1.bf16.msra.mxu0 %v2237
    %3378 = vmatprep.subr.bf16.mxu0 %v2240
    %3379 = vmatpush1.bf16.msra.mxu0 %v2239
    %3380 = vmatprep.subr.bf16.mxu0 %v2242
    %3381 = vmatpush1.bf16.msra.mxu0 %v2241
    %3382 = vmatprep.subr.bf16.mxu0 %v2244
    %3383 = vmatpush1.bf16.msra.mxu0 %v2243
    %3384 = vmatprep.subr.bf16.mxu0 %v2246
    %3385 = vmatpush1.bf16.msra.mxu0 %v2245
    %3386 = vmatprep.subr.bf16.mxu0 %v2248
    %3387 = vmatpush1.bf16.msra.mxu0 %v2247
    %3388 = vmatprep.subr.bf16.mxu0 %v2250
    %3389 = vmatpush1.bf16.msra.mxu0 %v2249
    %3390 = vmatprep.subr.bf16.mxu0 %v2252
    %3391 = vmatpush1.bf16.msra.mxu0 %v2251
    %3392 = vmatprep.subr.bf16.mxu0 %v2254
    %3393 = vmatpush1.bf16.msra.mxu0 %v2253
    %3394 = vmatprep.subr.bf16.mxu0 %v2256
    %3395 = vmatpush1.bf16.msra.mxu0 %v2255
    %3396 = vmatprep.mubr.bf16.mxu0 %v360
    %3397 = vmatmul.mubr.bf16.gmra.mrb[0].mxu0 %v359
    %v3398 = vpop.f32.mrb[0].mxu0
    %v3399 = vadd.f32 %v3326, %v3398
    %v3400 = vpop.f32.mrb[0].mxu0
    %v3401 = vadd.f32 %v3328, %v3400
    %v3402 = vpop.f32.mrb[0].mxu0
    %v3403 = vadd.f32 %v3330, %v3402
    %v3404 = vpop.f32.mrb[0].mxu0
    %v3405 = vadd.f32 %v3332, %v3404
    %3406 = vmatprep.mubr.bf16.mxu0 %v384
    %3407 = vmatmul.mubr.bf16.gmra.mrb[0].mxu0 %v383
    %v3408 = vpop.f32.mrb[0].mxu0
    %v3409 = vadd.f32 %v3336, %v3408
    %v3410 = vpop.f32.mrb[0].mxu0
    %v3411 = vadd.f32 %v3338, %v3410
    %v3412 = vpop.f32.mrb[0].mxu0
    %v3413 = vadd.f32 %v3340, %v3412
    %v3414 = vpop.f32.mrb[0].mxu0
    %v3415 = vadd.f32 %v3342, %v3414
    %3416 = vmatprep.mubr.bf16.mxu0 %v408
    %3417 = vmatmul.mubr.bf16.gmra.mrb[0].mxu0 %v407
    %v3418 = vpop.f32.mrb[0].mxu0
    %v3419 = vadd.f32 %v3346, %v3418
    %v3420 = vpop.f32.mrb[0].mxu0
    %v3421 = vadd.f32 %v3348, %v3420
    %v3422 = vpop.f32.mrb[0].mxu0
    %v3423 = vadd.f32 %v3350, %v3422
    %v3424 = vpop.f32.mrb[0].mxu0
    %v3425 = vadd.f32 %v3352, %v3424
    %3426 = vmatprep.mubr.bf16.mxu0 %v432
    %3427 = vmatmul.mubr.bf16.gmra.mrb[0].mxu0 %v431
    %v3428 = vpop.f32.mrb[0].mxu0
    %v3429 = vadd.f32 %v3356, %v3428
    %v3430 = vpop.f32.mrb[0].mxu0
    %v3431 = vadd.f32 %v3358, %v3430
    %v3432 = vpop.f32.mrb[0].mxu0
    %v3433 = vadd.f32 %v3360, %v3432
    %v3434 = vpop.f32.mrb[0].mxu0
    %v3435 = vadd.f32 %v3362, %v3434
    %3436 = vdwg.mxu0
    %3437 = vmatprep.subr.bf16.mxu0 %v2258
    %3438 = vmatpush1.bf16.msra.mxu0 %v2257
    %3439 = vmatprep.subr.bf16.mxu0 %v2260
    %3440 = vmatpush1.bf16.msra.mxu0 %v2259
    %3441 = vmatprep.subr.bf16.mxu0 %v2262
    %3442 = vmatpush1.bf16.msra.mxu0 %v2261
    %3443 = vmatprep.subr.bf16.mxu0 %v2264
    %3444 = vmatpush1.bf16.msra.mxu0 %v2263
    %3445 = vmatprep.subr.bf16.mxu0 %v2266
    %3446 = vmatpush1.bf16.msra.mxu0 %v2265
    %3447 = vmatprep.subr.bf16.mxu0 %v2268
    %3448 = vmatpush1.bf16.msra.mxu0 %v2267
    %3449 = vmatprep.subr.bf16.mxu0 %v2270
    %3450 = vmatpush1.bf16.msra.mxu0 %v2269
    %3451 = vmatprep.subr.bf16.mxu0 %v2272
    %3452 = vmatpush1.bf16.msra.mxu0 %v2271
    %3453 = vmatprep.subr.bf16.mxu0 %v2274
    %3454 = vmatpush1.bf16.msra.mxu0 %v2273
    %3455 = vmatprep.subr.bf16.mxu0 %v2276
    %3456 = vmatpush1.bf16.msra.mxu0 %v2275
    %3457 = vmatprep.subr.bf16.mxu0 %v2278
    %3458 = vmatpush1.bf16.msra.mxu0 %v2277
    %3459 = vmatprep.subr.bf16.mxu0 %v2280
    %3460 = vmatpush1.bf16.msra.mxu0 %v2279
    %3461 = vmatprep.subr.bf16.mxu0 %v2282
    %3462 = vmatpush1.bf16.msra.mxu0 %v2281
    %3463 = vmatprep.subr.bf16.mxu0 %v2284
    %3464 = vmatpush1.bf16.msra.mxu0 %v2283
    %3465 = vmatprep.subr.bf16.mxu0 %v2286
    %3466 = vmatpush1.bf16.msra.mxu0 %v2285
    %3467 = vmatprep.subr.bf16.mxu0 %v2288
    %3468 = vmatpush1.bf16.msra.mxu0 %v2287
    %3469 = vmatprep.mubr.bf16.mxu0 %v362
    %3470 = vmatmul.mubr.bf16.gmra.mrb[0].mxu0 %v361
    %v3471 = vpop.f32.mrb[0].mxu0
    %v3472 = vadd.f32 %v3399, %v3471
    %v3473 = vpop.f32.mrb[0].mxu0
    %v3474 = vadd.f32 %v3401, %v3473
    %v3475 = vpop.f32.mrb[0].mxu0
    %v3476 = vadd.f32 %v3403, %v3475
    %v3477 = vpop.f32.mrb[0].mxu0
    %v3478 = vadd.f32 %v3405, %v3477
    %3479 = vmatprep.mubr.bf16.mxu0 %v386
    %3480 = vmatmul.mubr.bf16.gmra.mrb[0].mxu0 %v385
    %v3481 = vpop.f32.mrb[0].mxu0
    %v3482 = vadd.f32 %v3409, %v3481
    %v3483 = vpop.f32.mrb[0].mxu0
    %v3484 = vadd.f32 %v3411, %v3483
    %v3485 = vpop.f32.mrb[0].mxu0
    %v3486 = vadd.f32 %v3413, %v3485
    %v3487 = vpop.f32.mrb[0].mxu0
    %v3488 = vadd.f32 %v3415, %v3487
    %3489 = vmatprep.mubr.bf16.mxu0 %v410
    %3490 = vmatmul.mubr.bf16.gmra.mrb[0].mxu0 %v409
    %v3491 = vpop.f32.mrb[0].mxu0
    %v3492 = vadd.f32 %v3419, %v3491
    %v3493 = vpop.f32.mrb[0].mxu0
    %v3494 = vadd.f32 %v3421, %v3493
    %v3495 = vpop.f32.mrb[0].mxu0
    %v3496 = vadd.f32 %v3423, %v3495
    %v3497 = vpop.f32.mrb[0].mxu0
    %v3498 = vadd.f32 %v3425, %v3497
    %3499 = vmatprep.mubr.bf16.mxu0 %v434
    %3500 = vmatmul.mubr.bf16.gmra.mrb[0].mxu0 %v433
    %v3501 = vpop.f32.mrb[0].mxu0
    %v3502 = vadd.f32 %v3429, %v3501
    %v3503 = vpop.f32.mrb[0].mxu0
    %v3504 = vadd.f32 %v3431, %v3503
    %v3505 = vpop.f32.mrb[0].mxu0
    %v3506 = vadd.f32 %v3433, %v3505
    %v3507 = vpop.f32.mrb[0].mxu0
    %v3508 = vadd.f32 %v3435, %v3507
    %3509 = vdwg.mxu0
    %3510 = vmatprep.subr.bf16.mxu0 %v2290
    %3511 = vmatpush1.bf16.msra.mxu0 %v2289
    %3512 = vmatprep.subr.bf16.mxu0 %v2292
    %3513 = vmatpush1.bf16.msra.mxu0 %v2291
    %3514 = vmatprep.subr.bf16.mxu0 %v2294
    %3515 = vmatpush1.bf16.msra.mxu0 %v2293
    %3516 = vmatprep.subr.bf16.mxu0 %v2296
    %3517 = vmatpush1.bf16.msra.mxu0 %v2295
    %3518 = vmatprep.subr.bf16.mxu0 %v2298
    %3519 = vmatpush1.bf16.msra.mxu0 %v2297
    %3520 = vmatprep.subr.bf16.mxu0 %v2300
    %3521 = vmatpush1.bf16.msra.mxu0 %v2299
    %3522 = vmatprep.subr.bf16.mxu0 %v2302
    %3523 = vmatpush1.bf16.msra.mxu0 %v2301
    %3524 = vmatprep.subr.bf16.mxu0 %v2304
    %3525 = vmatpush1.bf16.msra.mxu0 %v2303
    %3526 = vmatprep.subr.bf16.mxu0 %v2306
    %3527 = vmatpush1.bf16.msra.mxu0 %v2305
    %3528 = vmatprep.subr.bf16.mxu0 %v2308
    %3529 = vmatpush1.bf16.msra.mxu0 %v2307
    %3530 = vmatprep.subr.bf16.mxu0 %v2310
    %3531 = vmatpush1.bf16.msra.mxu0 %v2309
    %3532 = vmatprep.subr.bf16.mxu0 %v2705
    %3533 = vmatpush1.bf16.msra.mxu0 %v2702
    %3534 = vmatprep.subr.bf16.mxu0 0
    %3535 = vmatpush1.bf16.msra.mxu0 0
    %3536 = vmatprep.subr.bf16.mxu0 0
    %3537 = vmatpush1.bf16.msra.mxu0 0
    %3538 = vmatprep.subr.bf16.mxu0 0
    %3539 = vmatpush1.bf16.msra.mxu0 0
    %3540 = vmatprep.subr.bf16.mxu0 0
    %3541 = vmatpush1.bf16.msra.mxu0 0
    %3542 = vmatprep.mubr.bf16.mxu0 %v2689
    %3543 = vmatmul.mubr.bf16.gmra.mrb[0].mxu0 %v363
    %v3544 = vpop.f32.mrb[0].mxu0
    %v3545 = vadd.f32 %v3472, %v3544
    %v3546 = vpop.f32.mrb[0].mxu0
    %v3547 = vadd.f32 %v3474, %v3546
    %v3548 = vpop.f32.mrb[0].mxu0
    %v3549 = vadd.f32 %v3476, %v3548
    %v3550 = vpop.f32.mrb[0].mxu0
    %v3551 = vadd.f32 %v3478, %v3550
    %3552 = vmatprep.mubr.bf16.mxu0 %v2692
    %3553 = vmatmul.mubr.bf16.gmra.mrb[0].mxu0 %v387
    %v3554 = vpop.f32.mrb[0].mxu0
    %v3555 = vadd.f32 %v3482, %v3554
    %v3556 = vpop.f32.mrb[0].mxu0
    %v3557 = vadd.f32 %v3484, %v3556
    %v3558 = vpop.f32.mrb[0].mxu0
    %v3559 = vadd.f32 %v3486, %v3558
    %v3560 = vpop.f32.mrb[0].mxu0
    %v3561 = vadd.f32 %v3488, %v3560
    %3562 = vmatprep.mubr.bf16.mxu0 %v2695
    %3563 = vmatmul.mubr.bf16.gmra.mrb[0].mxu0 %v411
    %v3564 = vpop.f32.mrb[0].mxu0
    %v3565 = vadd.f32 %v3492, %v3564
    %v3566 = vpop.f32.mrb[0].mxu0
    %v3567 = vadd.f32 %v3494, %v3566
    %v3568 = vpop.f32.mrb[0].mxu0
    %v3569 = vadd.f32 %v3496, %v3568
    %v3570 = vpop.f32.mrb[0].mxu0
    %v3571 = vadd.f32 %v3498, %v3570
    %3572 = vmatprep.mubr.bf16.mxu0 %v2698
    %3573 = vmatmul.mubr.bf16.gmra.mrb[0].mxu0 %v435
    %v3574 = vpop.f32.mrb[0].mxu0
    %v3575 = vadd.f32 %v3502, %v3574
    %v3576 = vpop.f32.mrb[0].mxu0
    %v3577 = vadd.f32 %v3504, %v3576
    %v3578 = vpop.f32.mrb[0].mxu0
    %v3579 = vadd.f32 %v3506, %v3578
    %v3580 = vpop.f32.mrb[0].mxu0
    %v3581 = vadd.f32 %v3508, %v3580
    %3582 = vdwg.mxu0
    %v3583 = vld [vmem:[#allocation9] sm:$0x3]
    %v3585 = vlaneseq
    %v3586 = vshrl.u32 %v3585, 7
    %v3587 = vsub.s32 0, %v3586
    %v3588 = vrot.slane %v3583, %v3587
    %v3589 = vlaneseq
    %v3590 = vshrl.u32 %v3589, 7
    %v3591 = vsub.s32 1, %v3590
    %v3592 = vrot.slane %v3583, %v3591
    %vm3595 = vcmask 523264
    %v3597 = vsel %vm3595, %v141, 0
    %v3600 = vsel %vm3595, %v142, 0
    %v3603 = vsel %vm3595, %v143, 0
    %v3606 = vsel %vm3595, %v144, 0
    %v3609 = vsel %vm3595, %v145, 0
    %v3612 = vsel %vm3595, %v146, 0
    %v3615 = vsel %vm3595, %v147, 0
    %v3618 = vsel %vm3595, %v148, 0
    %3620 = vmatprep.subr.mxu0 %v3547
    %3621 = vmatpush1.msra.mxu0 %v3545
    %3622 = vmatprep.subr.mxu0 %v3551
    %3623 = vmatpush1.msra.mxu0 %v3549
    %3624 = vmatprep.subr.mxu0 %v3557
    %3625 = vmatpush1.msra.mxu0 %v3555
    %3626 = vmatprep.subr.mxu0 %v3561
    %3627 = vmatpush1.msra.mxu0 %v3559
    %3628 = vmatprep.subr.mxu0 %v3567
    %3629 = vmatpush1.msra.mxu0 %v3565
    %3630 = vmatprep.subr.mxu0 %v3571
    %3631 = vmatpush1.msra.mxu0 %v3569
    %3632 = vmatprep.subr.mxu0 %v3577
    %3633 = vmatpush1.msra.mxu0 %v3575
    %3634 = vmatprep.subr.mxu0 %v3581
    %3635 = vmatpush1.msra.mxu0 %v3579
    %3636 = vmatprep.subr.mxu0 0.0
    %3637 = vmatpush1.msra.mxu0 0.0
    %3638 = vmatprep.subr.mxu0 0.0
    %3639 = vmatpush1.msra.mxu0 0.0
    %3640 = vmatprep.subr.mxu0 0.0
    %3641 = vmatpush1.msra.mxu0 0.0
    %3642 = vmatprep.subr.mxu0 0.0
    %3643 = vmatpush1.msra.mxu0 0.0
    %3644 = vmatprep.subr.mxu0 0.0
    %3645 = vmatpush1.msra.mxu0 0.0
    %3646 = vmatprep.subr.mxu0 0.0
    %3647 = vmatpush1.msra.mxu0 0.0
    %3648 = vmatprep.subr.mxu0 0.0
    %3649 = vmatpush1.msra.mxu0 0.0
    %3650 = vmatprep.subr.mxu0 0.0
    %3651 = vmatpush1.msra.mxu0 0.0
    %3652 = vmatprep.subr.mxu0 0.0
    %3653 = vmatpush1.msra.mxu0 0.0
    %3654 = vmatprep.subr.mxu0 0.0
    %3655 = vmatpush1.msra.mxu0 0.0
    %3656 = vmatprep.subr.mxu0 0.0
    %3657 = vmatpush1.msra.mxu0 0.0
    %3658 = vmatprep.subr.mxu0 0.0
    %3659 = vmatpush1.msra.mxu0 0.0
    %3660 = vmatprep.subr.mxu0 0.0
    %3661 = vmatpush1.msra.mxu0 0.0
    %3662 = vmatprep.subr.mxu0 0.0
    %3663 = vmatpush1.msra.mxu0 0.0
    %3664 = vmatprep.subr.mxu0 0.0
    %3665 = vmatpush1.msra.mxu0 0.0
    %3666 = vmatprep.subr.mxu0 0.0
    %3667 = vmatpush1.msra.mxu0 0.0
    %3668 = vmatprep.subr.mxu0 0.0
    %3669 = vmatpush1.msra.mxu0 0.0
    %3670 = vmatprep.subr.mxu0 0.0
    %3671 = vmatpush1.msra.mxu0 0.0
    %3672 = vmatprep.subr.mxu0 0.0
    %3673 = vmatpush1.msra.mxu0 0.0
    %3674 = vmatprep.subr.mxu0 0.0
    %3675 = vmatpush1.msra.mxu0 0.0
    %3676 = vmatprep.subr.mxu0 0.0
    %3677 = vmatpush1.msra.mxu0 0.0
    %3678 = vmatprep.subr.mxu0 0.0
    %3679 = vmatpush1.msra.mxu0 0.0
    %3680 = vmatprep.subr.mxu0 0.0
    %3681 = vmatpush1.msra.mxu0 0.0
    %3682 = vmatprep.subr.mxu0 0.0
    %3683 = vmatpush1.msra.mxu0 0.0
    %3684 = vmatprep.mubr.f32.mxu0 0.0
    %3685 = vmatmul.mubr.f32.gmra.mrb[0].mxu0 %v3597
    %v3686 = vpop.f32.mrb[0].mxu0
    %v3687 = vadd.f32 %v3588, %v3686
    %v3688 = vpop.f32.mrb[0].mxu0
    %v3689 = vadd.f32 %v3592, %v3688
    %3690 = vmatprep.mubr.f32.mxu0 0.0
    %3691 = vmatmul.mubr.f32.gmra.mrb[0].mxu0 %v3600
    %v3692 = vpop.f32.mrb[0].mxu0
    %v3693 = vadd.f32 %v3588, %v3692
    %v3694 = vpop.f32.mrb[0].mxu0
    %v3695 = vadd.f32 %v3592, %v3694
    %3696 = vmatprep.mubr.f32.mxu0 0.0
    %3697 = vmatmul.mubr.f32.gmra.mrb[0].mxu0 %v3603
    %v3698 = vpop.f32.mrb[0].mxu0
    %v3699 = vadd.f32 %v3588, %v3698
    %v3700 = vpop.f32.mrb[0].mxu0
    %v3701 = vadd.f32 %v3592, %v3700
    %3702 = vmatprep.mubr.f32.mxu0 0.0
    %3703 = vmatmul.mubr.f32.gmra.mrb[0].mxu0 %v3606
    %v3704 = vpop.f32.mrb[0].mxu0
    %v3705 = vadd.f32 %v3588, %v3704
    %v3706 = vpop.f32.mrb[0].mxu0
    %v3707 = vadd.f32 %v3592, %v3706
    %3708 = vmatprep.mubr.f32.mxu0 0.0
    %3709 = vmatmul.mubr.f32.gmra.mrb[0].mxu0 %v3609
    %v3710 = vpop.f32.mrb[0].mxu0
    %v3711 = vadd.f32 %v3588, %v3710
    %v3712 = vpop.f32.mrb[0].mxu0
    %v3713 = vadd.f32 %v3592, %v3712
    %3714 = vmatprep.mubr.f32.mxu0 0.0
    %3715 = vmatmul.mubr.f32.gmra.mrb[0].mxu0 %v3612
    %v3716 = vpop.f32.mrb[0].mxu0
    %v3717 = vadd.f32 %v3588, %v3716
    %v3718 = vpop.f32.mrb[0].mxu0
    %v3719 = vadd.f32 %v3592, %v3718
    %3720 = vmatprep.mubr.f32.mxu0 0.0
    %3721 = vmatmul.mubr.f32.gmra.mrb[0].mxu0 %v3615
    %v3722 = vpop.f32.mrb[0].mxu0
    %v3723 = vadd.f32 %v3588, %v3722
    %v3724 = vpop.f32.mrb[0].mxu0
    %v3725 = vadd.f32 %v3592, %v3724
    %3726 = vmatprep.mubr.f32.mxu0 0.0
    %3727 = vmatmul.mubr.f32.gmra.mrb[0].mxu0 %v3618
    %v3728 = vpop.f32.mrb[0].mxu0
    %v3729 = vadd.f32 %v3588, %v3728
    %v3730 = vpop.f32.mrb[0].mxu0
    %v3731 = vadd.f32 %v3592, %v3730
    %3732 = vdwg.mxu0
    %v3733 = vmax.f32 %v3687, 0.0
    %v3734 = vmax.f32 %v3689, 0.0
    %v3735 = vmax.f32 %v3693, 0.0
    %v3736 = vmax.f32 %v3695, 0.0
    %v3737 = vmax.f32 %v3699, 0.0
    %v3738 = vmax.f32 %v3701, 0.0
    %v3739 = vmax.f32 %v3705, 0.0
    %v3740 = vmax.f32 %v3707, 0.0
    %v3741 = vmax.f32 %v3711, 0.0
    %v3742 = vmax.f32 %v3713, 0.0
    %v3743 = vmax.f32 %v3717, 0.0
    %v3744 = vmax.f32 %v3719, 0.0
    %v3745 = vmax.f32 %v3723, 0.0
    %v3746 = vmax.f32 %v3725, 0.0
    %v3747 = vmax.f32 %v3729, 0.0
    %v3748 = vmax.f32 %v3731, 0.0
    %v3749 = vpack.c.bf16 %v3735, %v3733
    %v3750 = vpack.c.bf16 %v3736, %v3734
    %v3751 = vpack.c.bf16 %v3739, %v3737
    %v3752 = vpack.c.bf16 %v3740, %v3738
    %v3753 = vpack.c.bf16 %v3743, %v3741
    %v3754 = vpack.c.bf16 %v3744, %v3742
    %v3755 = vpack.c.bf16 %v3747, %v3745
    %v3756 = vpack.c.bf16 %v3748, %v3746
    %v3757 = vld [vmem:[#allocation11] sm:$0xf]
    %v3758 = vld [vmem:[#allocation11 + $0x4] sm:$0xf]
    %v3759 = vld [vmem:[#allocation11 + $0x8] sm:$0xf]
    %v3760 = vld [vmem:[#allocation11 + $0xc] sm:$0xf]
    %v3761 = vld [vmem:[#allocation11 + $0x10] sm:$0xf]
    %v3762 = vld [vmem:[#allocation11 + $0x14] sm:$0xf]
    %v3763 = vld [vmem:[#allocation11 + $0x18] sm:$0xf]
    %v3764 = vld [vmem:[#allocation11 + $0x1c] sm:$0xf]
    %v3765 = vld [vmem:[#allocation11 + $0x20] sm:$0xf]
    %v3766 = vld [vmem:[#allocation11 + $0x24] sm:$0xf]
    %v3767 = vld [vmem:[#allocation11 + $0x28] sm:$0xf]
    %v3768 = vld [vmem:[#allocation11 + $0x2c] sm:$0xf]
    %v3769 = vld [vmem:[#allocation11 + $0x30] sm:$0xf]
    %v3770 = vld [vmem:[#allocation11 + $0x34] sm:$0xf]
    %v3771 = vld [vmem:[#allocation11 + $0x38] sm:$0xf]
    %v3772 = vld [vmem:[#allocation11 + $0x3c] sm:$0xf]
    %v3773 = vld [vmem:[#allocation11 + $0x40] sm:$0xf]
    %v3774 = vld [vmem:[#allocation11 + $0x44] sm:$0xf]
    %v3775 = vld [vmem:[#allocation11 + $0x48] sm:$0xf]
    %v3776 = vld [vmem:[#allocation11 + $0x4c] sm:$0xf]
    %v3777 = vld [vmem:[#allocation11 + $0x50] sm:$0xf]
    %v3778 = vld [vmem:[#allocation11 + $0x54] sm:$0xf]
    %v3779 = vld [vmem:[#allocation11 + $0x58] sm:$0xf]
    %v3780 = vld [vmem:[#allocation11 + $0x5c] sm:$0xf]
    %v3781 = vld [vmem:[#allocation11 + $0x60] sm:$0xf]
    %v3782 = vld [vmem:[#allocation11 + $0x64] sm:$0xf]
    %v3783 = vld [vmem:[#allocation11 + $0x68] sm:$0xf]
    %v3784 = vld [vmem:[#allocation11 + $0x6c] sm:$0xf]
    %v3785 = vld [vmem:[#allocation11 + $0x70] sm:$0xf]
    %v3786 = vld [vmem:[#allocation11 + $0x74] sm:$0xf]
    %v3787 = vld [vmem:[#allocation11 + $0x78] sm:$0xf]
    %v3788 = vld [vmem:[#allocation11 + $0x7c] sm:$0xf]
    %v3821 = vunpack.c.l.b16 %v3757
    %v3822 = vunpack.c.l.b16 %v3758
    %v3823 = vunpack.c.l.b16 %v3759
    %v3824 = vunpack.c.l.b16 %v3760
    %v3825 = vunpack.c.l.b16 %v3761
    %v3826 = vunpack.c.l.b16 %v3762
    %v3827 = vunpack.c.l.b16 %v3763
    %v3828 = vunpack.c.l.b16 %v3764
    %v3829 = vunpack.c.l.b16 %v3765
    %v3830 = vunpack.c.l.b16 %v3766
    %v3831 = vunpack.c.l.b16 %v3767
    %v3832 = vunpack.c.l.b16 %v3768
    %v3833 = vunpack.c.l.b16 %v3769
    %v3834 = vunpack.c.l.b16 %v3770
    %v3835 = vunpack.c.l.b16 %v3771
    %v3836 = vunpack.c.l.b16 %v3772
    %v3837 = vunpack.c.l.b16 %v3773
    %v3838 = vunpack.c.l.b16 %v3774
    %v3839 = vunpack.c.l.b16 %v3775
    %v3840 = vunpack.c.l.b16 %v3776
    %v3841 = vunpack.c.l.b16 %v3777
    %v3842 = vunpack.c.l.b16 %v3778
    %v3843 = vunpack.c.l.b16 %v3779
    %v3844 = vunpack.c.l.b16 %v3780
    %v3845 = vunpack.c.l.b16 %v3781
    %v3846 = vunpack.c.l.b16 %v3782
    %v3847 = vunpack.c.l.b16 %v3783
    %v3848 = vunpack.c.l.b16 %v3784
    %v3849 = vunpack.c.l.b16 %v3785
    %v3850 = vunpack.c.l.b16 %v3786
    %v3851 = vunpack.c.l.b16 %v3787
    %v3852 = vunpack.c.l.b16 %v3788
    %v3853 = vpack.c.b16 %v3822, %v3821
    %v3854 = vpack.c.b16 %v3824, %v3823
    %v3855 = vpack.c.b16 %v3826, %v3825
    %v3856 = vpack.c.b16 %v3828, %v3827
    %v3857 = vpack.c.b16 %v3830, %v3829
    %v3858 = vpack.c.b16 %v3832, %v3831
    %v3859 = vpack.c.b16 %v3834, %v3833
    %v3860 = vpack.c.b16 %v3836, %v3835
    %v3861 = vpack.c.b16 %v3838, %v3837
    %v3862 = vpack.c.b16 %v3840, %v3839
    %v3863 = vpack.c.b16 %v3842, %v3841
    %v3864 = vpack.c.b16 %v3844, %v3843
    %v3865 = vpack.c.b16 %v3846, %v3845
    %v3866 = vpack.c.b16 %v3848, %v3847
    %v3867 = vpack.c.b16 %v3850, %v3849
    %v3868 = vpack.c.b16 %v3852, %v3851
    %3885 = vmatprep.subr.bf16.mxu0 0
    %3886 = vmatpush1.bf16.msra.mxu0 %v3853
    %3887 = vmatprep.subr.bf16.mxu0 0
    %3888 = vmatpush1.bf16.msra.mxu0 %v3854
    %3889 = vmatprep.subr.bf16.mxu0 0
    %3890 = vmatpush1.bf16.msra.mxu0 %v3855
    %3891 = vmatprep.subr.bf16.mxu0 0
    %3892 = vmatpush1.bf16.msra.mxu0 %v3856
    %3893 = vmatprep.subr.bf16.mxu0 0
    %3894 = vmatpush1.bf16.msra.mxu0 %v3857
    %3895 = vmatprep.subr.bf16.mxu0 0
    %3896 = vmatpush1.bf16.msra.mxu0 %v3858
    %3897 = vmatprep.subr.bf16.mxu0 0
    %3898 = vmatpush1.bf16.msra.mxu0 %v3859
    %3899 = vmatprep.subr.bf16.mxu0 0
    %3900 = vmatpush1.bf16.msra.mxu0 %v3860
    %3901 = vmatprep.subr.bf16.mxu0 0
    %3902 = vmatpush1.bf16.msra.mxu0 %v3861
    %3903 = vmatprep.subr.bf16.mxu0 0
    %3904 = vmatpush1.bf16.msra.mxu0 %v3862
    %3905 = vmatprep.subr.bf16.mxu0 0
    %3906 = vmatpush1.bf16.msra.mxu0 %v3863
    %3907 = vmatprep.subr.bf16.mxu0 0
    %3908 = vmatpush1.bf16.msra.mxu0 %v3864
    %3909 = vmatprep.subr.bf16.mxu0 0
    %3910 = vmatpush1.bf16.msra.mxu0 %v3865
    %3911 = vmatprep.subr.bf16.mxu0 0
    %3912 = vmatpush1.bf16.msra.mxu0 %v3866
    %3913 = vmatprep.subr.bf16.mxu0 0
    %3914 = vmatpush1.bf16.msra.mxu0 %v3867
    %3915 = vmatprep.subr.bf16.mxu0 0
    %3916 = vmatpush1.bf16.msra.mxu0 %v3868
    %3917 = vmatprep.mubr.bf16.mxu0 %v3750
    %3918 = vmatmul.mubr.bf16.gmra.mrb[0].mxu0 %v3749
    %v3919 = vpop.f32.mrb[0].mxu0
    %v3920 = vadd.f32 0.0, %v3919
    %v3921 = vpop.f32.mrb[0].mxu0
    %v3922 = vpop.f32.mrb[0].mxu0
    %v3923 = vadd.f32 0.0, %v3922
    %v3924 = vpop.f32.mrb[0].mxu0
    %3925 = vmatprep.mubr.bf16.mxu0 %v3752
    %3926 = vmatmul.mubr.bf16.gmra.mrb[0].mxu0 %v3751
    %v3927 = vpop.f32.mrb[0].mxu0
    %v3928 = vadd.f32 0.0, %v3927
    %v3929 = vpop.f32.mrb[0].mxu0
    %v3930 = vpop.f32.mrb[0].mxu0
    %v3931 = vadd.f32 0.0, %v3930
    %v3932 = vpop.f32.mrb[0].mxu0
    %3933 = vmatprep.mubr.bf16.mxu0 %v3754
    %3934 = vmatmul.mubr.bf16.gmra.mrb[0].mxu0 %v3753
    %v3935 = vpop.f32.mrb[0].mxu0
    %v3936 = vadd.f32 0.0, %v3935
    %v3937 = vpop.f32.mrb[0].mxu0
    %v3938 = vpop.f32.mrb[0].mxu0
    %v3939 = vadd.f32 0.0, %v3938
    %v3940 = vpop.f32.mrb[0].mxu0
    %3941 = vmatprep.mubr.bf16.mxu0 %v3756
    %3942 = vmatmul.mubr.bf16.gmra.mrb[0].mxu0 %v3755
    %v3943 = vpop.f32.mrb[0].mxu0
    %v3944 = vadd.f32 0.0, %v3943
    %v3945 = vpop.f32.mrb[0].mxu0
    %v3946 = vpop.f32.mrb[0].mxu0
    %v3947 = vadd.f32 0.0, %v3946
    %v3948 = vpop.f32.mrb[0].mxu0
    %3949 = vdwg.mxu0
    %v3950 = vld [vmem:[#allocation12] sm:$0x1]
    %v3952 = vlaneseq
    %v3953 = vshrl.u32 %v3952, 7
    %v3954 = vsub.s32 0, %v3953
    %v3955 = vrot.slane %v3950, %v3954
    %3957 = vmatprep.subr.mxu0 0.0
    %3958 = vmatpush1.msra.mxu0 %v3920
    %3959 = vmatprep.subr.mxu0 0.0
    %3960 = vmatpush1.msra.mxu0 %v3923
    %3961 = vmatprep.subr.mxu0 0.0
    %3962 = vmatpush1.msra.mxu0 %v3928
    %3963 = vmatprep.subr.mxu0 0.0
    %3964 = vmatpush1.msra.mxu0 %v3931
    %3965 = vmatprep.subr.mxu0 0.0
    %3966 = vmatpush1.msra.mxu0 %v3936
    %3967 = vmatprep.subr.mxu0 0.0
    %3968 = vmatpush1.msra.mxu0 %v3939
    %3969 = vmatprep.subr.mxu0 0.0
    %3970 = vmatpush1.msra.mxu0 %v3944
    %3971 = vmatprep.subr.mxu0 0.0
    %3972 = vmatpush1.msra.mxu0 %v3947
    %3973 = vmatprep.subr.mxu0 0.0
    %3974 = vmatpush1.msra.mxu0 0.0
    %3975 = vmatprep.subr.mxu0 0.0
    %3976 = vmatpush1.msra.mxu0 0.0
    %3977 = vmatprep.subr.mxu0 0.0
    %3978 = vmatpush1.msra.mxu0 0.0
    %3979 = vmatprep.subr.mxu0 0.0
    %3980 = vmatpush1.msra.mxu0 0.0
    %3981 = vmatprep.subr.mxu0 0.0
    %3982 = vmatpush1.msra.mxu0 0.0
    %3983 = vmatprep.subr.mxu0 0.0
    %3984 = vmatpush1.msra.mxu0 0.0
    %3985 = vmatprep.subr.mxu0 0.0
    %3986 = vmatpush1.msra.mxu0 0.0
    %3987 = vmatprep.subr.mxu0 0.0
    %3988 = vmatpush1.msra.mxu0 0.0
    %3989 = vmatprep.subr.mxu0 0.0
    %3990 = vmatpush1.msra.mxu0 0.0
    %3991 = vmatprep.subr.mxu0 0.0
    %3992 = vmatpush1.msra.mxu0 0.0
    %3993 = vmatprep.subr.mxu0 0.0
    %3994 = vmatpush1.msra.mxu0 0.0
    %3995 = vmatprep.subr.mxu0 0.0
    %3996 = vmatpush1.msra.mxu0 0.0
    %3997 = vmatprep.subr.mxu0 0.0
    %3998 = vmatpush1.msra.mxu0 0.0
    %3999 = vmatprep.subr.mxu0 0.0
    %4000 = vmatpush1.msra.mxu0 0.0
    %4001 = vmatprep.subr.mxu0 0.0
    %4002 = vmatpush1.msra.mxu0 0.0
    %4003 = vmatprep.subr.mxu0 0.0
    %4004 = vmatpush1.msra.mxu0 0.0
    %4005 = vmatprep.subr.mxu0 0.0
    %4006 = vmatpush1.msra.mxu0 0.0
    %4007 = vmatprep.subr.mxu0 0.0
    %4008 = vmatpush1.msra.mxu0 0.0
    %4009 = vmatprep.subr.mxu0 0.0
    %4010 = vmatpush1.msra.mxu0 0.0
    %4011 = vmatprep.subr.mxu0 0.0
    %4012 = vmatpush1.msra.mxu0 0.0
    %4013 = vmatprep.subr.mxu0 0.0
    %4014 = vmatpush1.msra.mxu0 0.0
    %4015 = vmatprep.subr.mxu0 0.0
    %4016 = vmatpush1.msra.mxu0 0.0
    %4017 = vmatprep.subr.mxu0 0.0
    %4018 = vmatpush1.msra.mxu0 0.0
    %4019 = vmatprep.subr.mxu0 0.0
    %4020 = vmatpush1.msra.mxu0 0.0
    %4021 = vmatprep.mubr.f32.mxu0 0.0
    %4022 = vmatmul.mubr.f32.gmra.mrb[0].mxu0 %v3597
    %v4023 = vpop.f32.mrb[0].mxu0
    %v4024 = vadd.f32 %v3955, %v4023
    %v4025 = vpop.f32.mrb[0].mxu0
    %4026 = vmatprep.mubr.f32.mxu0 0.0
    %4027 = vmatmul.mubr.f32.gmra.mrb[0].mxu0 %v3600
    %v4028 = vpop.f32.mrb[0].mxu0
    %v4029 = vadd.f32 %v3955, %v4028
    %v4030 = vpop.f32.mrb[0].mxu0
    %4031 = vmatprep.mubr.f32.mxu0 0.0
    %4032 = vmatmul.mubr.f32.gmra.mrb[0].mxu0 %v3603
    %v4033 = vpop.f32.mrb[0].mxu0
    %v4034 = vadd.f32 %v3955, %v4033
    %v4035 = vpop.f32.mrb[0].mxu0
    %4036 = vmatprep.mubr.f32.mxu0 0.0
    %4037 = vmatmul.mubr.f32.gmra.mrb[0].mxu0 %v3606
    %v4038 = vpop.f32.mrb[0].mxu0
    %v4039 = vadd.f32 %v3955, %v4038
    %v4040 = vpop.f32.mrb[0].mxu0
    %4041 = vmatprep.mubr.f32.mxu0 0.0
    %4042 = vmatmul.mubr.f32.gmra.mrb[0].mxu0 %v3609
    %v4043 = vpop.f32.mrb[0].mxu0
    %v4044 = vadd.f32 %v3955, %v4043
    %v4045 = vpop.f32.mrb[0].mxu0
    %4046 = vmatprep.mubr.f32.mxu0 0.0
    %4047 = vmatmul.mubr.f32.gmra.mrb[0].mxu0 %v3612
    %v4048 = vpop.f32.mrb[0].mxu0
    %v4049 = vadd.f32 %v3955, %v4048
    %v4050 = vpop.f32.mrb[0].mxu0
    %4051 = vmatprep.mubr.f32.mxu0 0.0
    %4052 = vmatmul.mubr.f32.gmra.mrb[0].mxu0 %v3615
    %v4053 = vpop.f32.mrb[0].mxu0
    %v4054 = vadd.f32 %v3955, %v4053
    %v4055 = vpop.f32.mrb[0].mxu0
    %4056 = vmatprep.mubr.f32.mxu0 0.0
    %4057 = vmatmul.mubr.f32.gmra.mrb[0].mxu0 %v3618
    %v4058 = vpop.f32.mrb[0].mxu0
    %v4059 = vadd.f32 %v3955, %v4058
    %v4060 = vpop.f32.mrb[0].mxu0
    %4061 = vdwg.mxu0
    %v4062 = vpack.c.bf16 %v4029, %v4024
    %v4063 = vpack.c.bf16 %v4039, %v4034
    %v4064 = vpack.c.bf16 %v4049, %v4044
    %v4065 = vpack.c.bf16 %v4059, %v4054
    %v4066 = vld [vmem:[%s6] sm:$0xf]
    %v4067 = vld [vmem:[%s6 + $0x4] sm:$0xf]
    %v4068 = vld [vmem:[%s6 + $0x8] sm:$0xf]
    %v4069 = vld [vmem:[%s6 + $0xc] sm:$0xf]
    %v4070 = vld [vmem:[%s6 + $0x10] sm:$0xf]
    %v4071 = vld [vmem:[%s6 + $0x14] sm:$0xf]
    %v4072 = vld [vmem:[%s6 + $0x18] sm:$0xf]
    %v4073 = vld [vmem:[%s6 + $0x1c] sm:$0xf]
    %v4074 = vld [vmem:[%s6 + $0x20] sm:$0xf]
    %v4075 = vld [vmem:[%s6 + $0x24] sm:$0xf]
    %v4076 = vld [vmem:[%s6 + $0x28] sm:$0xf]
    %v4077 = vld [vmem:[%s6 + $0x2c] sm:$0xf]
    %v4078 = vld [vmem:[%s6 + $0x30] sm:$0xf]
    %v4079 = vld [vmem:[%s6 + $0x34] sm:$0xf]
    %v4080 = vld [vmem:[%s6 + $0x38] sm:$0xf]
    %v4081 = vld [vmem:[%s6 + $0x3c] sm:$0xf]
    %v4098 = vunpack.c.l.b16 %v4066
    %v4099 = vunpack.c.l.b16 %v4067
    %v4100 = vunpack.c.l.b16 %v4068
    %v4101 = vunpack.c.l.b16 %v4069
    %v4102 = vunpack.c.l.b16 %v4070
    %v4103 = vunpack.c.l.b16 %v4071
    %v4104 = vunpack.c.l.b16 %v4072
    %v4105 = vunpack.c.l.b16 %v4073
    %v4106 = vunpack.c.l.b16 %v4074
    %v4107 = vunpack.c.l.b16 %v4075
    %v4108 = vunpack.c.l.b16 %v4076
    %v4109 = vunpack.c.l.b16 %v4077
    %v4110 = vunpack.c.l.b16 %v4078
    %v4111 = vunpack.c.l.b16 %v4079
    %v4112 = vunpack.c.l.b16 %v4080
    %v4113 = vunpack.c.l.b16 %v4081
    %v4114 = vpack.c.b16 %v4099, %v4098
    %v4115 = vpack.c.b16 %v4101, %v4100
    %v4116 = vpack.c.b16 %v4103, %v4102
    %v4117 = vpack.c.b16 %v4105, %v4104
    %v4118 = vpack.c.b16 %v4107, %v4106
    %v4119 = vpack.c.b16 %v4109, %v4108
    %v4120 = vpack.c.b16 %v4111, %v4110
    %v4121 = vpack.c.b16 %v4113, %v4112
    %4130 = vmatprep.subr.bf16.mxu0 0
    %4131 = vmatpush1.bf16.msra.mxu0 %v4114
    %4132 = vmatprep.subr.bf16.mxu0 0
    %4133 = vmatpush1.bf16.msra.mxu0 %v4115
    %4134 = vmatprep.subr.bf16.mxu0 0
    %4135 = vmatpush1.bf16.msra.mxu0 %v4116
    %4136 = vmatprep.subr.bf16.mxu0 0
    %4137 = vmatpush1.bf16.msra.mxu0 %v4117
    %4138 = vmatprep.subr.bf16.mxu0 0
    %4139 = vmatpush1.bf16.msra.mxu0 %v4118
    %4140 = vmatprep.subr.bf16.mxu0 0
    %4141 = vmatpush1.bf16.msra.mxu0 %v4119
    %4142 = vmatprep.subr.bf16.mxu0 0
    %4143 = vmatpush1.bf16.msra.mxu0 %v4120
    %4144 = vmatprep.subr.bf16.mxu0 0
    %4145 = vmatpush1.bf16.msra.mxu0 %v4121
    %4146 = vmatprep.subr.bf16.mxu0 0
    %4147 = vmatpush1.bf16.msra.mxu0 0
    %4148 = vmatprep.subr.bf16.mxu0 0
    %4149 = vmatpush1.bf16.msra.mxu0 0
    %4150 = vmatprep.subr.bf16.mxu0 0
    %4151 = vmatpush1.bf16.msra.mxu0 0
    %4152 = vmatprep.subr.bf16.mxu0 0
    %4153 = vmatpush1.bf16.msra.mxu0 0
    %4154 = vmatprep.subr.bf16.mxu0 0
    %4155 = vmatpush1.bf16.msra.mxu0 0
    %4156 = vmatprep.subr.bf16.mxu0 0
    %4157 = vmatpush1.bf16.msra.mxu0 0
    %4158 = vmatprep.subr.bf16.mxu0 0
    %4159 = vmatpush1.bf16.msra.mxu0 0
    %4160 = vmatprep.subr.bf16.mxu0 0
    %4161 = vmatpush1.bf16.msra.mxu0 0
    %4162 = vmatprep.mubr.bf16.mxu0 0
    %4163 = vmatmul.mubr.bf16.gmra.mrb[0].mxu0 %v4062
    %v4164 = vpop.f32.mrb[0].mxu0
    %v4165 = vadd.f32 0.0, %v4164
    %v4166 = vpop.f32.mrb[0].mxu0
    %v4167 = vpop.f32.mrb[0].mxu0
    %v4168 = vadd.f32 0.0, %v4167
    %v4169 = vpop.f32.mrb[0].mxu0
    %4170 = vmatprep.mubr.bf16.mxu0 0
    %4171 = vmatmul.mubr.bf16.gmra.mrb[0].mxu0 %v4063
    %v4172 = vpop.f32.mrb[0].mxu0
    %v4173 = vadd.f32 0.0, %v4172
    %v4174 = vpop.f32.mrb[0].mxu0
    %v4175 = vpop.f32.mrb[0].mxu0
    %v4176 = vadd.f32 0.0, %v4175
    %v4177 = vpop.f32.mrb[0].mxu0
    %4178 = vmatprep.mubr.bf16.mxu0 0
    %4179 = vmatmul.mubr.bf16.gmra.mrb[0].mxu0 %v4064
    %v4180 = vpop.f32.mrb[0].mxu0
    %v4181 = vadd.f32 0.0, %v4180
    %v4182 = vpop.f32.mrb[0].mxu0
    %v4183 = vpop.f32.mrb[0].mxu0
    %v4184 = vadd.f32 0.0, %v4183
    %v4185 = vpop.f32.mrb[0].mxu0
    %4186 = vmatprep.mubr.bf16.mxu0 0
    %4187 = vmatmul.mubr.bf16.gmra.mrb[0].mxu0 %v4065
    %v4188 = vpop.f32.mrb[0].mxu0
    %v4189 = vadd.f32 0.0, %v4188
    %v4190 = vpop.f32.mrb[0].mxu0
    %v4191 = vpop.f32.mrb[0].mxu0
    %v4192 = vadd.f32 0.0, %v4191
    %v4193 = vpop.f32.mrb[0].mxu0
    %4194 = vdwg.mxu0
    %v4195 = vld [vmem:[#allocation14] sm:$0x1]
    %v4197 = vlaneseq
    %v4198 = vshrl.u32 %v4197, 7
    %v4199 = vsub.s32 0, %v4198
    %v4200 = vrot.slane %v4195, %v4199
    %4202 = vmatprep.subr.mxu0 0.0
    %4203 = vmatpush1.msra.mxu0 %v4165
    %4204 = vmatprep.subr.mxu0 0.0
    %4205 = vmatpush1.msra.mxu0 %v4168
    %4206 = vmatprep.subr.mxu0 0.0
    %4207 = vmatpush1.msra.mxu0 %v4173
    %4208 = vmatprep.subr.mxu0 0.0
    %4209 = vmatpush1.msra.mxu0 %v4176
    %4210 = vmatprep.subr.mxu0 0.0
    %4211 = vmatpush1.msra.mxu0 %v4181
    %4212 = vmatprep.subr.mxu0 0.0
    %4213 = vmatpush1.msra.mxu0 %v4184
    %4214 = vmatprep.subr.mxu0 0.0
    %4215 = vmatpush1.msra.mxu0 %v4189
    %4216 = vmatprep.subr.mxu0 0.0
    %4217 = vmatpush1.msra.mxu0 %v4192
    %4218 = vmatprep.subr.mxu0 0.0
    %4219 = vmatpush1.msra.mxu0 0.0
    %4220 = vmatprep.subr.mxu0 0.0
    %4221 = vmatpush1.msra.mxu0 0.0
    %4222 = vmatprep.subr.mxu0 0.0
    %4223 = vmatpush1.msra.mxu0 0.0
    %4224 = vmatprep.subr.mxu0 0.0
    %4225 = vmatpush1.msra.mxu0 0.0
    %4226 = vmatprep.subr.mxu0 0.0
    %4227 = vmatpush1.msra.mxu0 0.0
    %4228 = vmatprep.subr.mxu0 0.0
    %4229 = vmatpush1.msra.mxu0 0.0
    %4230 = vmatprep.subr.mxu0 0.0
    %4231 = vmatpush1.msra.mxu0 0.0
    %4232 = vmatprep.subr.mxu0 0.0
    %4233 = vmatpush1.msra.mxu0 0.0
    %4234 = vmatprep.subr.mxu0 0.0
    %4235 = vmatpush1.msra.mxu0 0.0
    %4236 = vmatprep.subr.mxu0 0.0
    %4237 = vmatpush1.msra.mxu0 0.0
    %4238 = vmatprep.subr.mxu0 0.0
    %4239 = vmatpush1.msra.mxu0 0.0
    %4240 = vmatprep.subr.mxu0 0.0
    %4241 = vmatpush1.msra.mxu0 0.0
    %4242 = vmatprep.subr.mxu0 0.0
    %4243 = vmatpush1.msra.mxu0 0.0
    %4244 = vmatprep.subr.mxu0 0.0
    %4245 = vmatpush1.msra.mxu0 0.0
    %4246 = vmatprep.subr.mxu0 0.0
    %4247 = vmatpush1.msra.mxu0 0.0
    %4248 = vmatprep.subr.mxu0 0.0
    %4249 = vmatpush1.msra.mxu0 0.0
    %4250 = vmatprep.subr.mxu0 0.0
    %4251 = vmatpush1.msra.mxu0 0.0
    %4252 = vmatprep.subr.mxu0 0.0
    %4253 = vmatpush1.msra.mxu0 0.0
    %4254 = vmatprep.subr.mxu0 0.0
    %4255 = vmatpush1.msra.mxu0 0.0
    %4256 = vmatprep.subr.mxu0 0.0
    %4257 = vmatpush1.msra.mxu0 0.0
    %4258 = vmatprep.subr.mxu0 0.0
    %4259 = vmatpush1.msra.mxu0 0.0
    %4260 = vmatprep.subr.mxu0 0.0
    %4261 = vmatpush1.msra.mxu0 0.0
    %4262 = vmatprep.subr.mxu0 0.0
    %4263 = vmatpush1.msra.mxu0 0.0
    %4264 = vmatprep.subr.mxu0 0.0
    %4265 = vmatpush1.msra.mxu0 0.0
    %4266 = vmatprep.mubr.f32.mxu0 0.0
    %4267 = vmatmul.mubr.f32.gmra.mrb[0].mxu0 %v3597
    %v4268 = vpop.f32.mrb[0].mxu0
    %v4269 = vadd.f32 %v4200, %v4268
    %v4270 = vpop.f32.mrb[0].mxu0
    %4271 = vmatprep.mubr.f32.mxu0 0.0
    %4272 = vmatmul.mubr.f32.gmra.mrb[0].mxu0 %v3600
    %v4273 = vpop.f32.mrb[0].mxu0
    %v4274 = vadd.f32 %v4200, %v4273
    %v4275 = vpop.f32.mrb[0].mxu0
    %4276 = vmatprep.mubr.f32.mxu0 0.0
    %4277 = vmatmul.mubr.f32.gmra.mrb[0].mxu0 %v3603
    %v4278 = vpop.f32.mrb[0].mxu0
    %v4279 = vadd.f32 %v4200, %v4278
    %v4280 = vpop.f32.mrb[0].mxu0
    %4281 = vmatprep.mubr.f32.mxu0 0.0
    %4282 = vmatmul.mubr.f32.gmra.mrb[0].mxu0 %v3606
    %v4283 = vpop.f32.mrb[0].mxu0
    %v4284 = vadd.f32 %v4200, %v4283
    %v4285 = vpop.f32.mrb[0].mxu0
    %4286 = vmatprep.mubr.f32.mxu0 0.0
    %4287 = vmatmul.mubr.f32.gmra.mrb[0].mxu0 %v3609
    %v4288 = vpop.f32.mrb[0].mxu0
    %v4289 = vadd.f32 %v4200, %v4288
    %v4290 = vpop.f32.mrb[0].mxu0
    %4291 = vmatprep.mubr.f32.mxu0 0.0
    %4292 = vmatmul.mubr.f32.gmra.mrb[0].mxu0 %v3612
    %v4293 = vpop.f32.mrb[0].mxu0
    %v4294 = vadd.f32 %v4200, %v4293
    %v4295 = vpop.f32.mrb[0].mxu0
    %4296 = vmatprep.mubr.f32.mxu0 0.0
    %4297 = vmatmul.mubr.f32.gmra.mrb[0].mxu0 %v3615
    %v4298 = vpop.f32.mrb[0].mxu0
    %v4299 = vadd.f32 %v4200, %v4298
    %v4300 = vpop.f32.mrb[0].mxu0
    %4301 = vmatprep.mubr.f32.mxu0 0.0
    %4302 = vmatmul.mubr.f32.gmra.mrb[0].mxu0 %v3618
    %v4303 = vpop.f32.mrb[0].mxu0
    %v4304 = vadd.f32 %v4200, %v4303
    %v4305 = vpop.f32.mrb[0].mxu0
    %4306 = vdwg.mxu0
    %4307 = vst.msk [vmem:[#allocation17] sm:$0xff] %vm3595, %v4269
    %4308 = vst.msk [vmem:[#allocation17 + $0x8] sm:$0xff] %vm3595, %v4274
    %4309 = vst.msk [vmem:[#allocation17 + $0x10] sm:$0xff] %vm3595, %v4279
    %4310 = vst.msk [vmem:[#allocation17 + $0x18] sm:$0xff] %vm3595, %v4284
    %4311 = vst.msk [vmem:[#allocation17 + $0x20] sm:$0xff] %vm3595, %v4289
    %4312 = vst.msk [vmem:[#allocation17 + $0x28] sm:$0xff] %vm3595, %v4294
    %4313 = vst.msk [vmem:[#allocation17 + $0x30] sm:$0xff] %vm3595, %v4299
    %4314 = vst.msk [vmem:[#allocation17 + $0x38] sm:$0xff] %vm3595, %v4304
    %v4315 = vld [vmem:[#allocation15] sm:$0x1]
    %v4317 = vlaneseq
    %v4318 = vshrl.u32 %v4317, 7
    %v4319 = vsub.s32 0, %v4318
    %v4320 = vrot.slane %v4315, %v4319
    %v4322 = vmul.f32 %v4269, %v4320
    %v4323 = vmul.f32 %v4274, %v4320
    %v4324 = vmul.f32 %v4279, %v4320
    %v4325 = vmul.f32 %v4284, %v4320
    %v4326 = vmul.f32 %v4289, %v4320
    %v4327 = vmul.f32 %v4294, %v4320
    %v4328 = vmul.f32 %v4299, %v4320
    %v4329 = vmul.f32 %v4304, %v4320
    %v4330 = vsel %vm3595, %v4322, 0.0
    %4331 = vadd.xlane.f32.xlu0 %v4330
    %v4332 = vpop.xlane.xlu0 %4331
    %v4333 = vsel %vm3595, %v4323, 0.0
    %4334 = vadd.xlane.f32.xlu0 %v4333
    %v4335 = vpop.xlane.xlu0 %4334
    %v4336 = vsel %vm3595, %v4324, 0.0
    %4337 = vadd.xlane.f32.xlu0 %v4336
    %v4338 = vpop.xlane.xlu0 %4337
    %v4339 = vsel %vm3595, %v4325, 0.0
    %4340 = vadd.xlane.f32.xlu0 %v4339
    %v4341 = vpop.xlane.xlu0 %4340
    %v4342 = vsel %vm3595, %v4326, 0.0
    %4343 = vadd.xlane.f32.xlu0 %v4342
    %v4344 = vpop.xlane.xlu0 %4343
    %v4345 = vsel %vm3595, %v4327, 0.0
    %4346 = vadd.xlane.f32.xlu0 %v4345
    %v4347 = vpop.xlane.xlu0 %4346
    %v4348 = vsel %vm3595, %v4328, 0.0
    %4349 = vadd.xlane.f32.xlu0 %v4348
    %v4350 = vpop.xlane.xlu0 %4349
    %v4351 = vsel %vm3595, %v4329, 0.0
    %4352 = vadd.xlane.f32.xlu0 %v4351
    %v4353 = vpop.xlane.xlu0 %4352
    %s4354 = sld [smem:[#allocation2]]
    %v4355 = vstv %s4354
    %v4356 = vadd.f32 %v4332, %v4355
    %v4357 = vadd.f32 %v4335, %v4355
    %v4358 = vadd.f32 %v4338, %v4355
    %v4359 = vadd.f32 %v4341, %v4355
    %v4360 = vadd.f32 %v4344, %v4355
    %v4361 = vadd.f32 %v4347, %v4355
    %v4362 = vadd.f32 %v4350, %v4355
    %v4363 = vadd.f32 %v4353, %v4355
    %v4364 = vand.u32 2147483647, %v4356
    %v4365 = vand.u32 2147483647, %v4357
    %v4366 = vand.u32 2147483647, %v4358
    %v4367 = vand.u32 2147483647, %v4359
    %v4368 = vand.u32 2147483647, %v4360
    %v4369 = vand.u32 2147483647, %v4361
    %v4370 = vand.u32 2147483647, %v4362
    %v4371 = vand.u32 2147483647, %v4363
    %v4372 = vsub.f32 0.0, %v4364
    %v4373 = vsub.f32 0.0, %v4365
    %v4374 = vsub.f32 0.0, %v4366
    %v4375 = vsub.f32 0.0, %v4367
    %v4376 = vsub.f32 0.0, %v4368
    %v4377 = vsub.f32 0.0, %v4369
    %v4378 = vsub.f32 0.0, %v4370
    %v4379 = vsub.f32 0.0, %v4371
    %v4380 = vmul.f32 %v4372, 1.442695
    %v4381 = vpow.pop %v4380
    %v4382 = vmul.f32 %v4373, 1.442695
    %v4383 = vpow.pop %v4382
    %v4384 = vmul.f32 %v4374, 1.442695
    %v4385 = vpow.pop %v4384
    %v4386 = vmul.f32 %v4375, 1.442695
    %v4387 = vpow.pop %v4386
    %v4388 = vmul.f32 %v4376, 1.442695
    %v4389 = vpow.pop %v4388
    %v4390 = vmul.f32 %v4377, 1.442695
    %v4391 = vpow.pop %v4390
    %v4392 = vmul.f32 %v4378, 1.442695
    %v4393 = vpow.pop %v4392
    %v4394 = vmul.f32 %v4379, 1.442695
    %v4395 = vpow.pop %v4394
    %vm4396 = vcmp.ge.f32.partialorder %v4356, 0.0
    %vm4397 = vcmp.ge.f32.partialorder %v4357, 0.0
    %vm4398 = vcmp.ge.f32.partialorder %v4358, 0.0
    %vm4399 = vcmp.ge.f32.partialorder %v4359, 0.0
    %vm4400 = vcmp.ge.f32.partialorder %v4360, 0.0
    %vm4401 = vcmp.ge.f32.partialorder %v4361, 0.0
    %vm4402 = vcmp.ge.f32.partialorder %v4362, 0.0
    %vm4403 = vcmp.ge.f32.partialorder %v4363, 0.0
    %v4404 = vadd.f32 %v4381, 1.0
    %v4405 = vadd.f32 %v4383, 1.0
    %v4406 = vadd.f32 %v4385, 1.0
    %v4407 = vadd.f32 %v4387, 1.0
    %v4408 = vadd.f32 %v4389, 1.0
    %v4409 = vadd.f32 %v4391, 1.0
    %v4410 = vadd.f32 %v4393, 1.0
    %v4411 = vadd.f32 %v4395, 1.0
    %v4412 = vrcp.pop %v4404
    %v4413 = vmul.f32 1.0, %v4412
    %v4414 = vrcp.pop %v4405
    %v4415 = vmul.f32 1.0, %v4414
    %v4416 = vrcp.pop %v4406
    %v4417 = vmul.f32 1.0, %v4416
    %v4418 = vrcp.pop %v4407
    %v4419 = vmul.f32 1.0, %v4418
    %v4420 = vrcp.pop %v4408
    %v4421 = vmul.f32 1.0, %v4420
    %v4422 = vrcp.pop %v4409
    %v4423 = vmul.f32 1.0, %v4422
    %v4424 = vrcp.pop %v4410
    %v4425 = vmul.f32 1.0, %v4424
    %v4426 = vrcp.pop %v4411
    %v4427 = vmul.f32 1.0, %v4426
    %v4428 = vmul.f32 %v4381, %v4412
    %v4429 = vmul.f32 %v4383, %v4414
    %v4430 = vmul.f32 %v4385, %v4416
    %v4431 = vmul.f32 %v4387, %v4418
    %v4432 = vmul.f32 %v4389, %v4420
    %v4433 = vmul.f32 %v4391, %v4422
    %v4434 = vmul.f32 %v4393, %v4424
    %v4435 = vmul.f32 %v4395, %v4426
    %v4436 = vsel %vm4396, %v4413, %v4428
    %v4437 = vsel %vm4397, %v4415, %v4429
    %v4438 = vsel %vm4398, %v4417, %v4430
    %v4439 = vsel %vm4399, %v4419, %v4431
    %v4440 = vsel %vm4400, %v4421, %v4432
    %v4441 = vsel %vm4401, %v4423, %v4433
    %v4442 = vsel %vm4402, %v4425, %v4434
    %v4443 = vsel %vm4403, %v4427, %v4435
    %vm4444 = vcmask 7168
    %4445 = vst.msk [vmem:[%s10] sm:$0xff] %vm4444, %v4436
    %4446 = vst.msk [vmem:[%s10 + $0x8] sm:$0xff] %vm4444, %v4437
    %4447 = vst.msk [vmem:[%s10 + $0x10] sm:$0xff] %vm4444, %v4438
    %4448 = vst.msk [vmem:[%s10 + $0x18] sm:$0xff] %vm4444, %v4439
    %4449 = vst.msk [vmem:[%s10 + $0x20] sm:$0xff] %vm4444, %v4440
    %4450 = vst.msk [vmem:[%s10 + $0x28] sm:$0xff] %vm4444, %v4441
    %4451 = vst.msk [vmem:[%s10 + $0x30] sm:$0xff] %vm4444, %v4442
    %4452 = vst.msk [vmem:[%s10 + $0x38] sm:$0xff] %vm4444, %v4443
    // Predicated region
    $region74: #{tpu_custom_call.1} parent=1 // pred_check
      _
    $region75: #{tpu_custom_call.1} parent=1 // pred_check_branch
      %4454 = sbr.rel (0) target = $region77
    $region76: #{tpu_custom_call.1} parent=1 // pred_region
      _
    $region77: #{tpu_custom_call.1} parent=1 // pred_fallthru
      _
    // Predicated region
    $region78: #{tpu_custom_call.1} parent=1 // pred_check
      _
    $region79: #{tpu_custom_call.1} parent=1 // pred_check_branch
      %4456 = sbr.rel (0) target = $region81
    $region80: #{tpu_custom_call.1} parent=1 // pred_region
      %s4458 = ssub.s32 1024, 1024
      %4459 = vsyncadd [#allocation5], %s4458
      %s4460 = sshll.u32 [#allocation17], 4
      %s4461 = int_to_ptr.vmem [resolvable:$true] %s4460
      %4466 = dma.vmem_to_hbm [thread:$0]  %s4461, 1024, %s11, [#allocation5], 128, 128, 8
    $region81: #{tpu_custom_call.1} parent=1 // pred_fallthru
      _
    // Predicated region
    $region82: #{tpu_custom_call.1} parent=1 // pred_check
      _
    $region83: #{tpu_custom_call.1} parent=1 // pred_check_branch
      %4468 = sbr.rel (0) target = $region85
    $region84: #{tpu_custom_call.1} parent=1 // pred_region
      _
    $region85: #{tpu_custom_call.1} parent=1 // pred_fallthru
      _
    // Predicated region
    $region86: #{tpu_custom_call.1} parent=1 // pred_check
      _
    $region87: #{tpu_custom_call.1} parent=1 // pred_check_branch
      %4470 = sbr.rel (0) target = $region89
    $region88: #{tpu_custom_call.1} parent=1 // pred_region
      %4471 = dma.done [#allocation5], 1024
    $region89: #{tpu_custom_call.1} parent=1 // pred_fallthru
      _
    %4472 = vsyncpa [#allocation4], 1
    %4473 = vsyncpa [#allocation7], 1
    %4474 = vsyncpa [#allocation10], 1
    %4475 = vsyncpa [#allocation13], 1
    %4476 = vsyncpa [#allocation16], 1
    %4477 = vsyncpa [#allocation5], 1

</llo_original>
